<compile_context>
chip_gen: v6e
topology: v6e:2x2x1
jax: 0.10.0
libtpu: 0.0.40
codegen_flags: <defaults>
</compile_context>

<pallas_src>
import jax
import jax.numpy as jnp
from jax import lax
from jax.experimental import pallas as pl
from jax.experimental.pallas import tpu as pltpu

# ------------------------------- configuration -------------------------------
B = 2
CIN = 3
COUT = 16
H = W = 16
KH = KW = 3
HO, WO = H - KH + 1, W - KW + 1          # 14, 14  (valid conv, stride 1)
HP, WP = HO // 2, WO // 2                # 7, 7    (maxpool 2x2, stride 2)
NPOS = HP * WP                           # 49      pooled spatial positions
NQ = 4                                   # 2x2 pool-window offsets (dhp, dwp)
KDIM = KH * KW * CIN                     # 27      im2col contraction size
FLAT = NPOS * COUT                       # 784     PyTorch flatten size
HIDDEN = 128
NUM_CLASSES = 10
BN_EPS = 1e-5

MROWS = NPOS * B                         # 98   valid rows per window offset (p-major, b-minor)
MPAD = ((MROWS + 7) // 8) * 8            # 104  sublane-aligned row count
PPAD = MPAD // B                         # 52   padded position count (>= NPOS)


# ------------------------------ fused forward kernel ------------------------------
def fused_forward_kernel(patch_ref, wc_ref, bc_ref, w1_ref, b1_ref, w2_ref, b2_ref,
                         o_ref):
    # patch_ref: (NQ, MPAD, KDIM) im2col patches; leading dim = pool-window offset,
    #            rows ordered (p, b) with p = hp*WP + wp; rows >= MROWS are zero pad.
    # wc_ref:    (KDIM, COUT)       conv weight, BN scale folded in
    # bc_ref:    (1, COUT)          conv bias + BN shift folded
    # w1_ref:    (PPAD, COUT, HIDDEN) fc1 weight per pooled position (zero for p>=NPOS)
    # b1_ref:    (1, HIDDEN)
    # w2_ref:    (HIDDEN, NUM_CLASSES)
    # b2_ref:    (1, NUM_CLASSES)
    # o_ref:     (B, NUM_CLASSES)
    wc = wc_ref[...]
    bc = bc_ref[...]

    # conv(3x3) + folded BatchNorm + bias + ReLU: one (MPAD, 27) x (27, 16) matmul
    # per pool-window offset.  Bias/ReLU applied before the max (max/ReLU commute,
    # and the affine is applied pre-pool exactly as in the reference).
    acts = [
        jnp.maximum(
            jnp.dot(patch_ref[q], wc, preferred_element_type=jnp.float32) + bc, 0.0)
        for q in range(NQ)
    ]

    # MaxPool2d(2, 2): three element-wise maxes across the four window offsets.
    pooled = jnp.maximum(jnp.maximum(acts[0], acts[1]),
                         jnp.maximum(acts[2], acts[3]))          # (MPAD, COUT)

    # Lane-preserving sublane regroup: rows (p, b) -> (p, b) axes.  Cheap (lane dim
    # untouched); the padded p rows are killed by the zero rows of w1.
    pooled3 = pooled.reshape(PPAD, B, COUT)                      # (PPAD, B, COUT)

    # fc1 with the flatten fused into the contraction: batched over pooled position p,
    # contracting channels.  Replaces the old 49 masked 16-lane stores + scratch
    # round trip + big-K matmul with pure MXU work (review item #1).
    tmp = jnp.einsum('pbc,pch->pbh', pooled3, w1_ref[...],
                     preferred_element_type=jnp.float32)         # (PPAD, B, HIDDEN)
    h = jnp.maximum(jnp.sum(tmp, axis=0) + b1_ref[...], 0.0)     # (B, HIDDEN)

    # TODO(synk): Dropout(0.2) is identity at inference time; no op emitted.

    out = jnp.dot(h, w2_ref[...], preferred_element_type=jnp.float32) + b2_ref[...]
    o_ref[...] = out.astype(o_ref.dtype)


# --------------------------------- wrapper ---------------------------------
_VMEM_SPEC = pl.BlockSpec(memory_space=pltpu.MemorySpace.VMEM)


@jax.jit
def disease_detector_forward(x_nchw, params):
    # Wrapper-side layout plumbing only (a handful of small copies on a 6 KB input
    # that XLA fuses around the single Pallas call):
    #   NCHW -> NHWC -> im2col patches with columns ordered (dh, dw, cin) and rows
    #   ordered (pool-window offset q, pooled position p, batch b), zero-padded to
    #   MPAD rows per offset.
    x_nhwc = jnp.transpose(x_nchw, (0, 2, 3, 1))                      # (B, H, W, CIN)
    taps = [x_nhwc[:, dh:dh + HO, dw:dw + WO, :]
            for dh in range(KH) for dw in range(KW)]
    pat = jnp.concatenate(taps, axis=-1)                              # (B, HO, WO, KDIM)
    pat = pat.reshape(B, HP, 2, WP, 2, KDIM)                          # (b, hp, dhp, wp, dwp, k)
    pat = pat.transpose(2, 4, 1, 3, 0, 5)                             # (dhp, dwp, hp, wp, b, k)
    pat = pat.reshape(NQ, MROWS, KDIM)                                # rows (p, b)
    patches = jnp.pad(pat, ((0, 0), (0, MPAD - MROWS), (0, 0)))       # (NQ, MPAD, KDIM)
    # NOTE: the trailing KDIM=27 is lane-padded to 128 in VMEM (~4.7x inflation); at
    # B=2 this is ~200 KB and irrelevant — revisit (lane-dense transposed patches)
    # only if B is scaled up (review item #4).

    return pl.pallas_call(
        fused_forward_kernel,
        out_shape=jax.ShapeDtypeStruct((B, NUM_CLASSES), jnp.float32),
        in_specs=[_VMEM_SPEC] * 7,
        out_specs=_VMEM_SPEC,
    )(patches, params["wc"], params["bc"], params["w1"], params["b1"],
      params["w2"], params["b2"])


# ------------------------------ parameters ------------------------------
def init_pytorch_params(key):
    """Parameters in PyTorch layout (what a checkpoint would hold)."""
    ks = jax.random.split(key, 10)
    return dict(
        w_conv=0.1 * jax.random.normal(ks[0], (COUT, CIN, KH, KW), jnp.float32),
        b_conv=0.1 * jax.random.normal(ks[1], (COUT,), jnp.float32),
        gamma=1.0 + 0.1 * jax.random.normal(ks[2], (COUT,), jnp.float32),
        beta=0.1 * jax.random.normal(ks[3], (COUT,), jnp.float32),
        running_mean=0.1 * jax.random.normal(ks[4], (COUT,), jnp.float32),
        running_var=jnp.abs(1.0 + 0.1 * jax.random.normal(ks[5], (COUT,), jnp.float32)),
        w1=0.02 * jax.random.normal(ks[6], (HIDDEN, FLAT), jnp.float32),
        b1=0.02 * jax.random.normal(ks[7], (HIDDEN,), jnp.float32),
        w2=0.02 * jax.random.normal(ks[8], (NUM_CLASSES, HIDDEN), jnp.float32),
        b2=0.02 * jax.random.normal(ks[9], (NUM_CLASSES,), jnp.float32),
    )


def fold_params(pt):
    """One-time, free re-layout of PyTorch params into the kernel's layout."""
    bn_scale = pt["gamma"] / jnp.sqrt(pt["running_var"] + BN_EPS)        # (COUT,)
    bn_shift = pt["beta"] - pt["running_mean"] * bn_scale
    # Conv weight -> im2col layout (KDIM, COUT), rows ordered (dh, dw, cin),
    # with the BN scale folded into each output channel.
    wc = jnp.transpose(pt["w_conv"], (2, 3, 1, 0)).reshape(KDIM, COUT) * bn_scale[None, :]
    bc = (pt["b_conv"] * bn_scale + bn_shift)[None, :]                   # (1, COUT)
    # fc1: PyTorch flattens NCHW pooled activations with column index c*NPOS + p.
    # The kernel wants a per-position weight stack (p, c, hidden), zero-padded to PPAD
    # positions so the kernel's padded rows contribute exactly zero.
    w1r = pt["w1"].reshape(HIDDEN, COUT, NPOS)                           # [j, c, p]
    w1r = jnp.transpose(w1r, (2, 1, 0))                                  # [p, c, j]
    w1r = jnp.pad(w1r, ((0, PPAD - NPOS), (0, 0), (0, 0)))               # (PPAD, COUT, HIDDEN)
    return dict(wc=wc, bc=bc, w1=w1r, b1=pt["b1"][None, :],
                w2=pt["w2"].T, b2=pt["b2"][None, :])


# --------------------------- pure-JAX reference ---------------------------
def reference_forward(x_nchw, pt):
    y = lax.conv_general_dilated(
        x_nchw, pt["w_conv"], window_strides=(1, 1), padding="VALID",
        dimension_numbers=("NCHW", "OIHW", "NCHW"),
        precision=lax.Precision.HIGHEST)
    y = y + pt["b_conv"][None, :, None, None]
    scale = pt["gamma"] / jnp.sqrt(pt["running_var"] + BN_EPS)
    shift = pt["beta"] - pt["running_mean"] * scale
    y = y * scale[None, :, None, None] + shift[None, :, None, None]
    y = jnp.maximum(y, 0.0)
    y = y.reshape(B, COUT, HP, 2, WP, 2).max(axis=(3, 5))                # maxpool 2x2
    flat = y.reshape(B, COUT * HP * WP)                                  # NCHW flatten
    h = jnp.maximum(
        jnp.dot(flat, pt["w1"].T, precision=lax.Precision.HIGHEST) + pt["b1"], 0.0)
    return jnp.dot(h, pt["w2"].T, precision=lax.Precision.HIGHEST) + pt["b2"]


# ----------------------------------- main -----------------------------------
if __name__ == "__main__":
    key = jax.random.PRNGKey(0)
    pkey, xkey = jax.random.split(key)
    pt_params = init_pytorch_params(pkey)
    kernel_params = fold_params(pt_params)
    x = jax.random.normal(xkey, (B, CIN, H, W), jnp.float32)             # NCHW, like PyTorch

    out = disease_detector_forward(x, kernel_params)
    out = jax.block_until_ready(out)
    assert out.shape == (B, NUM_CLASSES)

    ref = reference_forward(x, pt_params)
    # All-f32 path -> tight tolerance so layout/permutation regressions are caught.
    assert bool(jnp.allclose(out, ref, rtol=1e-4, atol=2e-5)), "mismatch vs reference"

    print("KERNEL_OK")
</pallas_src>

<mosaic_0001>
module attributes {stable_mosaic.version = 11 : i64} {
  func.func @fused_forward_kernel(%arg0: memref<4x104x27xf32, #tpu.memory_space<vmem>>, %arg1: memref<27x16xf32, #tpu.memory_space<vmem>>, %arg2: memref<1x16xf32, #tpu.memory_space<vmem>>, %arg3: memref<52x16x128xf32, #tpu.memory_space<vmem>>, %arg4: memref<1x128xf32, #tpu.memory_space<vmem>>, %arg5: memref<128x10xf32, #tpu.memory_space<vmem>>, %arg6: memref<1x10xf32, #tpu.memory_space<vmem>>, %arg7: memref<2x10xf32, #tpu.memory_space<vmem>>) attributes {dimension_semantics = [], scalar_prefetch = 0 : i64, scratch_operands = 0 : i64, tpu.core_type = #tpu.core_type<tc>} {
    %c0 = arith.constant 0 : index
    %c0_0 = arith.constant 0 : index
    %0 = vector.load %arg1[%c0, %c0_0] : memref<27x16xf32, #tpu.memory_space<vmem>>, vector<27x16xf32>
    %c0_1 = arith.constant 0 : index
    %c0_2 = arith.constant 0 : index
    %1 = vector.load %arg2[%c0_1, %c0_2] : memref<1x16xf32, #tpu.memory_space<vmem>>, vector<1x16xf32>
    %c0_3 = arith.constant 0 : index
    %c0_4 = arith.constant 0 : index
    %c0_5 = arith.constant 0 : index
    %2 = vector.load %arg0[%c0_3, %c0_4, %c0_5] : memref<4x104x27xf32, #tpu.memory_space<vmem>>, vector<1x104x27xf32>
    %3 = vector.shape_cast %2 : vector<1x104x27xf32> to vector<104x27xf32>
    %cst = arith.constant dense<0.000000e+00> : vector<104x16xf32>
    %4 = tpu.matmul %3, %0, %cst {dimension_numbers = #tpu.dot_dimension_numbers<[1], [0], [0], [1], [0, 0, 1, 1], [], []>} : vector<104x27xf32>, vector<27x16xf32>, vector<104x16xf32> -> vector<104x16xf32>
    %5 = vector.broadcast %1 : vector<1x16xf32> to vector<104x16xf32>
    %6 = arith.addf %4, %5 : vector<104x16xf32>
    %cst_6 = arith.constant 0.000000e+00 : f32
    %7 = vector.broadcast %cst_6 : f32 to vector<104x16xf32>
    %8 = arith.maximumf %6, %7 : vector<104x16xf32>
    %c1 = arith.constant 1 : index
    %c0_7 = arith.constant 0 : index
    %c0_8 = arith.constant 0 : index
    %9 = vector.load %arg0[%c1, %c0_7, %c0_8] : memref<4x104x27xf32, #tpu.memory_space<vmem>>, vector<1x104x27xf32>
    %10 = vector.shape_cast %9 : vector<1x104x27xf32> to vector<104x27xf32>
    %cst_9 = arith.constant dense<0.000000e+00> : vector<104x16xf32>
    %11 = tpu.matmul %10, %0, %cst_9 {dimension_numbers = #tpu.dot_dimension_numbers<[1], [0], [0], [1], [0, 0, 1, 1], [], []>} : vector<104x27xf32>, vector<27x16xf32>, vector<104x16xf32> -> vector<104x16xf32>
    %12 = vector.broadcast %1 : vector<1x16xf32> to vector<104x16xf32>
    %13 = arith.addf %11, %12 : vector<104x16xf32>
    %cst_10 = arith.constant 0.000000e+00 : f32
    %14 = vector.broadcast %cst_10 : f32 to vector<104x16xf32>
    %15 = arith.maximumf %13, %14 : vector<104x16xf32>
    %c2 = arith.constant 2 : index
    %c0_11 = arith.constant 0 : index
    %c0_12 = arith.constant 0 : index
    %16 = vector.load %arg0[%c2, %c0_11, %c0_12] : memref<4x104x27xf32, #tpu.memory_space<vmem>>, vector<1x104x27xf32>
    %17 = vector.shape_cast %16 : vector<1x104x27xf32> to vector<104x27xf32>
    %cst_13 = arith.constant dense<0.000000e+00> : vector<104x16xf32>
    %18 = tpu.matmul %17, %0, %cst_13 {dimension_numbers = #tpu.dot_dimension_numbers<[1], [0], [0], [1], [0, 0, 1, 1], [], []>} : vector<104x27xf32>, vector<27x16xf32>, vector<104x16xf32> -> vector<104x16xf32>
    %19 = vector.broadcast %1 : vector<1x16xf32> to vector<104x16xf32>
    %20 = arith.addf %18, %19 : vector<104x16xf32>
    %cst_14 = arith.constant 0.000000e+00 : f32
    %21 = vector.broadcast %cst_14 : f32 to vector<104x16xf32>
    %22 = arith.maximumf %20, %21 : vector<104x16xf32>
    %c3 = arith.constant 3 : index
    %c0_15 = arith.constant 0 : index
    %c0_16 = arith.constant 0 : index
    %23 = vector.load %arg0[%c3, %c0_15, %c0_16] : memref<4x104x27xf32, #tpu.memory_space<vmem>>, vector<1x104x27xf32>
    %24 = vector.shape_cast %23 : vector<1x104x27xf32> to vector<104x27xf32>
    %cst_17 = arith.constant dense<0.000000e+00> : vector<104x16xf32>
    %25 = tpu.matmul %24, %0, %cst_17 {dimension_numbers = #tpu.dot_dimension_numbers<[1], [0], [0], [1], [0, 0, 1, 1], [], []>} : vector<104x27xf32>, vector<27x16xf32>, vector<104x16xf32> -> vector<104x16xf32>
    %26 = vector.broadcast %1 : vector<1x16xf32> to vector<104x16xf32>
    %27 = arith.addf %25, %26 : vector<104x16xf32>
    %cst_18 = arith.constant 0.000000e+00 : f32
    %28 = vector.broadcast %cst_18 : f32 to vector<104x16xf32>
    %29 = arith.maximumf %27, %28 : vector<104x16xf32>
    %30 = arith.maximumf %8, %15 : vector<104x16xf32>
    %31 = arith.maximumf %22, %29 : vector<104x16xf32>
    %32 = arith.maximumf %30, %31 : vector<104x16xf32>
    %33 = vector.shape_cast %32 : vector<104x16xf32> to vector<52x2x16xf32>
    %c0_19 = arith.constant 0 : index
    %c0_20 = arith.constant 0 : index
    %c0_21 = arith.constant 0 : index
    %34 = vector.load %arg3[%c0_19, %c0_20, %c0_21] : memref<52x16x128xf32, #tpu.memory_space<vmem>>, vector<52x16x128xf32>
    "tpu.trace_start"() <{level = 10 : i32, message = "pbc,pch->pbh"}> : () -> ()
    %cst_22 = arith.constant dense<0.000000e+00> : vector<52x2x128xf32>
    %35 = tpu.matmul %33, %34, %cst_22 {dimension_numbers = #tpu.dot_dimension_numbers<[2], [1], [1], [2], [0, 0, 0, 1, 1, 2], [0], [0]>} : vector<52x2x16xf32>, vector<52x16x128xf32>, vector<52x2x128xf32> -> vector<52x2x128xf32>
    "tpu.trace_stop"() : () -> ()
    %cst_23 = arith.constant dense<0.000000e+00> : vector<2x128xf32>
    %36 = vector.multi_reduction <add>, %35, %cst_23 [0] : vector<52x2x128xf32> to vector<2x128xf32>
    %c0_24 = arith.constant 0 : index
    %c0_25 = arith.constant 0 : index
    %37 = vector.load %arg4[%c0_24, %c0_25] : memref<1x128xf32, #tpu.memory_space<vmem>>, vector<1x128xf32>
    %38 = vector.broadcast %37 : vector<1x128xf32> to vector<2x128xf32>
    %39 = arith.addf %36, %38 : vector<2x128xf32>
    %cst_26 = arith.constant 0.000000e+00 : f32
    %40 = vector.broadcast %cst_26 : f32 to vector<2x128xf32>
    %41 = arith.maximumf %39, %40 : vector<2x128xf32>
    %c0_27 = arith.constant 0 : index
    %c0_28 = arith.constant 0 : index
    %42 = vector.load %arg5[%c0_27, %c0_28] : memref<128x10xf32, #tpu.memory_space<vmem>>, vector<128x10xf32>
    %cst_29 = arith.constant dense<0.000000e+00> : vector<2x10xf32>
    %43 = tpu.matmul %41, %42, %cst_29 {dimension_numbers = #tpu.dot_dimension_numbers<[1], [0], [0], [1], [0, 0, 1, 1], [], []>} : vector<2x128xf32>, vector<128x10xf32>, vector<2x10xf32> -> vector<2x10xf32>
    %c0_30 = arith.constant 0 : index
    %c0_31 = arith.constant 0 : index
    %44 = vector.load %arg6[%c0_30, %c0_31] : memref<1x10xf32, #tpu.memory_space<vmem>>, vector<1x10xf32>
    %45 = vector.broadcast %44 : vector<1x10xf32> to vector<2x10xf32>
    %46 = arith.addf %43, %45 : vector<2x10xf32>
    %c0_32 = arith.constant 0 : index
    %c0_33 = arith.constant 0 : index
    %47 = vector.load %arg7[%c0_32, %c0_33] : memref<2x10xf32, #tpu.memory_space<vmem>>, vector<2x10xf32>
    tpu.vector_store %arg7[%c0_32, %c0_33], %46 {strides = array<i32>} : memref<2x10xf32, #tpu.memory_space<vmem>>, vector<2x10xf32>,
    return
  }
}

</mosaic_0001>

<llo_original>
// kernel: disease_detector_forward.1
$region0: #{disease_detector_forward.1}
  #allocation0 [shape = 'u32[]', space=smem, size = 0x4, offset = 0x4, fixed_abs, tag = 'smem constant byte address 0x4 - core index']
  #allocation1 [shape = 'u32[144,128]{1,0:T(1,128)}', space=vmem, size = 0x12000, scoped, tag = 'internal scratch']
  %s0 = inlined_call_operand.vmem [shape: f32[4,104,27], index: 0, kind: input, shape index: {}]
  %s1 = inlined_call_operand.vmem [shape: f32[27,16], index: 1, kind: input, shape index: {}]
  %s2 = inlined_call_operand.vmem [shape: f32[1,16], index: 2, kind: input, shape index: {}]
  %s3 = inlined_call_operand.vmem [shape: f32[52,16,128], index: 3, kind: input, shape index: {}]
  %s4 = inlined_call_operand.vmem [shape: f32[1,128], index: 4, kind: input, shape index: {}]
  %s5 = inlined_call_operand.vmem [shape: f32[128,10], index: 5, kind: input, shape index: {}]
  %s6 = inlined_call_operand.vmem [shape: f32[1,10], index: 6, kind: input, shape index: {}]
  %s7 = inlined_call_operand.hbm [shape: f32[2,10], index: 7, kind: output, shape index: {}]
  %s8 = sld [smem:[#allocation0]]
  $region38: #{disease_detector_forward.1} parent=0
    _
  %s10 = ssub.s32 1, %s8
  %s11 = scalar_select 0, %s10, %s8
  $region1: #{disease_detector_forward.1} parent=0
    #allocation2 [shape = 'u8[1024]{0}', space=vmem, size = 0x400, scoped, tag = 'output window, operand 0, single buffered']
    #allocation3 [shape = 's32[1]{0}', space=sflag, size = 0x4, scoped, tag = 'scoped memory for disease_detector_forward.1']
    %12 = vsyncpa [#allocation3], 0
    // Predicated region
    $region2: #{disease_detector_forward.1} parent=1 // pred_check
      _
    $region3: #{disease_detector_forward.1} parent=1 // pred_check_branch
      %14 = sbr.rel (0) target = $region5
    $region4: #{disease_detector_forward.1} parent=1 // pred_region
      _
    $region5: #{disease_detector_forward.1} parent=1 // pred_fallthru
      _
    // Predicated region
    $region6: #{disease_detector_forward.1} parent=1 // pred_check
      _
    $region7: #{disease_detector_forward.1} parent=1 // pred_check_branch
      %16 = sbr.rel (0) target = $region9
    $region8: #{disease_detector_forward.1} parent=1 // pred_region
      _
    $region9: #{disease_detector_forward.1} parent=1 // pred_fallthru
      _
    // Predicated region
    $region10: #{disease_detector_forward.1} parent=1 // pred_check
      _
    $region11: #{disease_detector_forward.1} parent=1 // pred_check_branch
      %18 = sbr.rel (0) target = $region13
    $region12: #{disease_detector_forward.1} parent=1 // pred_region
      _
    $region13: #{disease_detector_forward.1} parent=1 // pred_fallthru
      _
    // Predicated region
    $region14: #{disease_detector_forward.1} parent=1 // pred_check
      _
    $region15: #{disease_detector_forward.1} parent=1 // pred_check_branch
      %20 = sbr.rel (0) target = $region17
    $region16: #{disease_detector_forward.1} parent=1 // pred_region
      _
    $region17: #{disease_detector_forward.1} parent=1 // pred_fallthru
      _
    // Predicated region
    $region18: #{disease_detector_forward.1} parent=1 // pred_check
      _
    $region19: #{disease_detector_forward.1} parent=1 // pred_check_branch
      %22 = sbr.rel (0) target = $region21
    $region20: #{disease_detector_forward.1} parent=1 // pred_region
      _
    $region21: #{disease_detector_forward.1} parent=1 // pred_fallthru
      _
    // Predicated region
    $region22: #{disease_detector_forward.1} parent=1 // pred_check
      _
    $region23: #{disease_detector_forward.1} parent=1 // pred_check_branch
      %24 = sbr.rel (0) target = $region25
    $region24: #{disease_detector_forward.1} parent=1 // pred_region
      _
    $region25: #{disease_detector_forward.1} parent=1 // pred_fallthru
      _
    // Predicated region
    $region26: #{disease_detector_forward.1} parent=1 // pred_check
      _
    $region27: #{disease_detector_forward.1} parent=1 // pred_check_branch
      %26 = sbr.rel (0) target = $region29
    $region28: #{disease_detector_forward.1} parent=1 // pred_region
      _
    $region29: #{disease_detector_forward.1} parent=1 // pred_fallthru
      _
    %v27 = vld [vmem:[%s1] sm:$0xff]
    %v28 = vld [vmem:[%s1 + $0x8] sm:$0xff]
    %v29 = vld [vmem:[%s1 + $0x10] sm:$0xff]
    %v30 = vld [vmem:[%s1 + $0x18] sm:$0x7]
    %v31 = vld [vmem:[%s2] sm:$0x1]
    %v32 = vld [vmem:[%s0] sm:$0xff]
    %v33 = vld [vmem:[%s0 + $0x8] sm:$0xff]
    %v34 = vld [vmem:[%s0 + $0x10] sm:$0xff]
    %v35 = vld [vmem:[%s0 + $0x18] sm:$0xff]
    %v36 = vld [vmem:[%s0 + $0x20] sm:$0xff]
    %v37 = vld [vmem:[%s0 + $0x28] sm:$0xff]
    %v38 = vld [vmem:[%s0 + $0x30] sm:$0xff]
    %v39 = vld [vmem:[%s0 + $0x38] sm:$0xff]
    %v40 = vld [vmem:[%s0 + $0x40] sm:$0xff]
    %v41 = vld [vmem:[%s0 + $0x48] sm:$0xff]
    %v42 = vld [vmem:[%s0 + $0x50] sm:$0xff]
    %v43 = vld [vmem:[%s0 + $0x58] sm:$0xff]
    %v44 = vld [vmem:[%s0 + $0x60] sm:$0xff]
    %v46 = vlaneseq
    %v47 = vshrl.u32 %v46, 7
    %v48 = vsub.s32 0, %v47
    %v49 = vrot.slane %v31, %v48
    %vm51 = vcmask 220160
    %v53 = vsel %vm51, %v32, 0
    %v56 = vsel %vm51, %v33, 0
    %v59 = vsel %vm51, %v34, 0
    %v62 = vsel %vm51, %v35, 0
    %v65 = vsel %vm51, %v36, 0
    %v68 = vsel %vm51, %v37, 0
    %v71 = vsel %vm51, %v38, 0
    %v74 = vsel %vm51, %v39, 0
    %v77 = vsel %vm51, %v40, 0
    %v80 = vsel %vm51, %v41, 0
    %v83 = vsel %vm51, %v42, 0
    %v86 = vsel %vm51, %v43, 0
    %v89 = vsel %vm51, %v44, 0
    %vm91 = vcmask 1042432
    %v93 = vsel %vm91, %v30, 0
    %95 = vmatprep.subr.mxu0 0.0
    %96 = vmatpush1.msra.mxu0 0.0
    %97 = vmatprep.subr.mxu0 0.0
    %98 = vmatpush1.msra.mxu0 0.0
    %99 = vmatprep.subr.mxu0 0.0
    %100 = vmatpush1.msra.mxu0 0.0
    %101 = vmatprep.subr.mxu0 0.0
    %102 = vmatpush1.msra.mxu0 0.0
    %103 = vmatprep.subr.mxu0 0.0
    %104 = vmatpush1.msra.mxu0 0.0
    %105 = vmatprep.subr.mxu0 0.0
    %106 = vmatpush1.msra.mxu0 0.0
    %107 = vmatprep.subr.mxu0 0.0
    %108 = vmatpush1.msra.mxu0 0.0
    %109 = vmatprep.subr.mxu0 0.0
    %110 = vmatpush1.msra.mxu0 0.0
    %111 = vmatprep.subr.mxu0 0.0
    %112 = vmatpush1.msra.mxu0 0.0
    %113 = vmatprep.subr.mxu0 0.0
    %114 = vmatpush1.msra.mxu0 0.0
    %115 = vmatprep.subr.mxu0 0.0
    %116 = vmatpush1.msra.mxu0 0.0
    %117 = vmatprep.subr.mxu0 0.0
    %118 = vmatpush1.msra.mxu0 0.0
    %119 = vmatprep.subr.mxu0 0.0
    %120 = vmatpush1.msra.mxu0 %v93
    %121 = vmatprep.subr.mxu0 0.0
    %122 = vmatpush1.msra.mxu0 %v29
    %123 = vmatprep.subr.mxu0 0.0
    %124 = vmatpush1.msra.mxu0 %v28
    %125 = vmatprep.subr.mxu0 0.0
    %126 = vmatpush1.msra.mxu0 %v27
    %127 = vmatprep.subr.mxu0 0.0
    %128 = vmatpush2.msra.mxu0 0.0
    %129 = vmatprep.subr.mxu0 0.0
    %130 = vmatpush2.msra.mxu0 0.0
    %131 = vmatprep.subr.mxu0 0.0
    %132 = vmatpush2.msra.mxu0 0.0
    %133 = vmatprep.subr.mxu0 0.0
    %134 = vmatpush2.msra.mxu0 0.0
    %135 = vmatprep.subr.mxu0 0.0
    %136 = vmatpush2.msra.mxu0 0.0
    %137 = vmatprep.subr.mxu0 0.0
    %138 = vmatpush2.msra.mxu0 0.0
    %139 = vmatprep.subr.mxu0 0.0
    %140 = vmatpush2.msra.mxu0 0.0
    %141 = vmatprep.subr.mxu0 0.0
    %142 = vmatpush2.msra.mxu0 0.0
    %143 = vmatprep.subr.mxu0 0.0
    %144 = vmatpush2.msra.mxu0 0.0
    %145 = vmatprep.subr.mxu0 0.0
    %146 = vmatpush2.msra.mxu0 0.0
    %147 = vmatprep.subr.mxu0 0.0
    %148 = vmatpush2.msra.mxu0 0.0
    %149 = vmatprep.subr.mxu0 0.0
    %150 = vmatpush2.msra.mxu0 0.0
    %151 = vmatprep.subr.mxu0 0.0
    %152 = vmatpush2.msra.mxu0 0.0
    %153 = vmatprep.subr.mxu0 0.0
    %154 = vmatpush2.msra.mxu0 0.0
    %155 = vmatprep.subr.mxu0 0.0
    %156 = vmatpush2.msra.mxu0 0.0
    %157 = vmatprep.subr.mxu0 0.0
    %158 = vmatpush2.msra.mxu0 0.0
    %159 = vmatprep.mubr.f32.mxu0 0.0
    %160 = vmatmul.mubr.f32.gmra.mxu0 %v53
    %v161 = vpop.f32.mrf.mxu0
    %v162 = vadd.f32 %v49, %v161
    %v163 = vpop.f32.mrf.mxu0
    %164 = vmatprep.mubr.f32.mxu0 0.0
    %165 = vmatmul.mubr.f32.gmra.mxu0 %v56
    %v166 = vpop.f32.mrf.mxu0
    %v167 = vadd.f32 %v49, %v166
    %v168 = vpop.f32.mrf.mxu0
    %169 = vmatprep.mubr.f32.mxu0 0.0
    %170 = vmatmul.mubr.f32.gmra.mxu0 %v59
    %v171 = vpop.f32.mrf.mxu0
    %v172 = vadd.f32 %v49, %v171
    %v173 = vpop.f32.mrf.mxu0
    %174 = vmatprep.mubr.f32.mxu0 0.0
    %175 = vmatmul.mubr.f32.gmra.mxu0 %v62
    %v176 = vpop.f32.mrf.mxu0
    %v177 = vadd.f32 %v49, %v176
    %v178 = vpop.f32.mrf.mxu0
    %179 = vmatprep.mubr.f32.mxu0 0.0
    %180 = vmatmul.mubr.f32.gmra.mxu0 %v65
    %v181 = vpop.f32.mrf.mxu0
    %v182 = vadd.f32 %v49, %v181
    %v183 = vpop.f32.mrf.mxu0
    %184 = vmatprep.mubr.f32.mxu0 0.0
    %185 = vmatmul.mubr.f32.gmra.mxu0 %v68
    %v186 = vpop.f32.mrf.mxu0
    %v187 = vadd.f32 %v49, %v186
    %v188 = vpop.f32.mrf.mxu0
    %189 = vmatprep.mubr.f32.mxu0 0.0
    %190 = vmatmul.mubr.f32.gmra.mxu0 %v71
    %v191 = vpop.f32.mrf.mxu0
    %v192 = vadd.f32 %v49, %v191
    %v193 = vpop.f32.mrf.mxu0
    %194 = vmatprep.mubr.f32.mxu0 0.0
    %195 = vmatmul.mubr.f32.gmra.mxu0 %v74
    %v196 = vpop.f32.mrf.mxu0
    %v197 = vadd.f32 %v49, %v196
    %v198 = vpop.f32.mrf.mxu0
    %199 = vmatprep.mubr.f32.mxu0 0.0
    %200 = vmatmul.mubr.f32.gmra.mxu0 %v77
    %v201 = vpop.f32.mrf.mxu0
    %v202 = vadd.f32 %v49, %v201
    %v203 = vpop.f32.mrf.mxu0
    %204 = vmatprep.mubr.f32.mxu0 0.0
    %205 = vmatmul.mubr.f32.gmra.mxu0 %v80
    %v206 = vpop.f32.mrf.mxu0
    %v207 = vadd.f32 %v49, %v206
    %v208 = vpop.f32.mrf.mxu0
    %209 = vmatprep.mubr.f32.mxu0 0.0
    %210 = vmatmul.mubr.f32.gmra.mxu0 %v83
    %v211 = vpop.f32.mrf.mxu0
    %v212 = vadd.f32 %v49, %v211
    %v213 = vpop.f32.mrf.mxu0
    %214 = vmatprep.mubr.f32.mxu0 0.0
    %215 = vmatmul.mubr.f32.gmra.mxu0 %v86
    %v216 = vpop.f32.mrf.mxu0
    %v217 = vadd.f32 %v49, %v216
    %v218 = vpop.f32.mrf.mxu0
    %219 = vmatprep.mubr.f32.mxu0 0.0
    %220 = vmatmul.mubr.f32.gmra.mxu0 %v89
    %v221 = vpop.f32.mrf.mxu0
    %v222 = vadd.f32 %v49, %v221
    %v223 = vpop.f32.mrf.mxu0
    %224 = vdwg.mxu0
    %v225 = vmax.f32 %v162, 0.0
    %v226 = vmax.f32 %v167, 0.0
    %v227 = vmax.f32 %v172, 0.0
    %v228 = vmax.f32 %v177, 0.0
    %v229 = vmax.f32 %v182, 0.0
    %v230 = vmax.f32 %v187, 0.0
    %v231 = vmax.f32 %v192, 0.0
    %v232 = vmax.f32 %v197, 0.0
    %v233 = vmax.f32 %v202, 0.0
    %v234 = vmax.f32 %v207, 0.0
    %v235 = vmax.f32 %v212, 0.0
    %v236 = vmax.f32 %v217, 0.0
    %v237 = vmax.f32 %v222, 0.0
    %s238 = scalar_lea.vmem %s0, 104
    %v239 = vld [vmem:[%s238] sm:$0xff]
    %v240 = vld [vmem:[%s238 + $0x8] sm:$0xff]
    %v241 = vld [vmem:[%s238 + $0x10] sm:$0xff]
    %v242 = vld [vmem:[%s238 + $0x18] sm:$0xff]
    %v243 = vld [vmem:[%s238 + $0x20] sm:$0xff]
    %v244 = vld [vmem:[%s238 + $0x28] sm:$0xff]
    %v245 = vld [vmem:[%s238 + $0x30] sm:$0xff]
    %v246 = vld [vmem:[%s238 + $0x38] sm:$0xff]
    %v247 = vld [vmem:[%s238 + $0x40] sm:$0xff]
    %v248 = vld [vmem:[%s238 + $0x48] sm:$0xff]
    %v249 = vld [vmem:[%s238 + $0x50] sm:$0xff]
    %v250 = vld [vmem:[%s238 + $0x58] sm:$0xff]
    %v251 = vld [vmem:[%s238 + $0x60] sm:$0xff]
    %v253 = vsel %vm51, %v239, 0
    %v256 = vsel %vm51, %v240, 0
    %v259 = vsel %vm51, %v241, 0
    %v262 = vsel %vm51, %v242, 0
    %v265 = vsel %vm51, %v243, 0
    %v268 = vsel %vm51, %v244, 0
    %v271 = vsel %vm51, %v245, 0
    %v274 = vsel %vm51, %v246, 0
    %v277 = vsel %vm51, %v247, 0
    %v280 = vsel %vm51, %v248, 0
    %v283 = vsel %vm51, %v249, 0
    %v286 = vsel %vm51, %v250, 0
    %v289 = vsel %vm51, %v251, 0
    %291 = vmatprep.subr.mxu0 0.0
    %292 = vmatpush1.msra.mxu0 0.0
    %293 = vmatprep.subr.mxu0 0.0
    %294 = vmatpush1.msra.mxu0 0.0
    %295 = vmatprep.subr.mxu0 0.0
    %296 = vmatpush1.msra.mxu0 0.0
    %297 = vmatprep.subr.mxu0 0.0
    %298 = vmatpush1.msra.mxu0 0.0
    %299 = vmatprep.subr.mxu0 0.0
    %300 = vmatpush1.msra.mxu0 0.0
    %301 = vmatprep.subr.mxu0 0.0
    %302 = vmatpush1.msra.mxu0 0.0
    %303 = vmatprep.subr.mxu0 0.0
    %304 = vmatpush1.msra.mxu0 0.0
    %305 = vmatprep.subr.mxu0 0.0
    %306 = vmatpush1.msra.mxu0 0.0
    %307 = vmatprep.subr.mxu0 0.0
    %308 = vmatpush1.msra.mxu0 0.0
    %309 = vmatprep.subr.mxu0 0.0
    %310 = vmatpush1.msra.mxu0 0.0
    %311 = vmatprep.subr.mxu0 0.0
    %312 = vmatpush1.msra.mxu0 0.0
    %313 = vmatprep.subr.mxu0 0.0
    %314 = vmatpush1.msra.mxu0 0.0
    %315 = vmatprep.subr.mxu0 0.0
    %316 = vmatpush1.msra.mxu0 %v93
    %317 = vmatprep.subr.mxu0 0.0
    %318 = vmatpush1.msra.mxu0 %v29
    %319 = vmatprep.subr.mxu0 0.0
    %320 = vmatpush1.msra.mxu0 %v28
    %321 = vmatprep.subr.mxu0 0.0
    %322 = vmatpush1.msra.mxu0 %v27
    %323 = vmatprep.subr.mxu0 0.0
    %324 = vmatpush2.msra.mxu0 0.0
    %325 = vmatprep.subr.mxu0 0.0
    %326 = vmatpush2.msra.mxu0 0.0
    %327 = vmatprep.subr.mxu0 0.0
    %328 = vmatpush2.msra.mxu0 0.0
    %329 = vmatprep.subr.mxu0 0.0
    %330 = vmatpush2.msra.mxu0 0.0
    %331 = vmatprep.subr.mxu0 0.0
    %332 = vmatpush2.msra.mxu0 0.0
    %333 = vmatprep.subr.mxu0 0.0
    %334 = vmatpush2.msra.mxu0 0.0
    %335 = vmatprep.subr.mxu0 0.0
    %336 = vmatpush2.msra.mxu0 0.0
    %337 = vmatprep.subr.mxu0 0.0
    %338 = vmatpush2.msra.mxu0 0.0
    %339 = vmatprep.subr.mxu0 0.0
    %340 = vmatpush2.msra.mxu0 0.0
    %341 = vmatprep.subr.mxu0 0.0
    %342 = vmatpush2.msra.mxu0 0.0
    %343 = vmatprep.subr.mxu0 0.0
    %344 = vmatpush2.msra.mxu0 0.0
    %345 = vmatprep.subr.mxu0 0.0
    %346 = vmatpush2.msra.mxu0 0.0
    %347 = vmatprep.subr.mxu0 0.0
    %348 = vmatpush2.msra.mxu0 0.0
    %349 = vmatprep.subr.mxu0 0.0
    %350 = vmatpush2.msra.mxu0 0.0
    %351 = vmatprep.subr.mxu0 0.0
    %352 = vmatpush2.msra.mxu0 0.0
    %353 = vmatprep.subr.mxu0 0.0
    %354 = vmatpush2.msra.mxu0 0.0
    %355 = vmatprep.mubr.f32.mxu0 0.0
    %356 = vmatmul.mubr.f32.gmra.mxu0 %v253
    %v357 = vpop.f32.mrf.mxu0
    %v358 = vadd.f32 %v49, %v357
    %v359 = vpop.f32.mrf.mxu0
    %360 = vmatprep.mubr.f32.mxu0 0.0
    %361 = vmatmul.mubr.f32.gmra.mxu0 %v256
    %v362 = vpop.f32.mrf.mxu0
    %v363 = vadd.f32 %v49, %v362
    %v364 = vpop.f32.mrf.mxu0
    %365 = vmatprep.mubr.f32.mxu0 0.0
    %366 = vmatmul.mubr.f32.gmra.mxu0 %v259
    %v367 = vpop.f32.mrf.mxu0
    %v368 = vadd.f32 %v49, %v367
    %v369 = vpop.f32.mrf.mxu0
    %370 = vmatprep.mubr.f32.mxu0 0.0
    %371 = vmatmul.mubr.f32.gmra.mxu0 %v262
    %v372 = vpop.f32.mrf.mxu0
    %v373 = vadd.f32 %v49, %v372
    %v374 = vpop.f32.mrf.mxu0
    %375 = vmatprep.mubr.f32.mxu0 0.0
    %376 = vmatmul.mubr.f32.gmra.mxu0 %v265
    %v377 = vpop.f32.mrf.mxu0
    %v378 = vadd.f32 %v49, %v377
    %v379 = vpop.f32.mrf.mxu0
    %380 = vmatprep.mubr.f32.mxu0 0.0
    %381 = vmatmul.mubr.f32.gmra.mxu0 %v268
    %v382 = vpop.f32.mrf.mxu0
    %v383 = vadd.f32 %v49, %v382
    %v384 = vpop.f32.mrf.mxu0
    %385 = vmatprep.mubr.f32.mxu0 0.0
    %386 = vmatmul.mubr.f32.gmra.mxu0 %v271
    %v387 = vpop.f32.mrf.mxu0
    %v388 = vadd.f32 %v49, %v387
    %v389 = vpop.f32.mrf.mxu0
    %390 = vmatprep.mubr.f32.mxu0 0.0
    %391 = vmatmul.mubr.f32.gmra.mxu0 %v274
    %v392 = vpop.f32.mrf.mxu0
    %v393 = vadd.f32 %v49, %v392
    %v394 = vpop.f32.mrf.mxu0
    %395 = vmatprep.mubr.f32.mxu0 0.0
    %396 = vmatmul.mubr.f32.gmra.mxu0 %v277
    %v397 = vpop.f32.mrf.mxu0
    %v398 = vadd.f32 %v49, %v397
    %v399 = vpop.f32.mrf.mxu0
    %400 = vmatprep.mubr.f32.mxu0 0.0
    %401 = vmatmul.mubr.f32.gmra.mxu0 %v280
    %v402 = vpop.f32.mrf.mxu0
    %v403 = vadd.f32 %v49, %v402
    %v404 = vpop.f32.mrf.mxu0
    %405 = vmatprep.mubr.f32.mxu0 0.0
    %406 = vmatmul.mubr.f32.gmra.mxu0 %v283
    %v407 = vpop.f32.mrf.mxu0
    %v408 = vadd.f32 %v49, %v407
    %v409 = vpop.f32.mrf.mxu0
    %410 = vmatprep.mubr.f32.mxu0 0.0
    %411 = vmatmul.mubr.f32.gmra.mxu0 %v286
    %v412 = vpop.f32.mrf.mxu0
    %v413 = vadd.f32 %v49, %v412
    %v414 = vpop.f32.mrf.mxu0
    %415 = vmatprep.mubr.f32.mxu0 0.0
    %416 = vmatmul.mubr.f32.gmra.mxu0 %v289
    %v417 = vpop.f32.mrf.mxu0
    %v418 = vadd.f32 %v49, %v417
    %v419 = vpop.f32.mrf.mxu0
    %420 = vdwg.mxu0
    %v421 = vmax.f32 %v358, 0.0
    %v422 = vmax.f32 %v363, 0.0
    %v423 = vmax.f32 %v368, 0.0
    %v424 = vmax.f32 %v373, 0.0
    %v425 = vmax.f32 %v378, 0.0
    %v426 = vmax.f32 %v383, 0.0
    %v427 = vmax.f32 %v388, 0.0
    %v428 = vmax.f32 %v393, 0.0
    %v429 = vmax.f32 %v398, 0.0
    %v430 = vmax.f32 %v403, 0.0
    %v431 = vmax.f32 %v408, 0.0
    %v432 = vmax.f32 %v413, 0.0
    %v433 = vmax.f32 %v418, 0.0
    %s434 = scalar_lea.vmem %s0, 208
    %v435 = vld [vmem:[%s434] sm:$0xff]
    %v436 = vld [vmem:[%s434 + $0x8] sm:$0xff]
    %v437 = vld [vmem:[%s434 + $0x10] sm:$0xff]
    %v438 = vld [vmem:[%s434 + $0x18] sm:$0xff]
    %v439 = vld [vmem:[%s434 + $0x20] sm:$0xff]
    %v440 = vld [vmem:[%s434 + $0x28] sm:$0xff]
    %v441 = vld [vmem:[%s434 + $0x30] sm:$0xff]
    %v442 = vld [vmem:[%s434 + $0x38] sm:$0xff]
    %v443 = vld [vmem:[%s434 + $0x40] sm:$0xff]
    %v444 = vld [vmem:[%s434 + $0x48] sm:$0xff]
    %v445 = vld [vmem:[%s434 + $0x50] sm:$0xff]
    %v446 = vld [vmem:[%s434 + $0x58] sm:$0xff]
    %v447 = vld [vmem:[%s434 + $0x60] sm:$0xff]
    %v449 = vsel %vm51, %v435, 0
    %v452 = vsel %vm51, %v436, 0
    %v455 = vsel %vm51, %v437, 0
    %v458 = vsel %vm51, %v438, 0
    %v461 = vsel %vm51, %v439, 0
    %v464 = vsel %vm51, %v440, 0
    %v467 = vsel %vm51, %v441, 0
    %v470 = vsel %vm51, %v442, 0
    %v473 = vsel %vm51, %v443, 0
    %v476 = vsel %vm51, %v444, 0
    %v479 = vsel %vm51, %v445, 0
    %v482 = vsel %vm51, %v446, 0
    %v485 = vsel %vm51, %v447, 0
    %487 = vmatprep.subr.mxu0 0.0
    %488 = vmatpush1.msra.mxu0 0.0
    %489 = vmatprep.subr.mxu0 0.0
    %490 = vmatpush1.msra.mxu0 0.0
    %491 = vmatprep.subr.mxu0 0.0
    %492 = vmatpush1.msra.mxu0 0.0
    %493 = vmatprep.subr.mxu0 0.0
    %494 = vmatpush1.msra.mxu0 0.0
    %495 = vmatprep.subr.mxu0 0.0
    %496 = vmatpush1.msra.mxu0 0.0
    %497 = vmatprep.subr.mxu0 0.0
    %498 = vmatpush1.msra.mxu0 0.0
    %499 = vmatprep.subr.mxu0 0.0
    %500 = vmatpush1.msra.mxu0 0.0
    %501 = vmatprep.subr.mxu0 0.0
    %502 = vmatpush1.msra.mxu0 0.0
    %503 = vmatprep.subr.mxu0 0.0
    %504 = vmatpush1.msra.mxu0 0.0
    %505 = vmatprep.subr.mxu0 0.0
    %506 = vmatpush1.msra.mxu0 0.0
    %507 = vmatprep.subr.mxu0 0.0
    %508 = vmatpush1.msra.mxu0 0.0
    %509 = vmatprep.subr.mxu0 0.0
    %510 = vmatpush1.msra.mxu0 0.0
    %511 = vmatprep.subr.mxu0 0.0
    %512 = vmatpush1.msra.mxu0 %v93
    %513 = vmatprep.subr.mxu0 0.0
    %514 = vmatpush1.msra.mxu0 %v29
    %515 = vmatprep.subr.mxu0 0.0
    %516 = vmatpush1.msra.mxu0 %v28
    %517 = vmatprep.subr.mxu0 0.0
    %518 = vmatpush1.msra.mxu0 %v27
    %519 = vmatprep.subr.mxu0 0.0
    %520 = vmatpush2.msra.mxu0 0.0
    %521 = vmatprep.subr.mxu0 0.0
    %522 = vmatpush2.msra.mxu0 0.0
    %523 = vmatprep.subr.mxu0 0.0
    %524 = vmatpush2.msra.mxu0 0.0
    %525 = vmatprep.subr.mxu0 0.0
    %526 = vmatpush2.msra.mxu0 0.0
    %527 = vmatprep.subr.mxu0 0.0
    %528 = vmatpush2.msra.mxu0 0.0
    %529 = vmatprep.subr.mxu0 0.0
    %530 = vmatpush2.msra.mxu0 0.0
    %531 = vmatprep.subr.mxu0 0.0
    %532 = vmatpush2.msra.mxu0 0.0
    %533 = vmatprep.subr.mxu0 0.0
    %534 = vmatpush2.msra.mxu0 0.0
    %535 = vmatprep.subr.mxu0 0.0
    %536 = vmatpush2.msra.mxu0 0.0
    %537 = vmatprep.subr.mxu0 0.0
    %538 = vmatpush2.msra.mxu0 0.0
    %539 = vmatprep.subr.mxu0 0.0
    %540 = vmatpush2.msra.mxu0 0.0
    %541 = vmatprep.subr.mxu0 0.0
    %542 = vmatpush2.msra.mxu0 0.0
    %543 = vmatprep.subr.mxu0 0.0
    %544 = vmatpush2.msra.mxu0 0.0
    %545 = vmatprep.subr.mxu0 0.0
    %546 = vmatpush2.msra.mxu0 0.0
    %547 = vmatprep.subr.mxu0 0.0
    %548 = vmatpush2.msra.mxu0 0.0
    %549 = vmatprep.subr.mxu0 0.0
    %550 = vmatpush2.msra.mxu0 0.0
    %551 = vmatprep.mubr.f32.mxu0 0.0
    %552 = vmatmul.mubr.f32.gmra.mxu0 %v449
    %v553 = vpop.f32.mrf.mxu0
    %v554 = vadd.f32 %v49, %v553
    %v555 = vpop.f32.mrf.mxu0
    %556 = vmatprep.mubr.f32.mxu0 0.0
    %557 = vmatmul.mubr.f32.gmra.mxu0 %v452
    %v558 = vpop.f32.mrf.mxu0
    %v559 = vadd.f32 %v49, %v558
    %v560 = vpop.f32.mrf.mxu0
    %561 = vmatprep.mubr.f32.mxu0 0.0
    %562 = vmatmul.mubr.f32.gmra.mxu0 %v455
    %v563 = vpop.f32.mrf.mxu0
    %v564 = vadd.f32 %v49, %v563
    %v565 = vpop.f32.mrf.mxu0
    %566 = vmatprep.mubr.f32.mxu0 0.0
    %567 = vmatmul.mubr.f32.gmra.mxu0 %v458
    %v568 = vpop.f32.mrf.mxu0
    %v569 = vadd.f32 %v49, %v568
    %v570 = vpop.f32.mrf.mxu0
    %571 = vmatprep.mubr.f32.mxu0 0.0
    %572 = vmatmul.mubr.f32.gmra.mxu0 %v461
    %v573 = vpop.f32.mrf.mxu0
    %v574 = vadd.f32 %v49, %v573
    %v575 = vpop.f32.mrf.mxu0
    %576 = vmatprep.mubr.f32.mxu0 0.0
    %577 = vmatmul.mubr.f32.gmra.mxu0 %v464
    %v578 = vpop.f32.mrf.mxu0
    %v579 = vadd.f32 %v49, %v578
    %v580 = vpop.f32.mrf.mxu0
    %581 = vmatprep.mubr.f32.mxu0 0.0
    %582 = vmatmul.mubr.f32.gmra.mxu0 %v467
    %v583 = vpop.f32.mrf.mxu0
    %v584 = vadd.f32 %v49, %v583
    %v585 = vpop.f32.mrf.mxu0
    %586 = vmatprep.mubr.f32.mxu0 0.0
    %587 = vmatmul.mubr.f32.gmra.mxu0 %v470
    %v588 = vpop.f32.mrf.mxu0
    %v589 = vadd.f32 %v49, %v588
    %v590 = vpop.f32.mrf.mxu0
    %591 = vmatprep.mubr.f32.mxu0 0.0
    %592 = vmatmul.mubr.f32.gmra.mxu0 %v473
    %v593 = vpop.f32.mrf.mxu0
    %v594 = vadd.f32 %v49, %v593
    %v595 = vpop.f32.mrf.mxu0
    %596 = vmatprep.mubr.f32.mxu0 0.0
    %597 = vmatmul.mubr.f32.gmra.mxu0 %v476
    %v598 = vpop.f32.mrf.mxu0
    %v599 = vadd.f32 %v49, %v598
    %v600 = vpop.f32.mrf.mxu0
    %601 = vmatprep.mubr.f32.mxu0 0.0
    %602 = vmatmul.mubr.f32.gmra.mxu0 %v479
    %v603 = vpop.f32.mrf.mxu0
    %v604 = vadd.f32 %v49, %v603
    %v605 = vpop.f32.mrf.mxu0
    %606 = vmatprep.mubr.f32.mxu0 0.0
    %607 = vmatmul.mubr.f32.gmra.mxu0 %v482
    %v608 = vpop.f32.mrf.mxu0
    %v609 = vadd.f32 %v49, %v608
    %v610 = vpop.f32.mrf.mxu0
    %611 = vmatprep.mubr.f32.mxu0 0.0
    %612 = vmatmul.mubr.f32.gmra.mxu0 %v485
    %v613 = vpop.f32.mrf.mxu0
    %v614 = vadd.f32 %v49, %v613
    %v615 = vpop.f32.mrf.mxu0
    %616 = vdwg.mxu0
    %v617 = vmax.f32 %v554, 0.0
    %v618 = vmax.f32 %v559, 0.0
    %v619 = vmax.f32 %v564, 0.0
    %v620 = vmax.f32 %v569, 0.0
    %v621 = vmax.f32 %v574, 0.0
    %v622 = vmax.f32 %v579, 0.0
    %v623 = vmax.f32 %v584, 0.0
    %v624 = vmax.f32 %v589, 0.0
    %v625 = vmax.f32 %v594, 0.0
    %v626 = vmax.f32 %v599, 0.0
    %v627 = vmax.f32 %v604, 0.0
    %v628 = vmax.f32 %v609, 0.0
    %v629 = vmax.f32 %v614, 0.0
    %s630 = scalar_lea.vmem %s0, 312
    %v631 = vld [vmem:[%s630] sm:$0xff]
    %v632 = vld [vmem:[%s630 + $0x8] sm:$0xff]
    %v633 = vld [vmem:[%s630 + $0x10] sm:$0xff]
    %v634 = vld [vmem:[%s630 + $0x18] sm:$0xff]
    %v635 = vld [vmem:[%s630 + $0x20] sm:$0xff]
    %v636 = vld [vmem:[%s630 + $0x28] sm:$0xff]
    %v637 = vld [vmem:[%s630 + $0x30] sm:$0xff]
    %v638 = vld [vmem:[%s630 + $0x38] sm:$0xff]
    %v639 = vld [vmem:[%s630 + $0x40] sm:$0xff]
    %v640 = vld [vmem:[%s630 + $0x48] sm:$0xff]
    %v641 = vld [vmem:[%s630 + $0x50] sm:$0xff]
    %v642 = vld [vmem:[%s630 + $0x58] sm:$0xff]
    %v643 = vld [vmem:[%s630 + $0x60] sm:$0xff]
    %v645 = vsel %vm51, %v631, 0
    %v648 = vsel %vm51, %v632, 0
    %v651 = vsel %vm51, %v633, 0
    %v654 = vsel %vm51, %v634, 0
    %v657 = vsel %vm51, %v635, 0
    %v660 = vsel %vm51, %v636, 0
    %v663 = vsel %vm51, %v637, 0
    %v666 = vsel %vm51, %v638, 0
    %v669 = vsel %vm51, %v639, 0
    %v672 = vsel %vm51, %v640, 0
    %v675 = vsel %vm51, %v641, 0
    %v678 = vsel %vm51, %v642, 0
    %v681 = vsel %vm51, %v643, 0
    %683 = vmatprep.subr.mxu0 0.0
    %684 = vmatpush1.msra.mxu0 0.0
    %685 = vmatprep.subr.mxu0 0.0
    %686 = vmatpush1.msra.mxu0 0.0
    %687 = vmatprep.subr.mxu0 0.0
    %688 = vmatpush1.msra.mxu0 0.0
    %689 = vmatprep.subr.mxu0 0.0
    %690 = vmatpush1.msra.mxu0 0.0
    %691 = vmatprep.subr.mxu0 0.0
    %692 = vmatpush1.msra.mxu0 0.0
    %693 = vmatprep.subr.mxu0 0.0
    %694 = vmatpush1.msra.mxu0 0.0
    %695 = vmatprep.subr.mxu0 0.0
    %696 = vmatpush1.msra.mxu0 0.0
    %697 = vmatprep.subr.mxu0 0.0
    %698 = vmatpush1.msra.mxu0 0.0
    %699 = vmatprep.subr.mxu0 0.0
    %700 = vmatpush1.msra.mxu0 0.0
    %701 = vmatprep.subr.mxu0 0.0
    %702 = vmatpush1.msra.mxu0 0.0
    %703 = vmatprep.subr.mxu0 0.0
    %704 = vmatpush1.msra.mxu0 0.0
    %705 = vmatprep.subr.mxu0 0.0
    %706 = vmatpush1.msra.mxu0 0.0
    %707 = vmatprep.subr.mxu0 0.0
    %708 = vmatpush1.msra.mxu0 %v93
    %709 = vmatprep.subr.mxu0 0.0
    %710 = vmatpush1.msra.mxu0 %v29
    %711 = vmatprep.subr.mxu0 0.0
    %712 = vmatpush1.msra.mxu0 %v28
    %713 = vmatprep.subr.mxu0 0.0
    %714 = vmatpush1.msra.mxu0 %v27
    %715 = vmatprep.subr.mxu0 0.0
    %716 = vmatpush2.msra.mxu0 0.0
    %717 = vmatprep.subr.mxu0 0.0
    %718 = vmatpush2.msra.mxu0 0.0
    %719 = vmatprep.subr.mxu0 0.0
    %720 = vmatpush2.msra.mxu0 0.0
    %721 = vmatprep.subr.mxu0 0.0
    %722 = vmatpush2.msra.mxu0 0.0
    %723 = vmatprep.subr.mxu0 0.0
    %724 = vmatpush2.msra.mxu0 0.0
    %725 = vmatprep.subr.mxu0 0.0
    %726 = vmatpush2.msra.mxu0 0.0
    %727 = vmatprep.subr.mxu0 0.0
    %728 = vmatpush2.msra.mxu0 0.0
    %729 = vmatprep.subr.mxu0 0.0
    %730 = vmatpush2.msra.mxu0 0.0
    %731 = vmatprep.subr.mxu0 0.0
    %732 = vmatpush2.msra.mxu0 0.0
    %733 = vmatprep.subr.mxu0 0.0
    %734 = vmatpush2.msra.mxu0 0.0
    %735 = vmatprep.subr.mxu0 0.0
    %736 = vmatpush2.msra.mxu0 0.0
    %737 = vmatprep.subr.mxu0 0.0
    %738 = vmatpush2.msra.mxu0 0.0
    %739 = vmatprep.subr.mxu0 0.0
    %740 = vmatpush2.msra.mxu0 0.0
    %741 = vmatprep.subr.mxu0 0.0
    %742 = vmatpush2.msra.mxu0 0.0
    %743 = vmatprep.subr.mxu0 0.0
    %744 = vmatpush2.msra.mxu0 0.0
    %745 = vmatprep.subr.mxu0 0.0
    %746 = vmatpush2.msra.mxu0 0.0
    %747 = vmatprep.mubr.f32.mxu0 0.0
    %748 = vmatmul.mubr.f32.gmra.mxu0 %v645
    %v749 = vpop.f32.mrf.mxu0
    %v750 = vadd.f32 %v49, %v749
    %v751 = vpop.f32.mrf.mxu0
    %752 = vmatprep.mubr.f32.mxu0 0.0
    %753 = vmatmul.mubr.f32.gmra.mxu0 %v648
    %v754 = vpop.f32.mrf.mxu0
    %v755 = vadd.f32 %v49, %v754
    %v756 = vpop.f32.mrf.mxu0
    %757 = vmatprep.mubr.f32.mxu0 0.0
    %758 = vmatmul.mubr.f32.gmra.mxu0 %v651
    %v759 = vpop.f32.mrf.mxu0
    %v760 = vadd.f32 %v49, %v759
    %v761 = vpop.f32.mrf.mxu0
    %762 = vmatprep.mubr.f32.mxu0 0.0
    %763 = vmatmul.mubr.f32.gmra.mxu0 %v654
    %v764 = vpop.f32.mrf.mxu0
    %v765 = vadd.f32 %v49, %v764
    %v766 = vpop.f32.mrf.mxu0
    %767 = vmatprep.mubr.f32.mxu0 0.0
    %768 = vmatmul.mubr.f32.gmra.mxu0 %v657
    %v769 = vpop.f32.mrf.mxu0
    %v770 = vadd.f32 %v49, %v769
    %v771 = vpop.f32.mrf.mxu0
    %772 = vmatprep.mubr.f32.mxu0 0.0
    %773 = vmatmul.mubr.f32.gmra.mxu0 %v660
    %v774 = vpop.f32.mrf.mxu0
    %v775 = vadd.f32 %v49, %v774
    %v776 = vpop.f32.mrf.mxu0
    %777 = vmatprep.mubr.f32.mxu0 0.0
    %778 = vmatmul.mubr.f32.gmra.mxu0 %v663
    %v779 = vpop.f32.mrf.mxu0
    %v780 = vadd.f32 %v49, %v779
    %v781 = vpop.f32.mrf.mxu0
    %782 = vmatprep.mubr.f32.mxu0 0.0
    %783 = vmatmul.mubr.f32.gmra.mxu0 %v666
    %v784 = vpop.f32.mrf.mxu0
    %v785 = vadd.f32 %v49, %v784
    %v786 = vpop.f32.mrf.mxu0
    %787 = vmatprep.mubr.f32.mxu0 0.0
    %788 = vmatmul.mubr.f32.gmra.mxu0 %v669
    %v789 = vpop.f32.mrf.mxu0
    %v790 = vadd.f32 %v49, %v789
    %v791 = vpop.f32.mrf.mxu0
    %792 = vmatprep.mubr.f32.mxu0 0.0
    %793 = vmatmul.mubr.f32.gmra.mxu0 %v672
    %v794 = vpop.f32.mrf.mxu0
    %v795 = vadd.f32 %v49, %v794
    %v796 = vpop.f32.mrf.mxu0
    %797 = vmatprep.mubr.f32.mxu0 0.0
    %798 = vmatmul.mubr.f32.gmra.mxu0 %v675
    %v799 = vpop.f32.mrf.mxu0
    %v800 = vadd.f32 %v49, %v799
    %v801 = vpop.f32.mrf.mxu0
    %802 = vmatprep.mubr.f32.mxu0 0.0
    %803 = vmatmul.mubr.f32.gmra.mxu0 %v678
    %v804 = vpop.f32.mrf.mxu0
    %v805 = vadd.f32 %v49, %v804
    %v806 = vpop.f32.mrf.mxu0
    %807 = vmatprep.mubr.f32.mxu0 0.0
    %808 = vmatmul.mubr.f32.gmra.mxu0 %v681
    %v809 = vpop.f32.mrf.mxu0
    %v810 = vadd.f32 %v49, %v809
    %v811 = vpop.f32.mrf.mxu0
    %812 = vdwg.mxu0
    %v813 = vmax.f32 %v750, 0.0
    %v814 = vmax.f32 %v755, 0.0
    %v815 = vmax.f32 %v760, 0.0
    %v816 = vmax.f32 %v765, 0.0
    %v817 = vmax.f32 %v770, 0.0
    %v818 = vmax.f32 %v775, 0.0
    %v819 = vmax.f32 %v780, 0.0
    %v820 = vmax.f32 %v785, 0.0
    %v821 = vmax.f32 %v790, 0.0
    %v822 = vmax.f32 %v795, 0.0
    %v823 = vmax.f32 %v800, 0.0
    %v824 = vmax.f32 %v805, 0.0
    %v825 = vmax.f32 %v810, 0.0
    %v826 = vmax.f32 %v225, %v421
    %v827 = vmax.f32 %v226, %v422
    %v828 = vmax.f32 %v227, %v423
    %v829 = vmax.f32 %v228, %v424
    %v830 = vmax.f32 %v229, %v425
    %v831 = vmax.f32 %v230, %v426
    %v832 = vmax.f32 %v231, %v427
    %v833 = vmax.f32 %v232, %v428
    %v834 = vmax.f32 %v233, %v429
    %v835 = vmax.f32 %v234, %v430
    %v836 = vmax.f32 %v235, %v431
    %v837 = vmax.f32 %v236, %v432
    %v838 = vmax.f32 %v237, %v433
    %v839 = vmax.f32 %v617, %v813
    %v840 = vmax.f32 %v618, %v814
    %v841 = vmax.f32 %v619, %v815
    %v842 = vmax.f32 %v620, %v816
    %v843 = vmax.f32 %v621, %v817
    %v844 = vmax.f32 %v622, %v818
    %v845 = vmax.f32 %v623, %v819
    %v846 = vmax.f32 %v624, %v820
    %v847 = vmax.f32 %v625, %v821
    %v848 = vmax.f32 %v626, %v822
    %v849 = vmax.f32 %v627, %v823
    %v850 = vmax.f32 %v628, %v824
    %v851 = vmax.f32 %v629, %v825
    %v852 = vmax.f32 %v826, %v839
    %v853 = vmax.f32 %v827, %v840
    %v854 = vmax.f32 %v828, %v841
    %v855 = vmax.f32 %v829, %v842
    %v856 = vmax.f32 %v830, %v843
    %v857 = vmax.f32 %v831, %v844
    %v858 = vmax.f32 %v832, %v845
    %v859 = vmax.f32 %v833, %v846
    %v860 = vmax.f32 %v834, %v847
    %v861 = vmax.f32 %v835, %v848
    %v862 = vmax.f32 %v836, %v849
    %v863 = vmax.f32 %v837, %v850
    %v864 = vmax.f32 %v838, %v851
    %v878 = vcombine.high %v852, %v852
    %v880 = vunpack.c.l.s4 1983009808
    %v881 = vunpack.c.0.s8 %v880
    %v882 = vlaneseq
    %v883 = vshrl.u32 %v882, 7
    %v884 = vsub.s32 %v881, %v883
    %v885 = vrot.slane %v852, %v884
    %v887 = vunpack.c.l.s4 1983009808
    %v888 = vunpack.c.0.s8 %v887
    %v889 = vlaneseq
    %v890 = vshrl.u32 %v889, 7
    %v891 = vsub.s32 %v888, %v890
    %v892 = vrot.slane %v878, %v891
    %v893 = vcombine.high %v885, %v885
    %v894 = vcombine.high %v892, %v892
    %v895 = vcombine.high %v853, %v853
    %v897 = vunpack.c.l.s4 1983009808
    %v898 = vunpack.c.0.s8 %v897
    %v899 = vlaneseq
    %v900 = vshrl.u32 %v899, 7
    %v901 = vsub.s32 %v898, %v900
    %v902 = vrot.slane %v853, %v901
    %v904 = vunpack.c.l.s4 1983009808
    %v905 = vunpack.c.0.s8 %v904
    %v906 = vlaneseq
    %v907 = vshrl.u32 %v906, 7
    %v908 = vsub.s32 %v905, %v907
    %v909 = vrot.slane %v895, %v908
    %v910 = vcombine.high %v902, %v902
    %v911 = vcombine.high %v909, %v909
    %v912 = vcombine.high %v854, %v854
    %v914 = vunpack.c.l.s4 1983009808
    %v915 = vunpack.c.0.s8 %v914
    %v916 = vlaneseq
    %v917 = vshrl.u32 %v916, 7
    %v918 = vsub.s32 %v915, %v917
    %v919 = vrot.slane %v854, %v918
    %v921 = vunpack.c.l.s4 1983009808
    %v922 = vunpack.c.0.s8 %v921
    %v923 = vlaneseq
    %v924 = vshrl.u32 %v923, 7
    %v925 = vsub.s32 %v922, %v924
    %v926 = vrot.slane %v912, %v925
    %v927 = vcombine.high %v919, %v919
    %v928 = vcombine.high %v926, %v926
    %v929 = vcombine.high %v855, %v855
    %v931 = vunpack.c.l.s4 1983009808
    %v932 = vunpack.c.0.s8 %v931
    %v933 = vlaneseq
    %v934 = vshrl.u32 %v933, 7
    %v935 = vsub.s32 %v932, %v934
    %v936 = vrot.slane %v855, %v935
    %v938 = vunpack.c.l.s4 1983009808
    %v939 = vunpack.c.0.s8 %v938
    %v940 = vlaneseq
    %v941 = vshrl.u32 %v940, 7
    %v942 = vsub.s32 %v939, %v941
    %v943 = vrot.slane %v929, %v942
    %v944 = vcombine.high %v936, %v936
    %v945 = vcombine.high %v943, %v943
    %v946 = vcombine.high %v856, %v856
    %v948 = vunpack.c.l.s4 1983009808
    %v949 = vunpack.c.0.s8 %v948
    %v950 = vlaneseq
    %v951 = vshrl.u32 %v950, 7
    %v952 = vsub.s32 %v949, %v951
    %v953 = vrot.slane %v856, %v952
    %v955 = vunpack.c.l.s4 1983009808
    %v956 = vunpack.c.0.s8 %v955
    %v957 = vlaneseq
    %v958 = vshrl.u32 %v957, 7
    %v959 = vsub.s32 %v956, %v958
    %v960 = vrot.slane %v946, %v959
    %v961 = vcombine.high %v953, %v953
    %v962 = vcombine.high %v960, %v960
    %v963 = vcombine.high %v857, %v857
    %v965 = vunpack.c.l.s4 1983009808
    %v966 = vunpack.c.0.s8 %v965
    %v967 = vlaneseq
    %v968 = vshrl.u32 %v967, 7
    %v969 = vsub.s32 %v966, %v968
    %v970 = vrot.slane %v857, %v969
    %v972 = vunpack.c.l.s4 1983009808
    %v973 = vunpack.c.0.s8 %v972
    %v974 = vlaneseq
    %v975 = vshrl.u32 %v974, 7
    %v976 = vsub.s32 %v973, %v975
    %v977 = vrot.slane %v963, %v976
    %v978 = vcombine.high %v970, %v970
    %v979 = vcombine.high %v977, %v977
    %v980 = vcombine.high %v858, %v858
    %v982 = vunpack.c.l.s4 1983009808
    %v983 = vunpack.c.0.s8 %v982
    %v984 = vlaneseq
    %v985 = vshrl.u32 %v984, 7
    %v986 = vsub.s32 %v983, %v985
    %v987 = vrot.slane %v858, %v986
    %v989 = vunpack.c.l.s4 1983009808
    %v990 = vunpack.c.0.s8 %v989
    %v991 = vlaneseq
    %v992 = vshrl.u32 %v991, 7
    %v993 = vsub.s32 %v990, %v992
    %v994 = vrot.slane %v980, %v993
    %v995 = vcombine.high %v987, %v987
    %v996 = vcombine.high %v994, %v994
    %v997 = vcombine.high %v859, %v859
    %v999 = vunpack.c.l.s4 1983009808
    %v1000 = vunpack.c.0.s8 %v999
    %v1001 = vlaneseq
    %v1002 = vshrl.u32 %v1001, 7
    %v1003 = vsub.s32 %v1000, %v1002
    %v1004 = vrot.slane %v859, %v1003
    %v1006 = vunpack.c.l.s4 1983009808
    %v1007 = vunpack.c.0.s8 %v1006
    %v1008 = vlaneseq
    %v1009 = vshrl.u32 %v1008, 7
    %v1010 = vsub.s32 %v1007, %v1009
    %v1011 = vrot.slane %v997, %v1010
    %v1012 = vcombine.high %v1004, %v1004
    %v1013 = vcombine.high %v1011, %v1011
    %v1014 = vcombine.high %v860, %v860
    %v1016 = vunpack.c.l.s4 1983009808
    %v1017 = vunpack.c.0.s8 %v1016
    %v1018 = vlaneseq
    %v1019 = vshrl.u32 %v1018, 7
    %v1020 = vsub.s32 %v1017, %v1019
    %v1021 = vrot.slane %v860, %v1020
    %v1023 = vunpack.c.l.s4 1983009808
    %v1024 = vunpack.c.0.s8 %v1023
    %v1025 = vlaneseq
    %v1026 = vshrl.u32 %v1025, 7
    %v1027 = vsub.s32 %v1024, %v1026
    %v1028 = vrot.slane %v1014, %v1027
    %v1029 = vcombine.high %v1021, %v1021
    %v1030 = vcombine.high %v1028, %v1028
    %v1031 = vcombine.high %v861, %v861
    %v1033 = vunpack.c.l.s4 1983009808
    %v1034 = vunpack.c.0.s8 %v1033
    %v1035 = vlaneseq
    %v1036 = vshrl.u32 %v1035, 7
    %v1037 = vsub.s32 %v1034, %v1036
    %v1038 = vrot.slane %v861, %v1037
    %v1040 = vunpack.c.l.s4 1983009808
    %v1041 = vunpack.c.0.s8 %v1040
    %v1042 = vlaneseq
    %v1043 = vshrl.u32 %v1042, 7
    %v1044 = vsub.s32 %v1041, %v1043
    %v1045 = vrot.slane %v1031, %v1044
    %v1046 = vcombine.high %v1038, %v1038
    %v1047 = vcombine.high %v1045, %v1045
    %v1048 = vcombine.high %v862, %v862
    %v1050 = vunpack.c.l.s4 1983009808
    %v1051 = vunpack.c.0.s8 %v1050
    %v1052 = vlaneseq
    %v1053 = vshrl.u32 %v1052, 7
    %v1054 = vsub.s32 %v1051, %v1053
    %v1055 = vrot.slane %v862, %v1054
    %v1057 = vunpack.c.l.s4 1983009808
    %v1058 = vunpack.c.0.s8 %v1057
    %v1059 = vlaneseq
    %v1060 = vshrl.u32 %v1059, 7
    %v1061 = vsub.s32 %v1058, %v1060
    %v1062 = vrot.slane %v1048, %v1061
    %v1063 = vcombine.high %v1055, %v1055
    %v1064 = vcombine.high %v1062, %v1062
    %v1065 = vcombine.high %v863, %v863
    %v1067 = vunpack.c.l.s4 1983009808
    %v1068 = vunpack.c.0.s8 %v1067
    %v1069 = vlaneseq
    %v1070 = vshrl.u32 %v1069, 7
    %v1071 = vsub.s32 %v1068, %v1070
    %v1072 = vrot.slane %v863, %v1071
    %v1074 = vunpack.c.l.s4 1983009808
    %v1075 = vunpack.c.0.s8 %v1074
    %v1076 = vlaneseq
    %v1077 = vshrl.u32 %v1076, 7
    %v1078 = vsub.s32 %v1075, %v1077
    %v1079 = vrot.slane %v1065, %v1078
    %v1080 = vcombine.high %v1072, %v1072
    %v1081 = vcombine.high %v1079, %v1079
    %v1082 = vcombine.high %v864, %v864
    %v1084 = vunpack.c.l.s4 1983009808
    %v1085 = vunpack.c.0.s8 %v1084
    %v1086 = vlaneseq
    %v1087 = vshrl.u32 %v1086, 7
    %v1088 = vsub.s32 %v1085, %v1087
    %v1089 = vrot.slane %v864, %v1088
    %v1091 = vunpack.c.l.s4 1983009808
    %v1092 = vunpack.c.0.s8 %v1091
    %v1093 = vlaneseq
    %v1094 = vshrl.u32 %v1093, 7
    %v1095 = vsub.s32 %v1092, %v1094
    %v1096 = vrot.slane %v1082, %v1095
    %v1097 = vcombine.high %v1089, %v1089
    %v1098 = vcombine.high %v1096, %v1096
    %v1099 = vld [vmem:[%s3] sm:$0xff]
    %v1100 = vld [vmem:[%s3 + $0x8] sm:$0xff]
    %v1101 = vld [vmem:[%s3 + $0x10] sm:$0xff]
    %v1102 = vld [vmem:[%s3 + $0x18] sm:$0xff]
    %v1103 = vld [vmem:[%s3 + $0x20] sm:$0xff]
    %v1104 = vld [vmem:[%s3 + $0x28] sm:$0xff]
    %v1105 = vld [vmem:[%s3 + $0x30] sm:$0xff]
    %v1106 = vld [vmem:[%s3 + $0x38] sm:$0xff]
    %v1107 = vld [vmem:[%s3 + $0x40] sm:$0xff]
    %v1108 = vld [vmem:[%s3 + $0x48] sm:$0xff]
    %v1109 = vld [vmem:[%s3 + $0x50] sm:$0xff]
    %v1110 = vld [vmem:[%s3 + $0x58] sm:$0xff]
    %v1111 = vld [vmem:[%s3 + $0x60] sm:$0xff]
    %v1112 = vld [vmem:[%s3 + $0x68] sm:$0xff]
    %v1113 = vld [vmem:[%s3 + $0x70] sm:$0xff]
    %v1114 = vld [vmem:[%s3 + $0x78] sm:$0xff]
    %v1115 = vld [vmem:[%s3 + $0x80] sm:$0xff]
    %v1116 = vld [vmem:[%s3 + $0x88] sm:$0xff]
    %v1117 = vld [vmem:[%s3 + $0x90] sm:$0xff]
    %v1118 = vld [vmem:[%s3 + $0x98] sm:$0xff]
    %v1119 = vld [vmem:[%s3 + $0xa0] sm:$0xff]
    %v1120 = vld [vmem:[%s3 + $0xa8] sm:$0xff]
    %v1121 = vld [vmem:[%s3 + $0xb0] sm:$0xff]
    %v1122 = vld [vmem:[%s3 + $0xb8] sm:$0xff]
    %v1123 = vld [vmem:[%s3 + $0xc0] sm:$0xff]
    %v1124 = vld [vmem:[%s3 + $0xc8] sm:$0xff]
    %v1125 = vld [vmem:[%s3 + $0xd0] sm:$0xff]
    %v1126 = vld [vmem:[%s3 + $0xd8] sm:$0xff]
    %v1127 = vld [vmem:[%s3 + $0xe0] sm:$0xff]
    %v1128 = vld [vmem:[%s3 + $0xe8] sm:$0xff]
    %v1129 = vld [vmem:[%s3 + $0xf0] sm:$0xff]
    %v1130 = vld [vmem:[%s3 + $0xf8] sm:$0xff]
    %v1131 = vld [vmem:[%s3 + $0x100] sm:$0xff]
    %v1132 = vld [vmem:[%s3 + $0x108] sm:$0xff]
    %v1133 = vld [vmem:[%s3 + $0x110] sm:$0xff]
    %v1134 = vld [vmem:[%s3 + $0x118] sm:$0xff]
    %v1135 = vld [vmem:[%s3 + $0x120] sm:$0xff]
    %v1136 = vld [vmem:[%s3 + $0x128] sm:$0xff]
    %v1137 = vld [vmem:[%s3 + $0x130] sm:$0xff]
    %v1138 = vld [vmem:[%s3 + $0x138] sm:$0xff]
    %v1139 = vld [vmem:[%s3 + $0x140] sm:$0xff]
    %v1140 = vld [vmem:[%s3 + $0x148] sm:$0xff]
    %v1141 = vld [vmem:[%s3 + $0x150] sm:$0xff]
    %v1142 = vld [vmem:[%s3 + $0x158] sm:$0xff]
    %v1143 = vld [vmem:[%s3 + $0x160] sm:$0xff]
    %v1144 = vld [vmem:[%s3 + $0x168] sm:$0xff]
    %v1145 = vld [vmem:[%s3 + $0x170] sm:$0xff]
    %v1146 = vld [vmem:[%s3 + $0x178] sm:$0xff]
    %v1147 = vld [vmem:[%s3 + $0x180] sm:$0xff]
    %v1148 = vld [vmem:[%s3 + $0x188] sm:$0xff]
    %v1149 = vld [vmem:[%s3 + $0x190] sm:$0xff]
    %v1150 = vld [vmem:[%s3 + $0x198] sm:$0xff]
    %v1151 = vld [vmem:[%s3 + $0x1a0] sm:$0xff]
    %v1152 = vld [vmem:[%s3 + $0x1a8] sm:$0xff]
    %v1153 = vld [vmem:[%s3 + $0x1b0] sm:$0xff]
    %v1154 = vld [vmem:[%s3 + $0x1b8] sm:$0xff]
    %v1155 = vld [vmem:[%s3 + $0x1c0] sm:$0xff]
    %v1156 = vld [vmem:[%s3 + $0x1c8] sm:$0xff]
    %v1157 = vld [vmem:[%s3 + $0x1d0] sm:$0xff]
    %v1158 = vld [vmem:[%s3 + $0x1d8] sm:$0xff]
    %v1159 = vld [vmem:[%s3 + $0x1e0] sm:$0xff]
    %v1160 = vld [vmem:[%s3 + $0x1e8] sm:$0xff]
    %v1161 = vld [vmem:[%s3 + $0x1f0] sm:$0xff]
    %v1162 = vld [vmem:[%s3 + $0x1f8] sm:$0xff]
    %v1163 = vld [vmem:[%s3 + $0x200] sm:$0xff]
    %v1164 = vld [vmem:[%s3 + $0x208] sm:$0xff]
    %v1165 = vld [vmem:[%s3 + $0x210] sm:$0xff]
    %v1166 = vld [vmem:[%s3 + $0x218] sm:$0xff]
    %v1167 = vld [vmem:[%s3 + $0x220] sm:$0xff]
    %v1168 = vld [vmem:[%s3 + $0x228] sm:$0xff]
    %v1169 = vld [vmem:[%s3 + $0x230] sm:$0xff]
    %v1170 = vld [vmem:[%s3 + $0x238] sm:$0xff]
    %v1171 = vld [vmem:[%s3 + $0x240] sm:$0xff]
    %v1172 = vld [vmem:[%s3 + $0x248] sm:$0xff]
    %v1173 = vld [vmem:[%s3 + $0x250] sm:$0xff]
    %v1174 = vld [vmem:[%s3 + $0x258] sm:$0xff]
    %v1175 = vld [vmem:[%s3 + $0x260] sm:$0xff]
    %v1176 = vld [vmem:[%s3 + $0x268] sm:$0xff]
    %v1177 = vld [vmem:[%s3 + $0x270] sm:$0xff]
    %v1178 = vld [vmem:[%s3 + $0x278] sm:$0xff]
    %v1179 = vld [vmem:[%s3 + $0x280] sm:$0xff]
    %v1180 = vld [vmem:[%s3 + $0x288] sm:$0xff]
    %v1181 = vld [vmem:[%s3 + $0x290] sm:$0xff]
    %v1182 = vld [vmem:[%s3 + $0x298] sm:$0xff]
    %v1183 = vld [vmem:[%s3 + $0x2a0] sm:$0xff]
    %v1184 = vld [vmem:[%s3 + $0x2a8] sm:$0xff]
    %v1185 = vld [vmem:[%s3 + $0x2b0] sm:$0xff]
    %v1186 = vld [vmem:[%s3 + $0x2b8] sm:$0xff]
    %v1187 = vld [vmem:[%s3 + $0x2c0] sm:$0xff]
    %v1188 = vld [vmem:[%s3 + $0x2c8] sm:$0xff]
    %v1189 = vld [vmem:[%s3 + $0x2d0] sm:$0xff]
    %v1190 = vld [vmem:[%s3 + $0x2d8] sm:$0xff]
    %v1191 = vld [vmem:[%s3 + $0x2e0] sm:$0xff]
    %v1192 = vld [vmem:[%s3 + $0x2e8] sm:$0xff]
    %v1193 = vld [vmem:[%s3 + $0x2f0] sm:$0xff]
    %v1194 = vld [vmem:[%s3 + $0x2f8] sm:$0xff]
    %v1195 = vld [vmem:[%s3 + $0x300] sm:$0xff]
    %v1196 = vld [vmem:[%s3 + $0x308] sm:$0xff]
    %v1197 = vld [vmem:[%s3 + $0x310] sm:$0xff]
    %v1198 = vld [vmem:[%s3 + $0x318] sm:$0xff]
    %v1199 = vld [vmem:[%s3 + $0x320] sm:$0xff]
    %v1200 = vld [vmem:[%s3 + $0x328] sm:$0xff]
    %v1201 = vld [vmem:[%s3 + $0x330] sm:$0xff]
    %v1202 = vld [vmem:[%s3 + $0x338] sm:$0xff]
    %vm1203 = vcmask 130048
    %v1204 = vsel %vm1203, %v885, 0
    %1206 = vmatprep.subr.mxu0 0.0
    %1207 = vmatpush1.msra.mxu0 0.0
    %1208 = vmatprep.subr.mxu0 0.0
    %1209 = vmatpush1.msra.mxu0 0.0
    %1210 = vmatprep.subr.mxu0 0.0
    %1211 = vmatpush1.msra.mxu0 0.0
    %1212 = vmatprep.subr.mxu0 0.0
    %1213 = vmatpush1.msra.mxu0 0.0
    %1214 = vmatprep.subr.mxu0 0.0
    %1215 = vmatpush1.msra.mxu0 0.0
    %1216 = vmatprep.subr.mxu0 0.0
    %1217 = vmatpush1.msra.mxu0 0.0
    %1218 = vmatprep.subr.mxu0 0.0
    %1219 = vmatpush1.msra.mxu0 0.0
    %1220 = vmatprep.subr.mxu0 0.0
    %1221 = vmatpush1.msra.mxu0 0.0
    %1222 = vmatprep.subr.mxu0 0.0
    %1223 = vmatpush1.msra.mxu0 0.0
    %1224 = vmatprep.subr.mxu0 0.0
    %1225 = vmatpush1.msra.mxu0 0.0
    %1226 = vmatprep.subr.mxu0 0.0
    %1227 = vmatpush1.msra.mxu0 0.0
    %1228 = vmatprep.subr.mxu0 0.0
    %1229 = vmatpush1.msra.mxu0 0.0
    %1230 = vmatprep.subr.mxu0 0.0
    %1231 = vmatpush1.msra.mxu0 0.0
    %1232 = vmatprep.subr.mxu0 0.0
    %1233 = vmatpush1.msra.mxu0 0.0
    %1234 = vmatprep.subr.mxu0 0.0
    %1235 = vmatpush1.msra.mxu0 %v1100
    %1236 = vmatprep.subr.mxu0 0.0
    %1237 = vmatpush1.msra.mxu0 %v1099
    %1238 = vmatprep.subr.mxu0 0.0
    %1239 = vmatpush2.msra.mxu0 0.0
    %1240 = vmatprep.subr.mxu0 0.0
    %1241 = vmatpush2.msra.mxu0 0.0
    %1242 = vmatprep.subr.mxu0 0.0
    %1243 = vmatpush2.msra.mxu0 0.0
    %1244 = vmatprep.subr.mxu0 0.0
    %1245 = vmatpush2.msra.mxu0 0.0
    %1246 = vmatprep.subr.mxu0 0.0
    %1247 = vmatpush2.msra.mxu0 0.0
    %1248 = vmatprep.subr.mxu0 0.0
    %1249 = vmatpush2.msra.mxu0 0.0
    %1250 = vmatprep.subr.mxu0 0.0
    %1251 = vmatpush2.msra.mxu0 0.0
    %1252 = vmatprep.subr.mxu0 0.0
    %1253 = vmatpush2.msra.mxu0 0.0
    %1254 = vmatprep.subr.mxu0 0.0
    %1255 = vmatpush2.msra.mxu0 0.0
    %1256 = vmatprep.subr.mxu0 0.0
    %1257 = vmatpush2.msra.mxu0 0.0
    %1258 = vmatprep.subr.mxu0 0.0
    %1259 = vmatpush2.msra.mxu0 0.0
    %1260 = vmatprep.subr.mxu0 0.0
    %1261 = vmatpush2.msra.mxu0 0.0
    %1262 = vmatprep.subr.mxu0 0.0
    %1263 = vmatpush2.msra.mxu0 0.0
    %1264 = vmatprep.subr.mxu0 0.0
    %1265 = vmatpush2.msra.mxu0 0.0
    %1266 = vmatprep.subr.mxu0 0.0
    %1267 = vmatpush2.msra.mxu0 0.0
    %1268 = vmatprep.subr.mxu0 0.0
    %1269 = vmatpush2.msra.mxu0 0.0
    %1270 = vmatprep.mubr.f32.mxu0 0.0
    %1271 = vmatmul.mubr.f32.gmra.mxu0 %v1204
    %v1272 = vpop.f32.mrf.mxu0
    %v1273 = vadd.f32 0.0, %v1272
    %v1274 = vpop.f32.mrf.mxu0
    %1275 = vdwg.mxu0
    %v1276 = vsel %vm1203, %v893, 0
    %1278 = vmatprep.subr.mxu0 0.0
    %1279 = vmatpush1.msra.mxu0 0.0
    %1280 = vmatprep.subr.mxu0 0.0
    %1281 = vmatpush1.msra.mxu0 0.0
    %1282 = vmatprep.subr.mxu0 0.0
    %1283 = vmatpush1.msra.mxu0 0.0
    %1284 = vmatprep.subr.mxu0 0.0
    %1285 = vmatpush1.msra.mxu0 0.0
    %1286 = vmatprep.subr.mxu0 0.0
    %1287 = vmatpush1.msra.mxu0 0.0
    %1288 = vmatprep.subr.mxu0 0.0
    %1289 = vmatpush1.msra.mxu0 0.0
    %1290 = vmatprep.subr.mxu0 0.0
    %1291 = vmatpush1.msra.mxu0 0.0
    %1292 = vmatprep.subr.mxu0 0.0
    %1293 = vmatpush1.msra.mxu0 0.0
    %1294 = vmatprep.subr.mxu0 0.0
    %1295 = vmatpush1.msra.mxu0 0.0
    %1296 = vmatprep.subr.mxu0 0.0
    %1297 = vmatpush1.msra.mxu0 0.0
    %1298 = vmatprep.subr.mxu0 0.0
    %1299 = vmatpush1.msra.mxu0 0.0
    %1300 = vmatprep.subr.mxu0 0.0
    %1301 = vmatpush1.msra.mxu0 0.0
    %1302 = vmatprep.subr.mxu0 0.0
    %1303 = vmatpush1.msra.mxu0 0.0
    %1304 = vmatprep.subr.mxu0 0.0
    %1305 = vmatpush1.msra.mxu0 0.0
    %1306 = vmatprep.subr.mxu0 0.0
    %1307 = vmatpush1.msra.mxu0 %v1102
    %1308 = vmatprep.subr.mxu0 0.0
    %1309 = vmatpush1.msra.mxu0 %v1101
    %1310 = vmatprep.subr.mxu0 0.0
    %1311 = vmatpush2.msra.mxu0 0.0
    %1312 = vmatprep.subr.mxu0 0.0
    %1313 = vmatpush2.msra.mxu0 0.0
    %1314 = vmatprep.subr.mxu0 0.0
    %1315 = vmatpush2.msra.mxu0 0.0
    %1316 = vmatprep.subr.mxu0 0.0
    %1317 = vmatpush2.msra.mxu0 0.0
    %1318 = vmatprep.subr.mxu0 0.0
    %1319 = vmatpush2.msra.mxu0 0.0
    %1320 = vmatprep.subr.mxu0 0.0
    %1321 = vmatpush2.msra.mxu0 0.0
    %1322 = vmatprep.subr.mxu0 0.0
    %1323 = vmatpush2.msra.mxu0 0.0
    %1324 = vmatprep.subr.mxu0 0.0
    %1325 = vmatpush2.msra.mxu0 0.0
    %1326 = vmatprep.subr.mxu0 0.0
    %1327 = vmatpush2.msra.mxu0 0.0
    %1328 = vmatprep.subr.mxu0 0.0
    %1329 = vmatpush2.msra.mxu0 0.0
    %1330 = vmatprep.subr.mxu0 0.0
    %1331 = vmatpush2.msra.mxu0 0.0
    %1332 = vmatprep.subr.mxu0 0.0
    %1333 = vmatpush2.msra.mxu0 0.0
    %1334 = vmatprep.subr.mxu0 0.0
    %1335 = vmatpush2.msra.mxu0 0.0
    %1336 = vmatprep.subr.mxu0 0.0
    %1337 = vmatpush2.msra.mxu0 0.0
    %1338 = vmatprep.subr.mxu0 0.0
    %1339 = vmatpush2.msra.mxu0 0.0
    %1340 = vmatprep.subr.mxu0 0.0
    %1341 = vmatpush2.msra.mxu0 0.0
    %1342 = vmatprep.mubr.f32.mxu0 0.0
    %1343 = vmatmul.mubr.f32.gmra.mxu0 %v1276
    %v1344 = vpop.f32.mrf.mxu0
    %v1345 = vadd.f32 0.0, %v1344
    %v1346 = vpop.f32.mrf.mxu0
    %1347 = vdwg.mxu0
    %v1348 = vsel %vm1203, %v892, 0
    %1350 = vmatprep.subr.mxu0 0.0
    %1351 = vmatpush1.msra.mxu0 0.0
    %1352 = vmatprep.subr.mxu0 0.0
    %1353 = vmatpush1.msra.mxu0 0.0
    %1354 = vmatprep.subr.mxu0 0.0
    %1355 = vmatpush1.msra.mxu0 0.0
    %1356 = vmatprep.subr.mxu0 0.0
    %1357 = vmatpush1.msra.mxu0 0.0
    %1358 = vmatprep.subr.mxu0 0.0
    %1359 = vmatpush1.msra.mxu0 0.0
    %1360 = vmatprep.subr.mxu0 0.0
    %1361 = vmatpush1.msra.mxu0 0.0
    %1362 = vmatprep.subr.mxu0 0.0
    %1363 = vmatpush1.msra.mxu0 0.0
    %1364 = vmatprep.subr.mxu0 0.0
    %1365 = vmatpush1.msra.mxu0 0.0
    %1366 = vmatprep.subr.mxu0 0.0
    %1367 = vmatpush1.msra.mxu0 0.0
    %1368 = vmatprep.subr.mxu0 0.0
    %1369 = vmatpush1.msra.mxu0 0.0
    %1370 = vmatprep.subr.mxu0 0.0
    %1371 = vmatpush1.msra.mxu0 0.0
    %1372 = vmatprep.subr.mxu0 0.0
    %1373 = vmatpush1.msra.mxu0 0.0
    %1374 = vmatprep.subr.mxu0 0.0
    %1375 = vmatpush1.msra.mxu0 0.0
    %1376 = vmatprep.subr.mxu0 0.0
    %1377 = vmatpush1.msra.mxu0 0.0
    %1378 = vmatprep.subr.mxu0 0.0
    %1379 = vmatpush1.msra.mxu0 %v1104
    %1380 = vmatprep.subr.mxu0 0.0
    %1381 = vmatpush1.msra.mxu0 %v1103
    %1382 = vmatprep.subr.mxu0 0.0
    %1383 = vmatpush2.msra.mxu0 0.0
    %1384 = vmatprep.subr.mxu0 0.0
    %1385 = vmatpush2.msra.mxu0 0.0
    %1386 = vmatprep.subr.mxu0 0.0
    %1387 = vmatpush2.msra.mxu0 0.0
    %1388 = vmatprep.subr.mxu0 0.0
    %1389 = vmatpush2.msra.mxu0 0.0
    %1390 = vmatprep.subr.mxu0 0.0
    %1391 = vmatpush2.msra.mxu0 0.0
    %1392 = vmatprep.subr.mxu0 0.0
    %1393 = vmatpush2.msra.mxu0 0.0
    %1394 = vmatprep.subr.mxu0 0.0
    %1395 = vmatpush2.msra.mxu0 0.0
    %1396 = vmatprep.subr.mxu0 0.0
    %1397 = vmatpush2.msra.mxu0 0.0
    %1398 = vmatprep.subr.mxu0 0.0
    %1399 = vmatpush2.msra.mxu0 0.0
    %1400 = vmatprep.subr.mxu0 0.0
    %1401 = vmatpush2.msra.mxu0 0.0
    %1402 = vmatprep.subr.mxu0 0.0
    %1403 = vmatpush2.msra.mxu0 0.0
    %1404 = vmatprep.subr.mxu0 0.0
    %1405 = vmatpush2.msra.mxu0 0.0
    %1406 = vmatprep.subr.mxu0 0.0
    %1407 = vmatpush2.msra.mxu0 0.0
    %1408 = vmatprep.subr.mxu0 0.0
    %1409 = vmatpush2.msra.mxu0 0.0
    %1410 = vmatprep.subr.mxu0 0.0
    %1411 = vmatpush2.msra.mxu0 0.0
    %1412 = vmatprep.subr.mxu0 0.0
    %1413 = vmatpush2.msra.mxu0 0.0
    %1414 = vmatprep.mubr.f32.mxu0 0.0
    %1415 = vmatmul.mubr.f32.gmra.mxu0 %v1348
    %v1416 = vpop.f32.mrf.mxu0
    %v1417 = vadd.f32 0.0, %v1416
    %v1418 = vpop.f32.mrf.mxu0
    %1419 = vdwg.mxu0
    %v1420 = vsel %vm1203, %v894, 0
    %1422 = vmatprep.subr.mxu0 0.0
    %1423 = vmatpush1.msra.mxu0 0.0
    %1424 = vmatprep.subr.mxu0 0.0
    %1425 = vmatpush1.msra.mxu0 0.0
    %1426 = vmatprep.subr.mxu0 0.0
    %1427 = vmatpush1.msra.mxu0 0.0
    %1428 = vmatprep.subr.mxu0 0.0
    %1429 = vmatpush1.msra.mxu0 0.0
    %1430 = vmatprep.subr.mxu0 0.0
    %1431 = vmatpush1.msra.mxu0 0.0
    %1432 = vmatprep.subr.mxu0 0.0
    %1433 = vmatpush1.msra.mxu0 0.0
    %1434 = vmatprep.subr.mxu0 0.0
    %1435 = vmatpush1.msra.mxu0 0.0
    %1436 = vmatprep.subr.mxu0 0.0
    %1437 = vmatpush1.msra.mxu0 0.0
    %1438 = vmatprep.subr.mxu0 0.0
    %1439 = vmatpush1.msra.mxu0 0.0
    %1440 = vmatprep.subr.mxu0 0.0
    %1441 = vmatpush1.msra.mxu0 0.0
    %1442 = vmatprep.subr.mxu0 0.0
    %1443 = vmatpush1.msra.mxu0 0.0
    %1444 = vmatprep.subr.mxu0 0.0
    %1445 = vmatpush1.msra.mxu0 0.0
    %1446 = vmatprep.subr.mxu0 0.0
    %1447 = vmatpush1.msra.mxu0 0.0
    %1448 = vmatprep.subr.mxu0 0.0
    %1449 = vmatpush1.msra.mxu0 0.0
    %1450 = vmatprep.subr.mxu0 0.0
    %1451 = vmatpush1.msra.mxu0 %v1106
    %1452 = vmatprep.subr.mxu0 0.0
    %1453 = vmatpush1.msra.mxu0 %v1105
    %1454 = vmatprep.subr.mxu0 0.0
    %1455 = vmatpush2.msra.mxu0 0.0
    %1456 = vmatprep.subr.mxu0 0.0
    %1457 = vmatpush2.msra.mxu0 0.0
    %1458 = vmatprep.subr.mxu0 0.0
    %1459 = vmatpush2.msra.mxu0 0.0
    %1460 = vmatprep.subr.mxu0 0.0
    %1461 = vmatpush2.msra.mxu0 0.0
    %1462 = vmatprep.subr.mxu0 0.0
    %1463 = vmatpush2.msra.mxu0 0.0
    %1464 = vmatprep.subr.mxu0 0.0
    %1465 = vmatpush2.msra.mxu0 0.0
    %1466 = vmatprep.subr.mxu0 0.0
    %1467 = vmatpush2.msra.mxu0 0.0
    %1468 = vmatprep.subr.mxu0 0.0
    %1469 = vmatpush2.msra.mxu0 0.0
    %1470 = vmatprep.subr.mxu0 0.0
    %1471 = vmatpush2.msra.mxu0 0.0
    %1472 = vmatprep.subr.mxu0 0.0
    %1473 = vmatpush2.msra.mxu0 0.0
    %1474 = vmatprep.subr.mxu0 0.0
    %1475 = vmatpush2.msra.mxu0 0.0
    %1476 = vmatprep.subr.mxu0 0.0
    %1477 = vmatpush2.msra.mxu0 0.0
    %1478 = vmatprep.subr.mxu0 0.0
    %1479 = vmatpush2.msra.mxu0 0.0
    %1480 = vmatprep.subr.mxu0 0.0
    %1481 = vmatpush2.msra.mxu0 0.0
    %1482 = vmatprep.subr.mxu0 0.0
    %1483 = vmatpush2.msra.mxu0 0.0
    %1484 = vmatprep.subr.mxu0 0.0
    %1485 = vmatpush2.msra.mxu0 0.0
    %1486 = vmatprep.mubr.f32.mxu0 0.0
    %1487 = vmatmul.mubr.f32.gmra.mxu0 %v1420
    %v1488 = vpop.f32.mrf.mxu0
    %v1489 = vadd.f32 0.0, %v1488
    %v1490 = vpop.f32.mrf.mxu0
    %1491 = vdwg.mxu0
    %v1492 = vsel %vm1203, %v902, 0
    %1494 = vmatprep.subr.mxu0 0.0
    %1495 = vmatpush1.msra.mxu0 0.0
    %1496 = vmatprep.subr.mxu0 0.0
    %1497 = vmatpush1.msra.mxu0 0.0
    %1498 = vmatprep.subr.mxu0 0.0
    %1499 = vmatpush1.msra.mxu0 0.0
    %1500 = vmatprep.subr.mxu0 0.0
    %1501 = vmatpush1.msra.mxu0 0.0
    %1502 = vmatprep.subr.mxu0 0.0
    %1503 = vmatpush1.msra.mxu0 0.0
    %1504 = vmatprep.subr.mxu0 0.0
    %1505 = vmatpush1.msra.mxu0 0.0
    %1506 = vmatprep.subr.mxu0 0.0
    %1507 = vmatpush1.msra.mxu0 0.0
    %1508 = vmatprep.subr.mxu0 0.0
    %1509 = vmatpush1.msra.mxu0 0.0
    %1510 = vmatprep.subr.mxu0 0.0
    %1511 = vmatpush1.msra.mxu0 0.0
    %1512 = vmatprep.subr.mxu0 0.0
    %1513 = vmatpush1.msra.mxu0 0.0
    %1514 = vmatprep.subr.mxu0 0.0
    %1515 = vmatpush1.msra.mxu0 0.0
    %1516 = vmatprep.subr.mxu0 0.0
    %1517 = vmatpush1.msra.mxu0 0.0
    %1518 = vmatprep.subr.mxu0 0.0
    %1519 = vmatpush1.msra.mxu0 0.0
    %1520 = vmatprep.subr.mxu0 0.0
    %1521 = vmatpush1.msra.mxu0 0.0
    %1522 = vmatprep.subr.mxu0 0.0
    %1523 = vmatpush1.msra.mxu0 %v1108
    %1524 = vmatprep.subr.mxu0 0.0
    %1525 = vmatpush1.msra.mxu0 %v1107
    %1526 = vmatprep.subr.mxu0 0.0
    %1527 = vmatpush2.msra.mxu0 0.0
    %1528 = vmatprep.subr.mxu0 0.0
    %1529 = vmatpush2.msra.mxu0 0.0
    %1530 = vmatprep.subr.mxu0 0.0
    %1531 = vmatpush2.msra.mxu0 0.0
    %1532 = vmatprep.subr.mxu0 0.0
    %1533 = vmatpush2.msra.mxu0 0.0
    %1534 = vmatprep.subr.mxu0 0.0
    %1535 = vmatpush2.msra.mxu0 0.0
    %1536 = vmatprep.subr.mxu0 0.0
    %1537 = vmatpush2.msra.mxu0 0.0
    %1538 = vmatprep.subr.mxu0 0.0
    %1539 = vmatpush2.msra.mxu0 0.0
    %1540 = vmatprep.subr.mxu0 0.0
    %1541 = vmatpush2.msra.mxu0 0.0
    %1542 = vmatprep.subr.mxu0 0.0
    %1543 = vmatpush2.msra.mxu0 0.0
    %1544 = vmatprep.subr.mxu0 0.0
    %1545 = vmatpush2.msra.mxu0 0.0
    %1546 = vmatprep.subr.mxu0 0.0
    %1547 = vmatpush2.msra.mxu0 0.0
    %1548 = vmatprep.subr.mxu0 0.0
    %1549 = vmatpush2.msra.mxu0 0.0
    %1550 = vmatprep.subr.mxu0 0.0
    %1551 = vmatpush2.msra.mxu0 0.0
    %1552 = vmatprep.subr.mxu0 0.0
    %1553 = vmatpush2.msra.mxu0 0.0
    %1554 = vmatprep.subr.mxu0 0.0
    %1555 = vmatpush2.msra.mxu0 0.0
    %1556 = vmatprep.subr.mxu0 0.0
    %1557 = vmatpush2.msra.mxu0 0.0
    %1558 = vmatprep.mubr.f32.mxu0 0.0
    %1559 = vmatmul.mubr.f32.gmra.mxu0 %v1492
    %v1560 = vpop.f32.mrf.mxu0
    %v1561 = vadd.f32 0.0, %v1560
    %v1562 = vpop.f32.mrf.mxu0
    %1563 = vdwg.mxu0
    %v1564 = vsel %vm1203, %v910, 0
    %1566 = vmatprep.subr.mxu0 0.0
    %1567 = vmatpush1.msra.mxu0 0.0
    %1568 = vmatprep.subr.mxu0 0.0
    %1569 = vmatpush1.msra.mxu0 0.0
    %1570 = vmatprep.subr.mxu0 0.0
    %1571 = vmatpush1.msra.mxu0 0.0
    %1572 = vmatprep.subr.mxu0 0.0
    %1573 = vmatpush1.msra.mxu0 0.0
    %1574 = vmatprep.subr.mxu0 0.0
    %1575 = vmatpush1.msra.mxu0 0.0
    %1576 = vmatprep.subr.mxu0 0.0
    %1577 = vmatpush1.msra.mxu0 0.0
    %1578 = vmatprep.subr.mxu0 0.0
    %1579 = vmatpush1.msra.mxu0 0.0
    %1580 = vmatprep.subr.mxu0 0.0
    %1581 = vmatpush1.msra.mxu0 0.0
    %1582 = vmatprep.subr.mxu0 0.0
    %1583 = vmatpush1.msra.mxu0 0.0
    %1584 = vmatprep.subr.mxu0 0.0
    %1585 = vmatpush1.msra.mxu0 0.0
    %1586 = vmatprep.subr.mxu0 0.0
    %1587 = vmatpush1.msra.mxu0 0.0
    %1588 = vmatprep.subr.mxu0 0.0
    %1589 = vmatpush1.msra.mxu0 0.0
    %1590 = vmatprep.subr.mxu0 0.0
    %1591 = vmatpush1.msra.mxu0 0.0
    %1592 = vmatprep.subr.mxu0 0.0
    %1593 = vmatpush1.msra.mxu0 0.0
    %1594 = vmatprep.subr.mxu0 0.0
    %1595 = vmatpush1.msra.mxu0 %v1110
    %1596 = vmatprep.subr.mxu0 0.0
    %1597 = vmatpush1.msra.mxu0 %v1109
    %1598 = vmatprep.subr.mxu0 0.0
    %1599 = vmatpush2.msra.mxu0 0.0
    %1600 = vmatprep.subr.mxu0 0.0
    %1601 = vmatpush2.msra.mxu0 0.0
    %1602 = vmatprep.subr.mxu0 0.0
    %1603 = vmatpush2.msra.mxu0 0.0
    %1604 = vmatprep.subr.mxu0 0.0
    %1605 = vmatpush2.msra.mxu0 0.0
    %1606 = vmatprep.subr.mxu0 0.0
    %1607 = vmatpush2.msra.mxu0 0.0
    %1608 = vmatprep.subr.mxu0 0.0
    %1609 = vmatpush2.msra.mxu0 0.0
    %1610 = vmatprep.subr.mxu0 0.0
    %1611 = vmatpush2.msra.mxu0 0.0
    %1612 = vmatprep.subr.mxu0 0.0
    %1613 = vmatpush2.msra.mxu0 0.0
    %1614 = vmatprep.subr.mxu0 0.0
    %1615 = vmatpush2.msra.mxu0 0.0
    %1616 = vmatprep.subr.mxu0 0.0
    %1617 = vmatpush2.msra.mxu0 0.0
    %1618 = vmatprep.subr.mxu0 0.0
    %1619 = vmatpush2.msra.mxu0 0.0
    %1620 = vmatprep.subr.mxu0 0.0
    %1621 = vmatpush2.msra.mxu0 0.0
    %1622 = vmatprep.subr.mxu0 0.0
    %1623 = vmatpush2.msra.mxu0 0.0
    %1624 = vmatprep.subr.mxu0 0.0
    %1625 = vmatpush2.msra.mxu0 0.0
    %1626 = vmatprep.subr.mxu0 0.0
    %1627 = vmatpush2.msra.mxu0 0.0
    %1628 = vmatprep.subr.mxu0 0.0
    %1629 = vmatpush2.msra.mxu0 0.0
    %1630 = vmatprep.mubr.f32.mxu0 0.0
    %1631 = vmatmul.mubr.f32.gmra.mxu0 %v1564
    %v1632 = vpop.f32.mrf.mxu0
    %v1633 = vadd.f32 0.0, %v1632
    %v1634 = vpop.f32.mrf.mxu0
    %1635 = vdwg.mxu0
    %v1636 = vsel %vm1203, %v909, 0
    %1638 = vmatprep.subr.mxu0 0.0
    %1639 = vmatpush1.msra.mxu0 0.0
    %1640 = vmatprep.subr.mxu0 0.0
    %1641 = vmatpush1.msra.mxu0 0.0
    %1642 = vmatprep.subr.mxu0 0.0
    %1643 = vmatpush1.msra.mxu0 0.0
    %1644 = vmatprep.subr.mxu0 0.0
    %1645 = vmatpush1.msra.mxu0 0.0
    %1646 = vmatprep.subr.mxu0 0.0
    %1647 = vmatpush1.msra.mxu0 0.0
    %1648 = vmatprep.subr.mxu0 0.0
    %1649 = vmatpush1.msra.mxu0 0.0
    %1650 = vmatprep.subr.mxu0 0.0
    %1651 = vmatpush1.msra.mxu0 0.0
    %1652 = vmatprep.subr.mxu0 0.0
    %1653 = vmatpush1.msra.mxu0 0.0
    %1654 = vmatprep.subr.mxu0 0.0
    %1655 = vmatpush1.msra.mxu0 0.0
    %1656 = vmatprep.subr.mxu0 0.0
    %1657 = vmatpush1.msra.mxu0 0.0
    %1658 = vmatprep.subr.mxu0 0.0
    %1659 = vmatpush1.msra.mxu0 0.0
    %1660 = vmatprep.subr.mxu0 0.0
    %1661 = vmatpush1.msra.mxu0 0.0
    %1662 = vmatprep.subr.mxu0 0.0
    %1663 = vmatpush1.msra.mxu0 0.0
    %1664 = vmatprep.subr.mxu0 0.0
    %1665 = vmatpush1.msra.mxu0 0.0
    %1666 = vmatprep.subr.mxu0 0.0
    %1667 = vmatpush1.msra.mxu0 %v1112
    %1668 = vmatprep.subr.mxu0 0.0
    %1669 = vmatpush1.msra.mxu0 %v1111
    %1670 = vmatprep.subr.mxu0 0.0
    %1671 = vmatpush2.msra.mxu0 0.0
    %1672 = vmatprep.subr.mxu0 0.0
    %1673 = vmatpush2.msra.mxu0 0.0
    %1674 = vmatprep.subr.mxu0 0.0
    %1675 = vmatpush2.msra.mxu0 0.0
    %1676 = vmatprep.subr.mxu0 0.0
    %1677 = vmatpush2.msra.mxu0 0.0
    %1678 = vmatprep.subr.mxu0 0.0
    %1679 = vmatpush2.msra.mxu0 0.0
    %1680 = vmatprep.subr.mxu0 0.0
    %1681 = vmatpush2.msra.mxu0 0.0
    %1682 = vmatprep.subr.mxu0 0.0
    %1683 = vmatpush2.msra.mxu0 0.0
    %1684 = vmatprep.subr.mxu0 0.0
    %1685 = vmatpush2.msra.mxu0 0.0
    %1686 = vmatprep.subr.mxu0 0.0
    %1687 = vmatpush2.msra.mxu0 0.0
    %1688 = vmatprep.subr.mxu0 0.0
    %1689 = vmatpush2.msra.mxu0 0.0
    %1690 = vmatprep.subr.mxu0 0.0
    %1691 = vmatpush2.msra.mxu0 0.0
    %1692 = vmatprep.subr.mxu0 0.0
    %1693 = vmatpush2.msra.mxu0 0.0
    %1694 = vmatprep.subr.mxu0 0.0
    %1695 = vmatpush2.msra.mxu0 0.0
    %1696 = vmatprep.subr.mxu0 0.0
    %1697 = vmatpush2.msra.mxu0 0.0
    %1698 = vmatprep.subr.mxu0 0.0
    %1699 = vmatpush2.msra.mxu0 0.0
    %1700 = vmatprep.subr.mxu0 0.0
    %1701 = vmatpush2.msra.mxu0 0.0
    %1702 = vmatprep.mubr.f32.mxu0 0.0
    %1703 = vmatmul.mubr.f32.gmra.mxu0 %v1636
    %v1704 = vpop.f32.mrf.mxu0
    %v1705 = vadd.f32 0.0, %v1704
    %v1706 = vpop.f32.mrf.mxu0
    %1707 = vdwg.mxu0
    %v1708 = vsel %vm1203, %v911, 0
    %1710 = vmatprep.subr.mxu0 0.0
    %1711 = vmatpush1.msra.mxu0 0.0
    %1712 = vmatprep.subr.mxu0 0.0
    %1713 = vmatpush1.msra.mxu0 0.0
    %1714 = vmatprep.subr.mxu0 0.0
    %1715 = vmatpush1.msra.mxu0 0.0
    %1716 = vmatprep.subr.mxu0 0.0
    %1717 = vmatpush1.msra.mxu0 0.0
    %1718 = vmatprep.subr.mxu0 0.0
    %1719 = vmatpush1.msra.mxu0 0.0
    %1720 = vmatprep.subr.mxu0 0.0
    %1721 = vmatpush1.msra.mxu0 0.0
    %1722 = vmatprep.subr.mxu0 0.0
    %1723 = vmatpush1.msra.mxu0 0.0
    %1724 = vmatprep.subr.mxu0 0.0
    %1725 = vmatpush1.msra.mxu0 0.0
    %1726 = vmatprep.subr.mxu0 0.0
    %1727 = vmatpush1.msra.mxu0 0.0
    %1728 = vmatprep.subr.mxu0 0.0
    %1729 = vmatpush1.msra.mxu0 0.0
    %1730 = vmatprep.subr.mxu0 0.0
    %1731 = vmatpush1.msra.mxu0 0.0
    %1732 = vmatprep.subr.mxu0 0.0
    %1733 = vmatpush1.msra.mxu0 0.0
    %1734 = vmatprep.subr.mxu0 0.0
    %1735 = vmatpush1.msra.mxu0 0.0
    %1736 = vmatprep.subr.mxu0 0.0
    %1737 = vmatpush1.msra.mxu0 0.0
    %1738 = vmatprep.subr.mxu0 0.0
    %1739 = vmatpush1.msra.mxu0 %v1114
    %1740 = vmatprep.subr.mxu0 0.0
    %1741 = vmatpush1.msra.mxu0 %v1113
    %1742 = vmatprep.subr.mxu0 0.0
    %1743 = vmatpush2.msra.mxu0 0.0
    %1744 = vmatprep.subr.mxu0 0.0
    %1745 = vmatpush2.msra.mxu0 0.0
    %1746 = vmatprep.subr.mxu0 0.0
    %1747 = vmatpush2.msra.mxu0 0.0
    %1748 = vmatprep.subr.mxu0 0.0
    %1749 = vmatpush2.msra.mxu0 0.0
    %1750 = vmatprep.subr.mxu0 0.0
    %1751 = vmatpush2.msra.mxu0 0.0
    %1752 = vmatprep.subr.mxu0 0.0
    %1753 = vmatpush2.msra.mxu0 0.0
    %1754 = vmatprep.subr.mxu0 0.0
    %1755 = vmatpush2.msra.mxu0 0.0
    %1756 = vmatprep.subr.mxu0 0.0
    %1757 = vmatpush2.msra.mxu0 0.0
    %1758 = vmatprep.subr.mxu0 0.0
    %1759 = vmatpush2.msra.mxu0 0.0
    %1760 = vmatprep.subr.mxu0 0.0
    %1761 = vmatpush2.msra.mxu0 0.0
    %1762 = vmatprep.subr.mxu0 0.0
    %1763 = vmatpush2.msra.mxu0 0.0
    %1764 = vmatprep.subr.mxu0 0.0
    %1765 = vmatpush2.msra.mxu0 0.0
    %1766 = vmatprep.subr.mxu0 0.0
    %1767 = vmatpush2.msra.mxu0 0.0
    %1768 = vmatprep.subr.mxu0 0.0
    %1769 = vmatpush2.msra.mxu0 0.0
    %1770 = vmatprep.subr.mxu0 0.0
    %1771 = vmatpush2.msra.mxu0 0.0
    %1772 = vmatprep.subr.mxu0 0.0
    %1773 = vmatpush2.msra.mxu0 0.0
    %1774 = vmatprep.mubr.f32.mxu0 0.0
    %1775 = vmatmul.mubr.f32.gmra.mxu0 %v1708
    %v1776 = vpop.f32.mrf.mxu0
    %v1777 = vadd.f32 0.0, %v1776
    %v1778 = vpop.f32.mrf.mxu0
    %1779 = vdwg.mxu0
    %v1780 = vsel %vm1203, %v919, 0
    %1782 = vmatprep.subr.mxu0 0.0
    %1783 = vmatpush1.msra.mxu0 0.0
    %1784 = vmatprep.subr.mxu0 0.0
    %1785 = vmatpush1.msra.mxu0 0.0
    %1786 = vmatprep.subr.mxu0 0.0
    %1787 = vmatpush1.msra.mxu0 0.0
    %1788 = vmatprep.subr.mxu0 0.0
    %1789 = vmatpush1.msra.mxu0 0.0
    %1790 = vmatprep.subr.mxu0 0.0
    %1791 = vmatpush1.msra.mxu0 0.0
    %1792 = vmatprep.subr.mxu0 0.0
    %1793 = vmatpush1.msra.mxu0 0.0
    %1794 = vmatprep.subr.mxu0 0.0
    %1795 = vmatpush1.msra.mxu0 0.0
    %1796 = vmatprep.subr.mxu0 0.0
    %1797 = vmatpush1.msra.mxu0 0.0
    %1798 = vmatprep.subr.mxu0 0.0
    %1799 = vmatpush1.msra.mxu0 0.0
    %1800 = vmatprep.subr.mxu0 0.0
    %1801 = vmatpush1.msra.mxu0 0.0
    %1802 = vmatprep.subr.mxu0 0.0
    %1803 = vmatpush1.msra.mxu0 0.0
    %1804 = vmatprep.subr.mxu0 0.0
    %1805 = vmatpush1.msra.mxu0 0.0
    %1806 = vmatprep.subr.mxu0 0.0
    %1807 = vmatpush1.msra.mxu0 0.0
    %1808 = vmatprep.subr.mxu0 0.0
    %1809 = vmatpush1.msra.mxu0 0.0
    %1810 = vmatprep.subr.mxu0 0.0
    %1811 = vmatpush1.msra.mxu0 %v1116
    %1812 = vmatprep.subr.mxu0 0.0
    %1813 = vmatpush1.msra.mxu0 %v1115
    %1814 = vmatprep.subr.mxu0 0.0
    %1815 = vmatpush2.msra.mxu0 0.0
    %1816 = vmatprep.subr.mxu0 0.0
    %1817 = vmatpush2.msra.mxu0 0.0
    %1818 = vmatprep.subr.mxu0 0.0
    %1819 = vmatpush2.msra.mxu0 0.0
    %1820 = vmatprep.subr.mxu0 0.0
    %1821 = vmatpush2.msra.mxu0 0.0
    %1822 = vmatprep.subr.mxu0 0.0
    %1823 = vmatpush2.msra.mxu0 0.0
    %1824 = vmatprep.subr.mxu0 0.0
    %1825 = vmatpush2.msra.mxu0 0.0
    %1826 = vmatprep.subr.mxu0 0.0
    %1827 = vmatpush2.msra.mxu0 0.0
    %1828 = vmatprep.subr.mxu0 0.0
    %1829 = vmatpush2.msra.mxu0 0.0
    %1830 = vmatprep.subr.mxu0 0.0
    %1831 = vmatpush2.msra.mxu0 0.0
    %1832 = vmatprep.subr.mxu0 0.0
    %1833 = vmatpush2.msra.mxu0 0.0
    %1834 = vmatprep.subr.mxu0 0.0
    %1835 = vmatpush2.msra.mxu0 0.0
    %1836 = vmatprep.subr.mxu0 0.0
    %1837 = vmatpush2.msra.mxu0 0.0
    %1838 = vmatprep.subr.mxu0 0.0
    %1839 = vmatpush2.msra.mxu0 0.0
    %1840 = vmatprep.subr.mxu0 0.0
    %1841 = vmatpush2.msra.mxu0 0.0
    %1842 = vmatprep.subr.mxu0 0.0
    %1843 = vmatpush2.msra.mxu0 0.0
    %1844 = vmatprep.subr.mxu0 0.0
    %1845 = vmatpush2.msra.mxu0 0.0
    %1846 = vmatprep.mubr.f32.mxu0 0.0
    %1847 = vmatmul.mubr.f32.gmra.mxu0 %v1780
    %v1848 = vpop.f32.mrf.mxu0
    %v1849 = vadd.f32 0.0, %v1848
    %v1850 = vpop.f32.mrf.mxu0
    %1851 = vdwg.mxu0
    %v1852 = vsel %vm1203, %v927, 0
    %1854 = vmatprep.subr.mxu0 0.0
    %1855 = vmatpush1.msra.mxu0 0.0
    %1856 = vmatprep.subr.mxu0 0.0
    %1857 = vmatpush1.msra.mxu0 0.0
    %1858 = vmatprep.subr.mxu0 0.0
    %1859 = vmatpush1.msra.mxu0 0.0
    %1860 = vmatprep.subr.mxu0 0.0
    %1861 = vmatpush1.msra.mxu0 0.0
    %1862 = vmatprep.subr.mxu0 0.0
    %1863 = vmatpush1.msra.mxu0 0.0
    %1864 = vmatprep.subr.mxu0 0.0
    %1865 = vmatpush1.msra.mxu0 0.0
    %1866 = vmatprep.subr.mxu0 0.0
    %1867 = vmatpush1.msra.mxu0 0.0
    %1868 = vmatprep.subr.mxu0 0.0
    %1869 = vmatpush1.msra.mxu0 0.0
    %1870 = vmatprep.subr.mxu0 0.0
    %1871 = vmatpush1.msra.mxu0 0.0
    %1872 = vmatprep.subr.mxu0 0.0
    %1873 = vmatpush1.msra.mxu0 0.0
    %1874 = vmatprep.subr.mxu0 0.0
    %1875 = vmatpush1.msra.mxu0 0.0
    %1876 = vmatprep.subr.mxu0 0.0
    %1877 = vmatpush1.msra.mxu0 0.0
    %1878 = vmatprep.subr.mxu0 0.0
    %1879 = vmatpush1.msra.mxu0 0.0
    %1880 = vmatprep.subr.mxu0 0.0
    %1881 = vmatpush1.msra.mxu0 0.0
    %1882 = vmatprep.subr.mxu0 0.0
    %1883 = vmatpush1.msra.mxu0 %v1118
    %1884 = vmatprep.subr.mxu0 0.0
    %1885 = vmatpush1.msra.mxu0 %v1117
    %1886 = vmatprep.subr.mxu0 0.0
    %1887 = vmatpush2.msra.mxu0 0.0
    %1888 = vmatprep.subr.mxu0 0.0
    %1889 = vmatpush2.msra.mxu0 0.0
    %1890 = vmatprep.subr.mxu0 0.0
    %1891 = vmatpush2.msra.mxu0 0.0
    %1892 = vmatprep.subr.mxu0 0.0
    %1893 = vmatpush2.msra.mxu0 0.0
    %1894 = vmatprep.subr.mxu0 0.0
    %1895 = vmatpush2.msra.mxu0 0.0
    %1896 = vmatprep.subr.mxu0 0.0
    %1897 = vmatpush2.msra.mxu0 0.0
    %1898 = vmatprep.subr.mxu0 0.0
    %1899 = vmatpush2.msra.mxu0 0.0
    %1900 = vmatprep.subr.mxu0 0.0
    %1901 = vmatpush2.msra.mxu0 0.0
    %1902 = vmatprep.subr.mxu0 0.0
    %1903 = vmatpush2.msra.mxu0 0.0
    %1904 = vmatprep.subr.mxu0 0.0
    %1905 = vmatpush2.msra.mxu0 0.0
    %1906 = vmatprep.subr.mxu0 0.0
    %1907 = vmatpush2.msra.mxu0 0.0
    %1908 = vmatprep.subr.mxu0 0.0
    %1909 = vmatpush2.msra.mxu0 0.0
    %1910 = vmatprep.subr.mxu0 0.0
    %1911 = vmatpush2.msra.mxu0 0.0
    %1912 = vmatprep.subr.mxu0 0.0
    %1913 = vmatpush2.msra.mxu0 0.0
    %1914 = vmatprep.subr.mxu0 0.0
    %1915 = vmatpush2.msra.mxu0 0.0
    %1916 = vmatprep.subr.mxu0 0.0
    %1917 = vmatpush2.msra.mxu0 0.0
    %1918 = vmatprep.mubr.f32.mxu0 0.0
    %1919 = vmatmul.mubr.f32.gmra.mxu0 %v1852
    %v1920 = vpop.f32.mrf.mxu0
    %v1921 = vadd.f32 0.0, %v1920
    %v1922 = vpop.f32.mrf.mxu0
    %1923 = vdwg.mxu0
    %v1924 = vsel %vm1203, %v926, 0
    %1926 = vmatprep.subr.mxu0 0.0
    %1927 = vmatpush1.msra.mxu0 0.0
    %1928 = vmatprep.subr.mxu0 0.0
    %1929 = vmatpush1.msra.mxu0 0.0
    %1930 = vmatprep.subr.mxu0 0.0
    %1931 = vmatpush1.msra.mxu0 0.0
    %1932 = vmatprep.subr.mxu0 0.0
    %1933 = vmatpush1.msra.mxu0 0.0
    %1934 = vmatprep.subr.mxu0 0.0
    %1935 = vmatpush1.msra.mxu0 0.0
    %1936 = vmatprep.subr.mxu0 0.0
    %1937 = vmatpush1.msra.mxu0 0.0
    %1938 = vmatprep.subr.mxu0 0.0
    %1939 = vmatpush1.msra.mxu0 0.0
    %1940 = vmatprep.subr.mxu0 0.0
    %1941 = vmatpush1.msra.mxu0 0.0
    %1942 = vmatprep.subr.mxu0 0.0
    %1943 = vmatpush1.msra.mxu0 0.0
    %1944 = vmatprep.subr.mxu0 0.0
    %1945 = vmatpush1.msra.mxu0 0.0
    %1946 = vmatprep.subr.mxu0 0.0
    %1947 = vmatpush1.msra.mxu0 0.0
    %1948 = vmatprep.subr.mxu0 0.0
    %1949 = vmatpush1.msra.mxu0 0.0
    %1950 = vmatprep.subr.mxu0 0.0
    %1951 = vmatpush1.msra.mxu0 0.0
    %1952 = vmatprep.subr.mxu0 0.0
    %1953 = vmatpush1.msra.mxu0 0.0
    %1954 = vmatprep.subr.mxu0 0.0
    %1955 = vmatpush1.msra.mxu0 %v1120
    %1956 = vmatprep.subr.mxu0 0.0
    %1957 = vmatpush1.msra.mxu0 %v1119
    %1958 = vmatprep.subr.mxu0 0.0
    %1959 = vmatpush2.msra.mxu0 0.0
    %1960 = vmatprep.subr.mxu0 0.0
    %1961 = vmatpush2.msra.mxu0 0.0
    %1962 = vmatprep.subr.mxu0 0.0
    %1963 = vmatpush2.msra.mxu0 0.0
    %1964 = vmatprep.subr.mxu0 0.0
    %1965 = vmatpush2.msra.mxu0 0.0
    %1966 = vmatprep.subr.mxu0 0.0
    %1967 = vmatpush2.msra.mxu0 0.0
    %1968 = vmatprep.subr.mxu0 0.0
    %1969 = vmatpush2.msra.mxu0 0.0
    %1970 = vmatprep.subr.mxu0 0.0
    %1971 = vmatpush2.msra.mxu0 0.0
    %1972 = vmatprep.subr.mxu0 0.0
    %1973 = vmatpush2.msra.mxu0 0.0
    %1974 = vmatprep.subr.mxu0 0.0
    %1975 = vmatpush2.msra.mxu0 0.0
    %1976 = vmatprep.subr.mxu0 0.0
    %1977 = vmatpush2.msra.mxu0 0.0
    %1978 = vmatprep.subr.mxu0 0.0
    %1979 = vmatpush2.msra.mxu0 0.0
    %1980 = vmatprep.subr.mxu0 0.0
    %1981 = vmatpush2.msra.mxu0 0.0
    %1982 = vmatprep.subr.mxu0 0.0
    %1983 = vmatpush2.msra.mxu0 0.0
    %1984 = vmatprep.subr.mxu0 0.0
    %1985 = vmatpush2.msra.mxu0 0.0
    %1986 = vmatprep.subr.mxu0 0.0
    %1987 = vmatpush2.msra.mxu0 0.0
    %1988 = vmatprep.subr.mxu0 0.0
    %1989 = vmatpush2.msra.mxu0 0.0
    %1990 = vmatprep.mubr.f32.mxu0 0.0
    %1991 = vmatmul.mubr.f32.gmra.mxu0 %v1924
    %v1992 = vpop.f32.mrf.mxu0
    %v1993 = vadd.f32 0.0, %v1992
    %v1994 = vpop.f32.mrf.mxu0
    %1995 = vdwg.mxu0
    %v1996 = vsel %vm1203, %v928, 0
    %1998 = vmatprep.subr.mxu0 0.0
    %1999 = vmatpush1.msra.mxu0 0.0
    %2000 = vmatprep.subr.mxu0 0.0
    %2001 = vmatpush1.msra.mxu0 0.0
    %2002 = vmatprep.subr.mxu0 0.0
    %2003 = vmatpush1.msra.mxu0 0.0
    %2004 = vmatprep.subr.mxu0 0.0
    %2005 = vmatpush1.msra.mxu0 0.0
    %2006 = vmatprep.subr.mxu0 0.0
    %2007 = vmatpush1.msra.mxu0 0.0
    %2008 = vmatprep.subr.mxu0 0.0
    %2009 = vmatpush1.msra.mxu0 0.0
    %2010 = vmatprep.subr.mxu0 0.0
    %2011 = vmatpush1.msra.mxu0 0.0
    %2012 = vmatprep.subr.mxu0 0.0
    %2013 = vmatpush1.msra.mxu0 0.0
    %2014 = vmatprep.subr.mxu0 0.0
    %2015 = vmatpush1.msra.mxu0 0.0
    %2016 = vmatprep.subr.mxu0 0.0
    %2017 = vmatpush1.msra.mxu0 0.0
    %2018 = vmatprep.subr.mxu0 0.0
    %2019 = vmatpush1.msra.mxu0 0.0
    %2020 = vmatprep.subr.mxu0 0.0
    %2021 = vmatpush1.msra.mxu0 0.0
    %2022 = vmatprep.subr.mxu0 0.0
    %2023 = vmatpush1.msra.mxu0 0.0
    %2024 = vmatprep.subr.mxu0 0.0
    %2025 = vmatpush1.msra.mxu0 0.0
    %2026 = vmatprep.subr.mxu0 0.0
    %2027 = vmatpush1.msra.mxu0 %v1122
    %2028 = vmatprep.subr.mxu0 0.0
    %2029 = vmatpush1.msra.mxu0 %v1121
    %2030 = vmatprep.subr.mxu0 0.0
    %2031 = vmatpush2.msra.mxu0 0.0
    %2032 = vmatprep.subr.mxu0 0.0
    %2033 = vmatpush2.msra.mxu0 0.0
    %2034 = vmatprep.subr.mxu0 0.0
    %2035 = vmatpush2.msra.mxu0 0.0
    %2036 = vmatprep.subr.mxu0 0.0
    %2037 = vmatpush2.msra.mxu0 0.0
    %2038 = vmatprep.subr.mxu0 0.0
    %2039 = vmatpush2.msra.mxu0 0.0
    %2040 = vmatprep.subr.mxu0 0.0
    %2041 = vmatpush2.msra.mxu0 0.0
    %2042 = vmatprep.subr.mxu0 0.0
    %2043 = vmatpush2.msra.mxu0 0.0
    %2044 = vmatprep.subr.mxu0 0.0
    %2045 = vmatpush2.msra.mxu0 0.0
    %2046 = vmatprep.subr.mxu0 0.0
    %2047 = vmatpush2.msra.mxu0 0.0
    %2048 = vmatprep.subr.mxu0 0.0
    %2049 = vmatpush2.msra.mxu0 0.0
    %2050 = vmatprep.subr.mxu0 0.0
    %2051 = vmatpush2.msra.mxu0 0.0
    %2052 = vmatprep.subr.mxu0 0.0
    %2053 = vmatpush2.msra.mxu0 0.0
    %2054 = vmatprep.subr.mxu0 0.0
    %2055 = vmatpush2.msra.mxu0 0.0
    %2056 = vmatprep.subr.mxu0 0.0
    %2057 = vmatpush2.msra.mxu0 0.0
    %2058 = vmatprep.subr.mxu0 0.0
    %2059 = vmatpush2.msra.mxu0 0.0
    %2060 = vmatprep.subr.mxu0 0.0
    %2061 = vmatpush2.msra.mxu0 0.0
    %2062 = vmatprep.mubr.f32.mxu0 0.0
    %2063 = vmatmul.mubr.f32.gmra.mxu0 %v1996
    %v2064 = vpop.f32.mrf.mxu0
    %v2065 = vadd.f32 0.0, %v2064
    %v2066 = vpop.f32.mrf.mxu0
    %2067 = vdwg.mxu0
    %v2068 = vsel %vm1203, %v936, 0
    %2070 = vmatprep.subr.mxu0 0.0
    %2071 = vmatpush1.msra.mxu0 0.0
    %2072 = vmatprep.subr.mxu0 0.0
    %2073 = vmatpush1.msra.mxu0 0.0
    %2074 = vmatprep.subr.mxu0 0.0
    %2075 = vmatpush1.msra.mxu0 0.0
    %2076 = vmatprep.subr.mxu0 0.0
    %2077 = vmatpush1.msra.mxu0 0.0
    %2078 = vmatprep.subr.mxu0 0.0
    %2079 = vmatpush1.msra.mxu0 0.0
    %2080 = vmatprep.subr.mxu0 0.0
    %2081 = vmatpush1.msra.mxu0 0.0
    %2082 = vmatprep.subr.mxu0 0.0
    %2083 = vmatpush1.msra.mxu0 0.0
    %2084 = vmatprep.subr.mxu0 0.0
    %2085 = vmatpush1.msra.mxu0 0.0
    %2086 = vmatprep.subr.mxu0 0.0
    %2087 = vmatpush1.msra.mxu0 0.0
    %2088 = vmatprep.subr.mxu0 0.0
    %2089 = vmatpush1.msra.mxu0 0.0
    %2090 = vmatprep.subr.mxu0 0.0
    %2091 = vmatpush1.msra.mxu0 0.0
    %2092 = vmatprep.subr.mxu0 0.0
    %2093 = vmatpush1.msra.mxu0 0.0
    %2094 = vmatprep.subr.mxu0 0.0
    %2095 = vmatpush1.msra.mxu0 0.0
    %2096 = vmatprep.subr.mxu0 0.0
    %2097 = vmatpush1.msra.mxu0 0.0
    %2098 = vmatprep.subr.mxu0 0.0
    %2099 = vmatpush1.msra.mxu0 %v1124
    %2100 = vmatprep.subr.mxu0 0.0
    %2101 = vmatpush1.msra.mxu0 %v1123
    %2102 = vmatprep.subr.mxu0 0.0
    %2103 = vmatpush2.msra.mxu0 0.0
    %2104 = vmatprep.subr.mxu0 0.0
    %2105 = vmatpush2.msra.mxu0 0.0
    %2106 = vmatprep.subr.mxu0 0.0
    %2107 = vmatpush2.msra.mxu0 0.0
    %2108 = vmatprep.subr.mxu0 0.0
    %2109 = vmatpush2.msra.mxu0 0.0
    %2110 = vmatprep.subr.mxu0 0.0
    %2111 = vmatpush2.msra.mxu0 0.0
    %2112 = vmatprep.subr.mxu0 0.0
    %2113 = vmatpush2.msra.mxu0 0.0
    %2114 = vmatprep.subr.mxu0 0.0
    %2115 = vmatpush2.msra.mxu0 0.0
    %2116 = vmatprep.subr.mxu0 0.0
    %2117 = vmatpush2.msra.mxu0 0.0
    %2118 = vmatprep.subr.mxu0 0.0
    %2119 = vmatpush2.msra.mxu0 0.0
    %2120 = vmatprep.subr.mxu0 0.0
    %2121 = vmatpush2.msra.mxu0 0.0
    %2122 = vmatprep.subr.mxu0 0.0
    %2123 = vmatpush2.msra.mxu0 0.0
    %2124 = vmatprep.subr.mxu0 0.0
    %2125 = vmatpush2.msra.mxu0 0.0
    %2126 = vmatprep.subr.mxu0 0.0
    %2127 = vmatpush2.msra.mxu0 0.0
    %2128 = vmatprep.subr.mxu0 0.0
    %2129 = vmatpush2.msra.mxu0 0.0
    %2130 = vmatprep.subr.mxu0 0.0
    %2131 = vmatpush2.msra.mxu0 0.0
    %2132 = vmatprep.subr.mxu0 0.0
    %2133 = vmatpush2.msra.mxu0 0.0
    %2134 = vmatprep.mubr.f32.mxu0 0.0
    %2135 = vmatmul.mubr.f32.gmra.mxu0 %v2068
    %v2136 = vpop.f32.mrf.mxu0
    %v2137 = vadd.f32 0.0, %v2136
    %v2138 = vpop.f32.mrf.mxu0
    %2139 = vdwg.mxu0
    %v2140 = vsel %vm1203, %v944, 0
    %2142 = vmatprep.subr.mxu0 0.0
    %2143 = vmatpush1.msra.mxu0 0.0
    %2144 = vmatprep.subr.mxu0 0.0
    %2145 = vmatpush1.msra.mxu0 0.0
    %2146 = vmatprep.subr.mxu0 0.0
    %2147 = vmatpush1.msra.mxu0 0.0
    %2148 = vmatprep.subr.mxu0 0.0
    %2149 = vmatpush1.msra.mxu0 0.0
    %2150 = vmatprep.subr.mxu0 0.0
    %2151 = vmatpush1.msra.mxu0 0.0
    %2152 = vmatprep.subr.mxu0 0.0
    %2153 = vmatpush1.msra.mxu0 0.0
    %2154 = vmatprep.subr.mxu0 0.0
    %2155 = vmatpush1.msra.mxu0 0.0
    %2156 = vmatprep.subr.mxu0 0.0
    %2157 = vmatpush1.msra.mxu0 0.0
    %2158 = vmatprep.subr.mxu0 0.0
    %2159 = vmatpush1.msra.mxu0 0.0
    %2160 = vmatprep.subr.mxu0 0.0
    %2161 = vmatpush1.msra.mxu0 0.0
    %2162 = vmatprep.subr.mxu0 0.0
    %2163 = vmatpush1.msra.mxu0 0.0
    %2164 = vmatprep.subr.mxu0 0.0
    %2165 = vmatpush1.msra.mxu0 0.0
    %2166 = vmatprep.subr.mxu0 0.0
    %2167 = vmatpush1.msra.mxu0 0.0
    %2168 = vmatprep.subr.mxu0 0.0
    %2169 = vmatpush1.msra.mxu0 0.0
    %2170 = vmatprep.subr.mxu0 0.0
    %2171 = vmatpush1.msra.mxu0 %v1126
    %2172 = vmatprep.subr.mxu0 0.0
    %2173 = vmatpush1.msra.mxu0 %v1125
    %2174 = vmatprep.subr.mxu0 0.0
    %2175 = vmatpush2.msra.mxu0 0.0
    %2176 = vmatprep.subr.mxu0 0.0
    %2177 = vmatpush2.msra.mxu0 0.0
    %2178 = vmatprep.subr.mxu0 0.0
    %2179 = vmatpush2.msra.mxu0 0.0
    %2180 = vmatprep.subr.mxu0 0.0
    %2181 = vmatpush2.msra.mxu0 0.0
    %2182 = vmatprep.subr.mxu0 0.0
    %2183 = vmatpush2.msra.mxu0 0.0
    %2184 = vmatprep.subr.mxu0 0.0
    %2185 = vmatpush2.msra.mxu0 0.0
    %2186 = vmatprep.subr.mxu0 0.0
    %2187 = vmatpush2.msra.mxu0 0.0
    %2188 = vmatprep.subr.mxu0 0.0
    %2189 = vmatpush2.msra.mxu0 0.0
    %2190 = vmatprep.subr.mxu0 0.0
    %2191 = vmatpush2.msra.mxu0 0.0
    %2192 = vmatprep.subr.mxu0 0.0
    %2193 = vmatpush2.msra.mxu0 0.0
    %2194 = vmatprep.subr.mxu0 0.0
    %2195 = vmatpush2.msra.mxu0 0.0
    %2196 = vmatprep.subr.mxu0 0.0
    %2197 = vmatpush2.msra.mxu0 0.0
    %2198 = vmatprep.subr.mxu0 0.0
    %2199 = vmatpush2.msra.mxu0 0.0
    %2200 = vmatprep.subr.mxu0 0.0
    %2201 = vmatpush2.msra.mxu0 0.0
    %2202 = vmatprep.subr.mxu0 0.0
    %2203 = vmatpush2.msra.mxu0 0.0
    %2204 = vmatprep.subr.mxu0 0.0
    %2205 = vmatpush2.msra.mxu0 0.0
    %2206 = vmatprep.mubr.f32.mxu0 0.0
    %2207 = vmatmul.mubr.f32.gmra.mxu0 %v2140
    %v2208 = vpop.f32.mrf.mxu0
    %v2209 = vadd.f32 0.0, %v2208
    %v2210 = vpop.f32.mrf.mxu0
    %2211 = vdwg.mxu0
    %v2212 = vsel %vm1203, %v943, 0
    %2214 = vmatprep.subr.mxu0 0.0
    %2215 = vmatpush1.msra.mxu0 0.0
    %2216 = vmatprep.subr.mxu0 0.0
    %2217 = vmatpush1.msra.mxu0 0.0
    %2218 = vmatprep.subr.mxu0 0.0
    %2219 = vmatpush1.msra.mxu0 0.0
    %2220 = vmatprep.subr.mxu0 0.0
    %2221 = vmatpush1.msra.mxu0 0.0
    %2222 = vmatprep.subr.mxu0 0.0
    %2223 = vmatpush1.msra.mxu0 0.0
    %2224 = vmatprep.subr.mxu0 0.0
    %2225 = vmatpush1.msra.mxu0 0.0
    %2226 = vmatprep.subr.mxu0 0.0
    %2227 = vmatpush1.msra.mxu0 0.0
    %2228 = vmatprep.subr.mxu0 0.0
    %2229 = vmatpush1.msra.mxu0 0.0
    %2230 = vmatprep.subr.mxu0 0.0
    %2231 = vmatpush1.msra.mxu0 0.0
    %2232 = vmatprep.subr.mxu0 0.0
    %2233 = vmatpush1.msra.mxu0 0.0
    %2234 = vmatprep.subr.mxu0 0.0
    %2235 = vmatpush1.msra.mxu0 0.0
    %2236 = vmatprep.subr.mxu0 0.0
    %2237 = vmatpush1.msra.mxu0 0.0
    %2238 = vmatprep.subr.mxu0 0.0
    %2239 = vmatpush1.msra.mxu0 0.0
    %2240 = vmatprep.subr.mxu0 0.0
    %2241 = vmatpush1.msra.mxu0 0.0
    %2242 = vmatprep.subr.mxu0 0.0
    %2243 = vmatpush1.msra.mxu0 %v1128
    %2244 = vmatprep.subr.mxu0 0.0
    %2245 = vmatpush1.msra.mxu0 %v1127
    %2246 = vmatprep.subr.mxu0 0.0
    %2247 = vmatpush2.msra.mxu0 0.0
    %2248 = vmatprep.subr.mxu0 0.0
    %2249 = vmatpush2.msra.mxu0 0.0
    %2250 = vmatprep.subr.mxu0 0.0
    %2251 = vmatpush2.msra.mxu0 0.0
    %2252 = vmatprep.subr.mxu0 0.0
    %2253 = vmatpush2.msra.mxu0 0.0
    %2254 = vmatprep.subr.mxu0 0.0
    %2255 = vmatpush2.msra.mxu0 0.0
    %2256 = vmatprep.subr.mxu0 0.0
    %2257 = vmatpush2.msra.mxu0 0.0
    %2258 = vmatprep.subr.mxu0 0.0
    %2259 = vmatpush2.msra.mxu0 0.0
    %2260 = vmatprep.subr.mxu0 0.0
    %2261 = vmatpush2.msra.mxu0 0.0
    %2262 = vmatprep.subr.mxu0 0.0
    %2263 = vmatpush2.msra.mxu0 0.0
    %2264 = vmatprep.subr.mxu0 0.0
    %2265 = vmatpush2.msra.mxu0 0.0
    %2266 = vmatprep.subr.mxu0 0.0
    %2267 = vmatpush2.msra.mxu0 0.0
    %2268 = vmatprep.subr.mxu0 0.0
    %2269 = vmatpush2.msra.mxu0 0.0
    %2270 = vmatprep.subr.mxu0 0.0
    %2271 = vmatpush2.msra.mxu0 0.0
    %2272 = vmatprep.subr.mxu0 0.0
    %2273 = vmatpush2.msra.mxu0 0.0
    %2274 = vmatprep.subr.mxu0 0.0
    %2275 = vmatpush2.msra.mxu0 0.0
    %2276 = vmatprep.subr.mxu0 0.0
    %2277 = vmatpush2.msra.mxu0 0.0
    %2278 = vmatprep.mubr.f32.mxu0 0.0
    %2279 = vmatmul.mubr.f32.gmra.mxu0 %v2212
    %v2280 = vpop.f32.mrf.mxu0
    %v2281 = vadd.f32 0.0, %v2280
    %v2282 = vpop.f32.mrf.mxu0
    %2283 = vdwg.mxu0
    %v2284 = vsel %vm1203, %v945, 0
    %2286 = vmatprep.subr.mxu0 0.0
    %2287 = vmatpush1.msra.mxu0 0.0
    %2288 = vmatprep.subr.mxu0 0.0
    %2289 = vmatpush1.msra.mxu0 0.0
    %2290 = vmatprep.subr.mxu0 0.0
    %2291 = vmatpush1.msra.mxu0 0.0
    %2292 = vmatprep.subr.mxu0 0.0
    %2293 = vmatpush1.msra.mxu0 0.0
    %2294 = vmatprep.subr.mxu0 0.0
    %2295 = vmatpush1.msra.mxu0 0.0
    %2296 = vmatprep.subr.mxu0 0.0
    %2297 = vmatpush1.msra.mxu0 0.0
    %2298 = vmatprep.subr.mxu0 0.0
    %2299 = vmatpush1.msra.mxu0 0.0
    %2300 = vmatprep.subr.mxu0 0.0
    %2301 = vmatpush1.msra.mxu0 0.0
    %2302 = vmatprep.subr.mxu0 0.0
    %2303 = vmatpush1.msra.mxu0 0.0
    %2304 = vmatprep.subr.mxu0 0.0
    %2305 = vmatpush1.msra.mxu0 0.0
    %2306 = vmatprep.subr.mxu0 0.0
    %2307 = vmatpush1.msra.mxu0 0.0
    %2308 = vmatprep.subr.mxu0 0.0
    %2309 = vmatpush1.msra.mxu0 0.0
    %2310 = vmatprep.subr.mxu0 0.0
    %2311 = vmatpush1.msra.mxu0 0.0
    %2312 = vmatprep.subr.mxu0 0.0
    %2313 = vmatpush1.msra.mxu0 0.0
    %2314 = vmatprep.subr.mxu0 0.0
    %2315 = vmatpush1.msra.mxu0 %v1130
    %2316 = vmatprep.subr.mxu0 0.0
    %2317 = vmatpush1.msra.mxu0 %v1129
    %2318 = vmatprep.subr.mxu0 0.0
    %2319 = vmatpush2.msra.mxu0 0.0
    %2320 = vmatprep.subr.mxu0 0.0
    %2321 = vmatpush2.msra.mxu0 0.0
    %2322 = vmatprep.subr.mxu0 0.0
    %2323 = vmatpush2.msra.mxu0 0.0
    %2324 = vmatprep.subr.mxu0 0.0
    %2325 = vmatpush2.msra.mxu0 0.0
    %2326 = vmatprep.subr.mxu0 0.0
    %2327 = vmatpush2.msra.mxu0 0.0
    %2328 = vmatprep.subr.mxu0 0.0
    %2329 = vmatpush2.msra.mxu0 0.0
    %2330 = vmatprep.subr.mxu0 0.0
    %2331 = vmatpush2.msra.mxu0 0.0
    %2332 = vmatprep.subr.mxu0 0.0
    %2333 = vmatpush2.msra.mxu0 0.0
    %2334 = vmatprep.subr.mxu0 0.0
    %2335 = vmatpush2.msra.mxu0 0.0
    %2336 = vmatprep.subr.mxu0 0.0
    %2337 = vmatpush2.msra.mxu0 0.0
    %2338 = vmatprep.subr.mxu0 0.0
    %2339 = vmatpush2.msra.mxu0 0.0
    %2340 = vmatprep.subr.mxu0 0.0
    %2341 = vmatpush2.msra.mxu0 0.0
    %2342 = vmatprep.subr.mxu0 0.0
    %2343 = vmatpush2.msra.mxu0 0.0
    %2344 = vmatprep.subr.mxu0 0.0
    %2345 = vmatpush2.msra.mxu0 0.0
    %2346 = vmatprep.subr.mxu0 0.0
    %2347 = vmatpush2.msra.mxu0 0.0
    %2348 = vmatprep.subr.mxu0 0.0
    %2349 = vmatpush2.msra.mxu0 0.0
    %2350 = vmatprep.mubr.f32.mxu0 0.0
    %2351 = vmatmul.mubr.f32.gmra.mxu0 %v2284
    %v2352 = vpop.f32.mrf.mxu0
    %v2353 = vadd.f32 0.0, %v2352
    %v2354 = vpop.f32.mrf.mxu0
    %2355 = vdwg.mxu0
    %v2356 = vsel %vm1203, %v953, 0
    %2358 = vmatprep.subr.mxu0 0.0
    %2359 = vmatpush1.msra.mxu0 0.0
    %2360 = vmatprep.subr.mxu0 0.0
    %2361 = vmatpush1.msra.mxu0 0.0
    %2362 = vmatprep.subr.mxu0 0.0
    %2363 = vmatpush1.msra.mxu0 0.0
    %2364 = vmatprep.subr.mxu0 0.0
    %2365 = vmatpush1.msra.mxu0 0.0
    %2366 = vmatprep.subr.mxu0 0.0
    %2367 = vmatpush1.msra.mxu0 0.0
    %2368 = vmatprep.subr.mxu0 0.0
    %2369 = vmatpush1.msra.mxu0 0.0
    %2370 = vmatprep.subr.mxu0 0.0
    %2371 = vmatpush1.msra.mxu0 0.0
    %2372 = vmatprep.subr.mxu0 0.0
    %2373 = vmatpush1.msra.mxu0 0.0
    %2374 = vmatprep.subr.mxu0 0.0
    %2375 = vmatpush1.msra.mxu0 0.0
    %2376 = vmatprep.subr.mxu0 0.0
    %2377 = vmatpush1.msra.mxu0 0.0
    %2378 = vmatprep.subr.mxu0 0.0
    %2379 = vmatpush1.msra.mxu0 0.0
    %2380 = vmatprep.subr.mxu0 0.0
    %2381 = vmatpush1.msra.mxu0 0.0
    %2382 = vmatprep.subr.mxu0 0.0
    %2383 = vmatpush1.msra.mxu0 0.0
    %2384 = vmatprep.subr.mxu0 0.0
    %2385 = vmatpush1.msra.mxu0 0.0
    %2386 = vmatprep.subr.mxu0 0.0
    %2387 = vmatpush1.msra.mxu0 %v1132
    %2388 = vmatprep.subr.mxu0 0.0
    %2389 = vmatpush1.msra.mxu0 %v1131
    %2390 = vmatprep.subr.mxu0 0.0
    %2391 = vmatpush2.msra.mxu0 0.0
    %2392 = vmatprep.subr.mxu0 0.0
    %2393 = vmatpush2.msra.mxu0 0.0
    %2394 = vmatprep.subr.mxu0 0.0
    %2395 = vmatpush2.msra.mxu0 0.0
    %2396 = vmatprep.subr.mxu0 0.0
    %2397 = vmatpush2.msra.mxu0 0.0
    %2398 = vmatprep.subr.mxu0 0.0
    %2399 = vmatpush2.msra.mxu0 0.0
    %2400 = vmatprep.subr.mxu0 0.0
    %2401 = vmatpush2.msra.mxu0 0.0
    %2402 = vmatprep.subr.mxu0 0.0
    %2403 = vmatpush2.msra.mxu0 0.0
    %2404 = vmatprep.subr.mxu0 0.0
    %2405 = vmatpush2.msra.mxu0 0.0
    %2406 = vmatprep.subr.mxu0 0.0
    %2407 = vmatpush2.msra.mxu0 0.0
    %2408 = vmatprep.subr.mxu0 0.0
    %2409 = vmatpush2.msra.mxu0 0.0
    %2410 = vmatprep.subr.mxu0 0.0
    %2411 = vmatpush2.msra.mxu0 0.0
    %2412 = vmatprep.subr.mxu0 0.0
    %2413 = vmatpush2.msra.mxu0 0.0
    %2414 = vmatprep.subr.mxu0 0.0
    %2415 = vmatpush2.msra.mxu0 0.0
    %2416 = vmatprep.subr.mxu0 0.0
    %2417 = vmatpush2.msra.mxu0 0.0
    %2418 = vmatprep.subr.mxu0 0.0
    %2419 = vmatpush2.msra.mxu0 0.0
    %2420 = vmatprep.subr.mxu0 0.0
    %2421 = vmatpush2.msra.mxu0 0.0
    %2422 = vmatprep.mubr.f32.mxu0 0.0
    %2423 = vmatmul.mubr.f32.gmra.mxu0 %v2356
    %v2424 = vpop.f32.mrf.mxu0
    %v2425 = vadd.f32 0.0, %v2424
    %v2426 = vpop.f32.mrf.mxu0
    %2427 = vdwg.mxu0
    %v2428 = vsel %vm1203, %v961, 0
    %2430 = vmatprep.subr.mxu0 0.0
    %2431 = vmatpush1.msra.mxu0 0.0
    %2432 = vmatprep.subr.mxu0 0.0
    %2433 = vmatpush1.msra.mxu0 0.0
    %2434 = vmatprep.subr.mxu0 0.0
    %2435 = vmatpush1.msra.mxu0 0.0
    %2436 = vmatprep.subr.mxu0 0.0
    %2437 = vmatpush1.msra.mxu0 0.0
    %2438 = vmatprep.subr.mxu0 0.0
    %2439 = vmatpush1.msra.mxu0 0.0
    %2440 = vmatprep.subr.mxu0 0.0
    %2441 = vmatpush1.msra.mxu0 0.0
    %2442 = vmatprep.subr.mxu0 0.0
    %2443 = vmatpush1.msra.mxu0 0.0
    %2444 = vmatprep.subr.mxu0 0.0
    %2445 = vmatpush1.msra.mxu0 0.0
    %2446 = vmatprep.subr.mxu0 0.0
    %2447 = vmatpush1.msra.mxu0 0.0
    %2448 = vmatprep.subr.mxu0 0.0
    %2449 = vmatpush1.msra.mxu0 0.0
    %2450 = vmatprep.subr.mxu0 0.0
    %2451 = vmatpush1.msra.mxu0 0.0
    %2452 = vmatprep.subr.mxu0 0.0
    %2453 = vmatpush1.msra.mxu0 0.0
    %2454 = vmatprep.subr.mxu0 0.0
    %2455 = vmatpush1.msra.mxu0 0.0
    %2456 = vmatprep.subr.mxu0 0.0
    %2457 = vmatpush1.msra.mxu0 0.0
    %2458 = vmatprep.subr.mxu0 0.0
    %2459 = vmatpush1.msra.mxu0 %v1134
    %2460 = vmatprep.subr.mxu0 0.0
    %2461 = vmatpush1.msra.mxu0 %v1133
    %2462 = vmatprep.subr.mxu0 0.0
    %2463 = vmatpush2.msra.mxu0 0.0
    %2464 = vmatprep.subr.mxu0 0.0
    %2465 = vmatpush2.msra.mxu0 0.0
    %2466 = vmatprep.subr.mxu0 0.0
    %2467 = vmatpush2.msra.mxu0 0.0
    %2468 = vmatprep.subr.mxu0 0.0
    %2469 = vmatpush2.msra.mxu0 0.0
    %2470 = vmatprep.subr.mxu0 0.0
    %2471 = vmatpush2.msra.mxu0 0.0
    %2472 = vmatprep.subr.mxu0 0.0
    %2473 = vmatpush2.msra.mxu0 0.0
    %2474 = vmatprep.subr.mxu0 0.0
    %2475 = vmatpush2.msra.mxu0 0.0
    %2476 = vmatprep.subr.mxu0 0.0
    %2477 = vmatpush2.msra.mxu0 0.0
    %2478 = vmatprep.subr.mxu0 0.0
    %2479 = vmatpush2.msra.mxu0 0.0
    %2480 = vmatprep.subr.mxu0 0.0
    %2481 = vmatpush2.msra.mxu0 0.0
    %2482 = vmatprep.subr.mxu0 0.0
    %2483 = vmatpush2.msra.mxu0 0.0
    %2484 = vmatprep.subr.mxu0 0.0
    %2485 = vmatpush2.msra.mxu0 0.0
    %2486 = vmatprep.subr.mxu0 0.0
    %2487 = vmatpush2.msra.mxu0 0.0
    %2488 = vmatprep.subr.mxu0 0.0
    %2489 = vmatpush2.msra.mxu0 0.0
    %2490 = vmatprep.subr.mxu0 0.0
    %2491 = vmatpush2.msra.mxu0 0.0
    %2492 = vmatprep.subr.mxu0 0.0
    %2493 = vmatpush2.msra.mxu0 0.0
    %2494 = vmatprep.mubr.f32.mxu0 0.0
    %2495 = vmatmul.mubr.f32.gmra.mxu0 %v2428
    %v2496 = vpop.f32.mrf.mxu0
    %v2497 = vadd.f32 0.0, %v2496
    %v2498 = vpop.f32.mrf.mxu0
    %2499 = vdwg.mxu0
    %v2500 = vsel %vm1203, %v960, 0
    %2502 = vmatprep.subr.mxu0 0.0
    %2503 = vmatpush1.msra.mxu0 0.0
    %2504 = vmatprep.subr.mxu0 0.0
    %2505 = vmatpush1.msra.mxu0 0.0
    %2506 = vmatprep.subr.mxu0 0.0
    %2507 = vmatpush1.msra.mxu0 0.0
    %2508 = vmatprep.subr.mxu0 0.0
    %2509 = vmatpush1.msra.mxu0 0.0
    %2510 = vmatprep.subr.mxu0 0.0
    %2511 = vmatpush1.msra.mxu0 0.0
    %2512 = vmatprep.subr.mxu0 0.0
    %2513 = vmatpush1.msra.mxu0 0.0
    %2514 = vmatprep.subr.mxu0 0.0
    %2515 = vmatpush1.msra.mxu0 0.0
    %2516 = vmatprep.subr.mxu0 0.0
    %2517 = vmatpush1.msra.mxu0 0.0
    %2518 = vmatprep.subr.mxu0 0.0
    %2519 = vmatpush1.msra.mxu0 0.0
    %2520 = vmatprep.subr.mxu0 0.0
    %2521 = vmatpush1.msra.mxu0 0.0
    %2522 = vmatprep.subr.mxu0 0.0
    %2523 = vmatpush1.msra.mxu0 0.0
    %2524 = vmatprep.subr.mxu0 0.0
    %2525 = vmatpush1.msra.mxu0 0.0
    %2526 = vmatprep.subr.mxu0 0.0
    %2527 = vmatpush1.msra.mxu0 0.0
    %2528 = vmatprep.subr.mxu0 0.0
    %2529 = vmatpush1.msra.mxu0 0.0
    %2530 = vmatprep.subr.mxu0 0.0
    %2531 = vmatpush1.msra.mxu0 %v1136
    %2532 = vmatprep.subr.mxu0 0.0
    %2533 = vmatpush1.msra.mxu0 %v1135
    %2534 = vmatprep.subr.mxu0 0.0
    %2535 = vmatpush2.msra.mxu0 0.0
    %2536 = vmatprep.subr.mxu0 0.0
    %2537 = vmatpush2.msra.mxu0 0.0
    %2538 = vmatprep.subr.mxu0 0.0
    %2539 = vmatpush2.msra.mxu0 0.0
    %2540 = vmatprep.subr.mxu0 0.0
    %2541 = vmatpush2.msra.mxu0 0.0
    %2542 = vmatprep.subr.mxu0 0.0
    %2543 = vmatpush2.msra.mxu0 0.0
    %2544 = vmatprep.subr.mxu0 0.0
    %2545 = vmatpush2.msra.mxu0 0.0
    %2546 = vmatprep.subr.mxu0 0.0
    %2547 = vmatpush2.msra.mxu0 0.0
    %2548 = vmatprep.subr.mxu0 0.0
    %2549 = vmatpush2.msra.mxu0 0.0
    %2550 = vmatprep.subr.mxu0 0.0
    %2551 = vmatpush2.msra.mxu0 0.0
    %2552 = vmatprep.subr.mxu0 0.0
    %2553 = vmatpush2.msra.mxu0 0.0
    %2554 = vmatprep.subr.mxu0 0.0
    %2555 = vmatpush2.msra.mxu0 0.0
    %2556 = vmatprep.subr.mxu0 0.0
    %2557 = vmatpush2.msra.mxu0 0.0
    %2558 = vmatprep.subr.mxu0 0.0
    %2559 = vmatpush2.msra.mxu0 0.0
    %2560 = vmatprep.subr.mxu0 0.0
    %2561 = vmatpush2.msra.mxu0 0.0
    %2562 = vmatprep.subr.mxu0 0.0
    %2563 = vmatpush2.msra.mxu0 0.0
    %2564 = vmatprep.subr.mxu0 0.0
    %2565 = vmatpush2.msra.mxu0 0.0
    %2566 = vmatprep.mubr.f32.mxu0 0.0
    %2567 = vmatmul.mubr.f32.gmra.mxu0 %v2500
    %v2568 = vpop.f32.mrf.mxu0
    %v2569 = vadd.f32 0.0, %v2568
    %v2570 = vpop.f32.mrf.mxu0
    %2571 = vdwg.mxu0
    %v2572 = vsel %vm1203, %v962, 0
    %2574 = vmatprep.subr.mxu0 0.0
    %2575 = vmatpush1.msra.mxu0 0.0
    %2576 = vmatprep.subr.mxu0 0.0
    %2577 = vmatpush1.msra.mxu0 0.0
    %2578 = vmatprep.subr.mxu0 0.0
    %2579 = vmatpush1.msra.mxu0 0.0
    %2580 = vmatprep.subr.mxu0 0.0
    %2581 = vmatpush1.msra.mxu0 0.0
    %2582 = vmatprep.subr.mxu0 0.0
    %2583 = vmatpush1.msra.mxu0 0.0
    %2584 = vmatprep.subr.mxu0 0.0
    %2585 = vmatpush1.msra.mxu0 0.0
    %2586 = vmatprep.subr.mxu0 0.0
    %2587 = vmatpush1.msra.mxu0 0.0
    %2588 = vmatprep.subr.mxu0 0.0
    %2589 = vmatpush1.msra.mxu0 0.0
    %2590 = vmatprep.subr.mxu0 0.0
    %2591 = vmatpush1.msra.mxu0 0.0
    %2592 = vmatprep.subr.mxu0 0.0
    %2593 = vmatpush1.msra.mxu0 0.0
    %2594 = vmatprep.subr.mxu0 0.0
    %2595 = vmatpush1.msra.mxu0 0.0
    %2596 = vmatprep.subr.mxu0 0.0
    %2597 = vmatpush1.msra.mxu0 0.0
    %2598 = vmatprep.subr.mxu0 0.0
    %2599 = vmatpush1.msra.mxu0 0.0
    %2600 = vmatprep.subr.mxu0 0.0
    %2601 = vmatpush1.msra.mxu0 0.0
    %2602 = vmatprep.subr.mxu0 0.0
    %2603 = vmatpush1.msra.mxu0 %v1138
    %2604 = vmatprep.subr.mxu0 0.0
    %2605 = vmatpush1.msra.mxu0 %v1137
    %2606 = vmatprep.subr.mxu0 0.0
    %2607 = vmatpush2.msra.mxu0 0.0
    %2608 = vmatprep.subr.mxu0 0.0
    %2609 = vmatpush2.msra.mxu0 0.0
    %2610 = vmatprep.subr.mxu0 0.0
    %2611 = vmatpush2.msra.mxu0 0.0
    %2612 = vmatprep.subr.mxu0 0.0
    %2613 = vmatpush2.msra.mxu0 0.0
    %2614 = vmatprep.subr.mxu0 0.0
    %2615 = vmatpush2.msra.mxu0 0.0
    %2616 = vmatprep.subr.mxu0 0.0
    %2617 = vmatpush2.msra.mxu0 0.0
    %2618 = vmatprep.subr.mxu0 0.0
    %2619 = vmatpush2.msra.mxu0 0.0
    %2620 = vmatprep.subr.mxu0 0.0
    %2621 = vmatpush2.msra.mxu0 0.0
    %2622 = vmatprep.subr.mxu0 0.0
    %2623 = vmatpush2.msra.mxu0 0.0
    %2624 = vmatprep.subr.mxu0 0.0
    %2625 = vmatpush2.msra.mxu0 0.0
    %2626 = vmatprep.subr.mxu0 0.0
    %2627 = vmatpush2.msra.mxu0 0.0
    %2628 = vmatprep.subr.mxu0 0.0
    %2629 = vmatpush2.msra.mxu0 0.0
    %2630 = vmatprep.subr.mxu0 0.0
    %2631 = vmatpush2.msra.mxu0 0.0
    %2632 = vmatprep.subr.mxu0 0.0
    %2633 = vmatpush2.msra.mxu0 0.0
    %2634 = vmatprep.subr.mxu0 0.0
    %2635 = vmatpush2.msra.mxu0 0.0
    %2636 = vmatprep.subr.mxu0 0.0
    %2637 = vmatpush2.msra.mxu0 0.0
    %2638 = vmatprep.mubr.f32.mxu0 0.0
    %2639 = vmatmul.mubr.f32.gmra.mxu0 %v2572
    %v2640 = vpop.f32.mrf.mxu0
    %v2641 = vadd.f32 0.0, %v2640
    %v2642 = vpop.f32.mrf.mxu0
    %2643 = vdwg.mxu0
    %v2644 = vsel %vm1203, %v970, 0
    %2646 = vmatprep.subr.mxu0 0.0
    %2647 = vmatpush1.msra.mxu0 0.0
    %2648 = vmatprep.subr.mxu0 0.0
    %2649 = vmatpush1.msra.mxu0 0.0
    %2650 = vmatprep.subr.mxu0 0.0
    %2651 = vmatpush1.msra.mxu0 0.0
    %2652 = vmatprep.subr.mxu0 0.0
    %2653 = vmatpush1.msra.mxu0 0.0
    %2654 = vmatprep.subr.mxu0 0.0
    %2655 = vmatpush1.msra.mxu0 0.0
    %2656 = vmatprep.subr.mxu0 0.0
    %2657 = vmatpush1.msra.mxu0 0.0
    %2658 = vmatprep.subr.mxu0 0.0
    %2659 = vmatpush1.msra.mxu0 0.0
    %2660 = vmatprep.subr.mxu0 0.0
    %2661 = vmatpush1.msra.mxu0 0.0
    %2662 = vmatprep.subr.mxu0 0.0
    %2663 = vmatpush1.msra.mxu0 0.0
    %2664 = vmatprep.subr.mxu0 0.0
    %2665 = vmatpush1.msra.mxu0 0.0
    %2666 = vmatprep.subr.mxu0 0.0
    %2667 = vmatpush1.msra.mxu0 0.0
    %2668 = vmatprep.subr.mxu0 0.0
    %2669 = vmatpush1.msra.mxu0 0.0
    %2670 = vmatprep.subr.mxu0 0.0
    %2671 = vmatpush1.msra.mxu0 0.0
    %2672 = vmatprep.subr.mxu0 0.0
    %2673 = vmatpush1.msra.mxu0 0.0
    %2674 = vmatprep.subr.mxu0 0.0
    %2675 = vmatpush1.msra.mxu0 %v1140
    %2676 = vmatprep.subr.mxu0 0.0
    %2677 = vmatpush1.msra.mxu0 %v1139
    %2678 = vmatprep.subr.mxu0 0.0
    %2679 = vmatpush2.msra.mxu0 0.0
    %2680 = vmatprep.subr.mxu0 0.0
    %2681 = vmatpush2.msra.mxu0 0.0
    %2682 = vmatprep.subr.mxu0 0.0
    %2683 = vmatpush2.msra.mxu0 0.0
    %2684 = vmatprep.subr.mxu0 0.0
    %2685 = vmatpush2.msra.mxu0 0.0
    %2686 = vmatprep.subr.mxu0 0.0
    %2687 = vmatpush2.msra.mxu0 0.0
    %2688 = vmatprep.subr.mxu0 0.0
    %2689 = vmatpush2.msra.mxu0 0.0
    %2690 = vmatprep.subr.mxu0 0.0
    %2691 = vmatpush2.msra.mxu0 0.0
    %2692 = vmatprep.subr.mxu0 0.0
    %2693 = vmatpush2.msra.mxu0 0.0
    %2694 = vmatprep.subr.mxu0 0.0
    %2695 = vmatpush2.msra.mxu0 0.0
    %2696 = vmatprep.subr.mxu0 0.0
    %2697 = vmatpush2.msra.mxu0 0.0
    %2698 = vmatprep.subr.mxu0 0.0
    %2699 = vmatpush2.msra.mxu0 0.0
    %2700 = vmatprep.subr.mxu0 0.0
    %2701 = vmatpush2.msra.mxu0 0.0
    %2702 = vmatprep.subr.mxu0 0.0
    %2703 = vmatpush2.msra.mxu0 0.0
    %2704 = vmatprep.subr.mxu0 0.0
    %2705 = vmatpush2.msra.mxu0 0.0
    %2706 = vmatprep.subr.mxu0 0.0
    %2707 = vmatpush2.msra.mxu0 0.0
    %2708 = vmatprep.subr.mxu0 0.0
    %2709 = vmatpush2.msra.mxu0 0.0
    %2710 = vmatprep.mubr.f32.mxu0 0.0
    %2711 = vmatmul.mubr.f32.gmra.mxu0 %v2644
    %v2712 = vpop.f32.mrf.mxu0
    %v2713 = vadd.f32 0.0, %v2712
    %v2714 = vpop.f32.mrf.mxu0
    %2715 = vdwg.mxu0
    %v2716 = vsel %vm1203, %v978, 0
    %2718 = vmatprep.subr.mxu0 0.0
    %2719 = vmatpush1.msra.mxu0 0.0
    %2720 = vmatprep.subr.mxu0 0.0
    %2721 = vmatpush1.msra.mxu0 0.0
    %2722 = vmatprep.subr.mxu0 0.0
    %2723 = vmatpush1.msra.mxu0 0.0
    %2724 = vmatprep.subr.mxu0 0.0
    %2725 = vmatpush1.msra.mxu0 0.0
    %2726 = vmatprep.subr.mxu0 0.0
    %2727 = vmatpush1.msra.mxu0 0.0
    %2728 = vmatprep.subr.mxu0 0.0
    %2729 = vmatpush1.msra.mxu0 0.0
    %2730 = vmatprep.subr.mxu0 0.0
    %2731 = vmatpush1.msra.mxu0 0.0
    %2732 = vmatprep.subr.mxu0 0.0
    %2733 = vmatpush1.msra.mxu0 0.0
    %2734 = vmatprep.subr.mxu0 0.0
    %2735 = vmatpush1.msra.mxu0 0.0
    %2736 = vmatprep.subr.mxu0 0.0
    %2737 = vmatpush1.msra.mxu0 0.0
    %2738 = vmatprep.subr.mxu0 0.0
    %2739 = vmatpush1.msra.mxu0 0.0
    %2740 = vmatprep.subr.mxu0 0.0
    %2741 = vmatpush1.msra.mxu0 0.0
    %2742 = vmatprep.subr.mxu0 0.0
    %2743 = vmatpush1.msra.mxu0 0.0
    %2744 = vmatprep.subr.mxu0 0.0
    %2745 = vmatpush1.msra.mxu0 0.0
    %2746 = vmatprep.subr.mxu0 0.0
    %2747 = vmatpush1.msra.mxu0 %v1142
    %2748 = vmatprep.subr.mxu0 0.0
    %2749 = vmatpush1.msra.mxu0 %v1141
    %2750 = vmatprep.subr.mxu0 0.0
    %2751 = vmatpush2.msra.mxu0 0.0
    %2752 = vmatprep.subr.mxu0 0.0
    %2753 = vmatpush2.msra.mxu0 0.0
    %2754 = vmatprep.subr.mxu0 0.0
    %2755 = vmatpush2.msra.mxu0 0.0
    %2756 = vmatprep.subr.mxu0 0.0
    %2757 = vmatpush2.msra.mxu0 0.0
    %2758 = vmatprep.subr.mxu0 0.0
    %2759 = vmatpush2.msra.mxu0 0.0
    %2760 = vmatprep.subr.mxu0 0.0
    %2761 = vmatpush2.msra.mxu0 0.0
    %2762 = vmatprep.subr.mxu0 0.0
    %2763 = vmatpush2.msra.mxu0 0.0
    %2764 = vmatprep.subr.mxu0 0.0
    %2765 = vmatpush2.msra.mxu0 0.0
    %2766 = vmatprep.subr.mxu0 0.0
    %2767 = vmatpush2.msra.mxu0 0.0
    %2768 = vmatprep.subr.mxu0 0.0
    %2769 = vmatpush2.msra.mxu0 0.0
    %2770 = vmatprep.subr.mxu0 0.0
    %2771 = vmatpush2.msra.mxu0 0.0
    %2772 = vmatprep.subr.mxu0 0.0
    %2773 = vmatpush2.msra.mxu0 0.0
    %2774 = vmatprep.subr.mxu0 0.0
    %2775 = vmatpush2.msra.mxu0 0.0
    %2776 = vmatprep.subr.mxu0 0.0
    %2777 = vmatpush2.msra.mxu0 0.0
    %2778 = vmatprep.subr.mxu0 0.0
    %2779 = vmatpush2.msra.mxu0 0.0
    %2780 = vmatprep.subr.mxu0 0.0
    %2781 = vmatpush2.msra.mxu0 0.0
    %2782 = vmatprep.mubr.f32.mxu0 0.0
    %2783 = vmatmul.mubr.f32.gmra.mxu0 %v2716
    %v2784 = vpop.f32.mrf.mxu0
    %v2785 = vadd.f32 0.0, %v2784
    %v2786 = vpop.f32.mrf.mxu0
    %2787 = vdwg.mxu0
    %v2788 = vsel %vm1203, %v977, 0
    %2790 = vmatprep.subr.mxu0 0.0
    %2791 = vmatpush1.msra.mxu0 0.0
    %2792 = vmatprep.subr.mxu0 0.0
    %2793 = vmatpush1.msra.mxu0 0.0
    %2794 = vmatprep.subr.mxu0 0.0
    %2795 = vmatpush1.msra.mxu0 0.0
    %2796 = vmatprep.subr.mxu0 0.0
    %2797 = vmatpush1.msra.mxu0 0.0
    %2798 = vmatprep.subr.mxu0 0.0
    %2799 = vmatpush1.msra.mxu0 0.0
    %2800 = vmatprep.subr.mxu0 0.0
    %2801 = vmatpush1.msra.mxu0 0.0
    %2802 = vmatprep.subr.mxu0 0.0
    %2803 = vmatpush1.msra.mxu0 0.0
    %2804 = vmatprep.subr.mxu0 0.0
    %2805 = vmatpush1.msra.mxu0 0.0
    %2806 = vmatprep.subr.mxu0 0.0
    %2807 = vmatpush1.msra.mxu0 0.0
    %2808 = vmatprep.subr.mxu0 0.0
    %2809 = vmatpush1.msra.mxu0 0.0
    %2810 = vmatprep.subr.mxu0 0.0
    %2811 = vmatpush1.msra.mxu0 0.0
    %2812 = vmatprep.subr.mxu0 0.0
    %2813 = vmatpush1.msra.mxu0 0.0
    %2814 = vmatprep.subr.mxu0 0.0
    %2815 = vmatpush1.msra.mxu0 0.0
    %2816 = vmatprep.subr.mxu0 0.0
    %2817 = vmatpush1.msra.mxu0 0.0
    %2818 = vmatprep.subr.mxu0 0.0
    %2819 = vmatpush1.msra.mxu0 %v1144
    %2820 = vmatprep.subr.mxu0 0.0
    %2821 = vmatpush1.msra.mxu0 %v1143
    %2822 = vmatprep.subr.mxu0 0.0
    %2823 = vmatpush2.msra.mxu0 0.0
    %2824 = vmatprep.subr.mxu0 0.0
    %2825 = vmatpush2.msra.mxu0 0.0
    %2826 = vmatprep.subr.mxu0 0.0
    %2827 = vmatpush2.msra.mxu0 0.0
    %2828 = vmatprep.subr.mxu0 0.0
    %2829 = vmatpush2.msra.mxu0 0.0
    %2830 = vmatprep.subr.mxu0 0.0
    %2831 = vmatpush2.msra.mxu0 0.0
    %2832 = vmatprep.subr.mxu0 0.0
    %2833 = vmatpush2.msra.mxu0 0.0
    %2834 = vmatprep.subr.mxu0 0.0
    %2835 = vmatpush2.msra.mxu0 0.0
    %2836 = vmatprep.subr.mxu0 0.0
    %2837 = vmatpush2.msra.mxu0 0.0
    %2838 = vmatprep.subr.mxu0 0.0
    %2839 = vmatpush2.msra.mxu0 0.0
    %2840 = vmatprep.subr.mxu0 0.0
    %2841 = vmatpush2.msra.mxu0 0.0
    %2842 = vmatprep.subr.mxu0 0.0
    %2843 = vmatpush2.msra.mxu0 0.0
    %2844 = vmatprep.subr.mxu0 0.0
    %2845 = vmatpush2.msra.mxu0 0.0
    %2846 = vmatprep.subr.mxu0 0.0
    %2847 = vmatpush2.msra.mxu0 0.0
    %2848 = vmatprep.subr.mxu0 0.0
    %2849 = vmatpush2.msra.mxu0 0.0
    %2850 = vmatprep.subr.mxu0 0.0
    %2851 = vmatpush2.msra.mxu0 0.0
    %2852 = vmatprep.subr.mxu0 0.0
    %2853 = vmatpush2.msra.mxu0 0.0
    %2854 = vmatprep.mubr.f32.mxu0 0.0
    %2855 = vmatmul.mubr.f32.gmra.mxu0 %v2788
    %v2856 = vpop.f32.mrf.mxu0
    %v2857 = vadd.f32 0.0, %v2856
    %v2858 = vpop.f32.mrf.mxu0
    %2859 = vdwg.mxu0
    %v2860 = vsel %vm1203, %v979, 0
    %2862 = vmatprep.subr.mxu0 0.0
    %2863 = vmatpush1.msra.mxu0 0.0
    %2864 = vmatprep.subr.mxu0 0.0
    %2865 = vmatpush1.msra.mxu0 0.0
    %2866 = vmatprep.subr.mxu0 0.0
    %2867 = vmatpush1.msra.mxu0 0.0
    %2868 = vmatprep.subr.mxu0 0.0
    %2869 = vmatpush1.msra.mxu0 0.0
    %2870 = vmatprep.subr.mxu0 0.0
    %2871 = vmatpush1.msra.mxu0 0.0
    %2872 = vmatprep.subr.mxu0 0.0
    %2873 = vmatpush1.msra.mxu0 0.0
    %2874 = vmatprep.subr.mxu0 0.0
    %2875 = vmatpush1.msra.mxu0 0.0
    %2876 = vmatprep.subr.mxu0 0.0
    %2877 = vmatpush1.msra.mxu0 0.0
    %2878 = vmatprep.subr.mxu0 0.0
    %2879 = vmatpush1.msra.mxu0 0.0
    %2880 = vmatprep.subr.mxu0 0.0
    %2881 = vmatpush1.msra.mxu0 0.0
    %2882 = vmatprep.subr.mxu0 0.0
    %2883 = vmatpush1.msra.mxu0 0.0
    %2884 = vmatprep.subr.mxu0 0.0
    %2885 = vmatpush1.msra.mxu0 0.0
    %2886 = vmatprep.subr.mxu0 0.0
    %2887 = vmatpush1.msra.mxu0 0.0
    %2888 = vmatprep.subr.mxu0 0.0
    %2889 = vmatpush1.msra.mxu0 0.0
    %2890 = vmatprep.subr.mxu0 0.0
    %2891 = vmatpush1.msra.mxu0 %v1146
    %2892 = vmatprep.subr.mxu0 0.0
    %2893 = vmatpush1.msra.mxu0 %v1145
    %2894 = vmatprep.subr.mxu0 0.0
    %2895 = vmatpush2.msra.mxu0 0.0
    %2896 = vmatprep.subr.mxu0 0.0
    %2897 = vmatpush2.msra.mxu0 0.0
    %2898 = vmatprep.subr.mxu0 0.0
    %2899 = vmatpush2.msra.mxu0 0.0
    %2900 = vmatprep.subr.mxu0 0.0
    %2901 = vmatpush2.msra.mxu0 0.0
    %2902 = vmatprep.subr.mxu0 0.0
    %2903 = vmatpush2.msra.mxu0 0.0
    %2904 = vmatprep.subr.mxu0 0.0
    %2905 = vmatpush2.msra.mxu0 0.0
    %2906 = vmatprep.subr.mxu0 0.0
    %2907 = vmatpush2.msra.mxu0 0.0
    %2908 = vmatprep.subr.mxu0 0.0
    %2909 = vmatpush2.msra.mxu0 0.0
    %2910 = vmatprep.subr.mxu0 0.0
    %2911 = vmatpush2.msra.mxu0 0.0
    %2912 = vmatprep.subr.mxu0 0.0
    %2913 = vmatpush2.msra.mxu0 0.0
    %2914 = vmatprep.subr.mxu0 0.0
    %2915 = vmatpush2.msra.mxu0 0.0
    %2916 = vmatprep.subr.mxu0 0.0
    %2917 = vmatpush2.msra.mxu0 0.0
    %2918 = vmatprep.subr.mxu0 0.0
    %2919 = vmatpush2.msra.mxu0 0.0
    %2920 = vmatprep.subr.mxu0 0.0
    %2921 = vmatpush2.msra.mxu0 0.0
    %2922 = vmatprep.subr.mxu0 0.0
    %2923 = vmatpush2.msra.mxu0 0.0
    %2924 = vmatprep.subr.mxu0 0.0
    %2925 = vmatpush2.msra.mxu0 0.0
    %2926 = vmatprep.mubr.f32.mxu0 0.0
    %2927 = vmatmul.mubr.f32.gmra.mxu0 %v2860
    %v2928 = vpop.f32.mrf.mxu0
    %v2929 = vadd.f32 0.0, %v2928
    %v2930 = vpop.f32.mrf.mxu0
    %2931 = vdwg.mxu0
    %v2932 = vsel %vm1203, %v987, 0
    %2934 = vmatprep.subr.mxu0 0.0
    %2935 = vmatpush1.msra.mxu0 0.0
    %2936 = vmatprep.subr.mxu0 0.0
    %2937 = vmatpush1.msra.mxu0 0.0
    %2938 = vmatprep.subr.mxu0 0.0
    %2939 = vmatpush1.msra.mxu0 0.0
    %2940 = vmatprep.subr.mxu0 0.0
    %2941 = vmatpush1.msra.mxu0 0.0
    %2942 = vmatprep.subr.mxu0 0.0
    %2943 = vmatpush1.msra.mxu0 0.0
    %2944 = vmatprep.subr.mxu0 0.0
    %2945 = vmatpush1.msra.mxu0 0.0
    %2946 = vmatprep.subr.mxu0 0.0
    %2947 = vmatpush1.msra.mxu0 0.0
    %2948 = vmatprep.subr.mxu0 0.0
    %2949 = vmatpush1.msra.mxu0 0.0
    %2950 = vmatprep.subr.mxu0 0.0
    %2951 = vmatpush1.msra.mxu0 0.0
    %2952 = vmatprep.subr.mxu0 0.0
    %2953 = vmatpush1.msra.mxu0 0.0
    %2954 = vmatprep.subr.mxu0 0.0
    %2955 = vmatpush1.msra.mxu0 0.0
    %2956 = vmatprep.subr.mxu0 0.0
    %2957 = vmatpush1.msra.mxu0 0.0
    %2958 = vmatprep.subr.mxu0 0.0
    %2959 = vmatpush1.msra.mxu0 0.0
    %2960 = vmatprep.subr.mxu0 0.0
    %2961 = vmatpush1.msra.mxu0 0.0
    %2962 = vmatprep.subr.mxu0 0.0
    %2963 = vmatpush1.msra.mxu0 %v1148
    %2964 = vmatprep.subr.mxu0 0.0
    %2965 = vmatpush1.msra.mxu0 %v1147
    %2966 = vmatprep.subr.mxu0 0.0
    %2967 = vmatpush2.msra.mxu0 0.0
    %2968 = vmatprep.subr.mxu0 0.0
    %2969 = vmatpush2.msra.mxu0 0.0
    %2970 = vmatprep.subr.mxu0 0.0
    %2971 = vmatpush2.msra.mxu0 0.0
    %2972 = vmatprep.subr.mxu0 0.0
    %2973 = vmatpush2.msra.mxu0 0.0
    %2974 = vmatprep.subr.mxu0 0.0
    %2975 = vmatpush2.msra.mxu0 0.0
    %2976 = vmatprep.subr.mxu0 0.0
    %2977 = vmatpush2.msra.mxu0 0.0
    %2978 = vmatprep.subr.mxu0 0.0
    %2979 = vmatpush2.msra.mxu0 0.0
    %2980 = vmatprep.subr.mxu0 0.0
    %2981 = vmatpush2.msra.mxu0 0.0
    %2982 = vmatprep.subr.mxu0 0.0
    %2983 = vmatpush2.msra.mxu0 0.0
    %2984 = vmatprep.subr.mxu0 0.0
    %2985 = vmatpush2.msra.mxu0 0.0
    %2986 = vmatprep.subr.mxu0 0.0
    %2987 = vmatpush2.msra.mxu0 0.0
    %2988 = vmatprep.subr.mxu0 0.0
    %2989 = vmatpush2.msra.mxu0 0.0
    %2990 = vmatprep.subr.mxu0 0.0
    %2991 = vmatpush2.msra.mxu0 0.0
    %2992 = vmatprep.subr.mxu0 0.0
    %2993 = vmatpush2.msra.mxu0 0.0
    %2994 = vmatprep.subr.mxu0 0.0
    %2995 = vmatpush2.msra.mxu0 0.0
    %2996 = vmatprep.subr.mxu0 0.0
    %2997 = vmatpush2.msra.mxu0 0.0
    %2998 = vmatprep.mubr.f32.mxu0 0.0
    %2999 = vmatmul.mubr.f32.gmra.mxu0 %v2932
    %v3000 = vpop.f32.mrf.mxu0
    %v3001 = vadd.f32 0.0, %v3000
    %v3002 = vpop.f32.mrf.mxu0
    %3003 = vdwg.mxu0
    %v3004 = vsel %vm1203, %v995, 0
    %3006 = vmatprep.subr.mxu0 0.0
    %3007 = vmatpush1.msra.mxu0 0.0
    %3008 = vmatprep.subr.mxu0 0.0
    %3009 = vmatpush1.msra.mxu0 0.0
    %3010 = vmatprep.subr.mxu0 0.0
    %3011 = vmatpush1.msra.mxu0 0.0
    %3012 = vmatprep.subr.mxu0 0.0
    %3013 = vmatpush1.msra.mxu0 0.0
    %3014 = vmatprep.subr.mxu0 0.0
    %3015 = vmatpush1.msra.mxu0 0.0
    %3016 = vmatprep.subr.mxu0 0.0
    %3017 = vmatpush1.msra.mxu0 0.0
    %3018 = vmatprep.subr.mxu0 0.0
    %3019 = vmatpush1.msra.mxu0 0.0
    %3020 = vmatprep.subr.mxu0 0.0
    %3021 = vmatpush1.msra.mxu0 0.0
    %3022 = vmatprep.subr.mxu0 0.0
    %3023 = vmatpush1.msra.mxu0 0.0
    %3024 = vmatprep.subr.mxu0 0.0
    %3025 = vmatpush1.msra.mxu0 0.0
    %3026 = vmatprep.subr.mxu0 0.0
    %3027 = vmatpush1.msra.mxu0 0.0
    %3028 = vmatprep.subr.mxu0 0.0
    %3029 = vmatpush1.msra.mxu0 0.0
    %3030 = vmatprep.subr.mxu0 0.0
    %3031 = vmatpush1.msra.mxu0 0.0
    %3032 = vmatprep.subr.mxu0 0.0
    %3033 = vmatpush1.msra.mxu0 0.0
    %3034 = vmatprep.subr.mxu0 0.0
    %3035 = vmatpush1.msra.mxu0 %v1150
    %3036 = vmatprep.subr.mxu0 0.0
    %3037 = vmatpush1.msra.mxu0 %v1149
    %3038 = vmatprep.subr.mxu0 0.0
    %3039 = vmatpush2.msra.mxu0 0.0
    %3040 = vmatprep.subr.mxu0 0.0
    %3041 = vmatpush2.msra.mxu0 0.0
    %3042 = vmatprep.subr.mxu0 0.0
    %3043 = vmatpush2.msra.mxu0 0.0
    %3044 = vmatprep.subr.mxu0 0.0
    %3045 = vmatpush2.msra.mxu0 0.0
    %3046 = vmatprep.subr.mxu0 0.0
    %3047 = vmatpush2.msra.mxu0 0.0
    %3048 = vmatprep.subr.mxu0 0.0
    %3049 = vmatpush2.msra.mxu0 0.0
    %3050 = vmatprep.subr.mxu0 0.0
    %3051 = vmatpush2.msra.mxu0 0.0
    %3052 = vmatprep.subr.mxu0 0.0
    %3053 = vmatpush2.msra.mxu0 0.0
    %3054 = vmatprep.subr.mxu0 0.0
    %3055 = vmatpush2.msra.mxu0 0.0
    %3056 = vmatprep.subr.mxu0 0.0
    %3057 = vmatpush2.msra.mxu0 0.0
    %3058 = vmatprep.subr.mxu0 0.0
    %3059 = vmatpush2.msra.mxu0 0.0
    %3060 = vmatprep.subr.mxu0 0.0
    %3061 = vmatpush2.msra.mxu0 0.0
    %3062 = vmatprep.subr.mxu0 0.0
    %3063 = vmatpush2.msra.mxu0 0.0
    %3064 = vmatprep.subr.mxu0 0.0
    %3065 = vmatpush2.msra.mxu0 0.0
    %3066 = vmatprep.subr.mxu0 0.0
    %3067 = vmatpush2.msra.mxu0 0.0
    %3068 = vmatprep.subr.mxu0 0.0
    %3069 = vmatpush2.msra.mxu0 0.0
    %3070 = vmatprep.mubr.f32.mxu0 0.0
    %3071 = vmatmul.mubr.f32.gmra.mxu0 %v3004
    %v3072 = vpop.f32.mrf.mxu0
    %v3073 = vadd.f32 0.0, %v3072
    %v3074 = vpop.f32.mrf.mxu0
    %3075 = vdwg.mxu0
    %v3076 = vsel %vm1203, %v994, 0
    %3078 = vmatprep.subr.mxu0 0.0
    %3079 = vmatpush1.msra.mxu0 0.0
    %3080 = vmatprep.subr.mxu0 0.0
    %3081 = vmatpush1.msra.mxu0 0.0
    %3082 = vmatprep.subr.mxu0 0.0
    %3083 = vmatpush1.msra.mxu0 0.0
    %3084 = vmatprep.subr.mxu0 0.0
    %3085 = vmatpush1.msra.mxu0 0.0
    %3086 = vmatprep.subr.mxu0 0.0
    %3087 = vmatpush1.msra.mxu0 0.0
    %3088 = vmatprep.subr.mxu0 0.0
    %3089 = vmatpush1.msra.mxu0 0.0
    %3090 = vmatprep.subr.mxu0 0.0
    %3091 = vmatpush1.msra.mxu0 0.0
    %3092 = vmatprep.subr.mxu0 0.0
    %3093 = vmatpush1.msra.mxu0 0.0
    %3094 = vmatprep.subr.mxu0 0.0
    %3095 = vmatpush1.msra.mxu0 0.0
    %3096 = vmatprep.subr.mxu0 0.0
    %3097 = vmatpush1.msra.mxu0 0.0
    %3098 = vmatprep.subr.mxu0 0.0
    %3099 = vmatpush1.msra.mxu0 0.0
    %3100 = vmatprep.subr.mxu0 0.0
    %3101 = vmatpush1.msra.mxu0 0.0
    %3102 = vmatprep.subr.mxu0 0.0
    %3103 = vmatpush1.msra.mxu0 0.0
    %3104 = vmatprep.subr.mxu0 0.0
    %3105 = vmatpush1.msra.mxu0 0.0
    %3106 = vmatprep.subr.mxu0 0.0
    %3107 = vmatpush1.msra.mxu0 %v1152
    %3108 = vmatprep.subr.mxu0 0.0
    %3109 = vmatpush1.msra.mxu0 %v1151
    %3110 = vmatprep.subr.mxu0 0.0
    %3111 = vmatpush2.msra.mxu0 0.0
    %3112 = vmatprep.subr.mxu0 0.0
    %3113 = vmatpush2.msra.mxu0 0.0
    %3114 = vmatprep.subr.mxu0 0.0
    %3115 = vmatpush2.msra.mxu0 0.0
    %3116 = vmatprep.subr.mxu0 0.0
    %3117 = vmatpush2.msra.mxu0 0.0
    %3118 = vmatprep.subr.mxu0 0.0
    %3119 = vmatpush2.msra.mxu0 0.0
    %3120 = vmatprep.subr.mxu0 0.0
    %3121 = vmatpush2.msra.mxu0 0.0
    %3122 = vmatprep.subr.mxu0 0.0
    %3123 = vmatpush2.msra.mxu0 0.0
    %3124 = vmatprep.subr.mxu0 0.0
    %3125 = vmatpush2.msra.mxu0 0.0
    %3126 = vmatprep.subr.mxu0 0.0
    %3127 = vmatpush2.msra.mxu0 0.0
    %3128 = vmatprep.subr.mxu0 0.0
    %3129 = vmatpush2.msra.mxu0 0.0
    %3130 = vmatprep.subr.mxu0 0.0
    %3131 = vmatpush2.msra.mxu0 0.0
    %3132 = vmatprep.subr.mxu0 0.0
    %3133 = vmatpush2.msra.mxu0 0.0
    %3134 = vmatprep.subr.mxu0 0.0
    %3135 = vmatpush2.msra.mxu0 0.0
    %3136 = vmatprep.subr.mxu0 0.0
    %3137 = vmatpush2.msra.mxu0 0.0
    %3138 = vmatprep.subr.mxu0 0.0
    %3139 = vmatpush2.msra.mxu0 0.0
    %3140 = vmatprep.subr.mxu0 0.0
    %3141 = vmatpush2.msra.mxu0 0.0
    %3142 = vmatprep.mubr.f32.mxu0 0.0
    %3143 = vmatmul.mubr.f32.gmra.mxu0 %v3076
    %v3144 = vpop.f32.mrf.mxu0
    %v3145 = vadd.f32 0.0, %v3144
    %v3146 = vpop.f32.mrf.mxu0
    %3147 = vdwg.mxu0
    %v3148 = vsel %vm1203, %v996, 0
    %3150 = vmatprep.subr.mxu0 0.0
    %3151 = vmatpush1.msra.mxu0 0.0
    %3152 = vmatprep.subr.mxu0 0.0
    %3153 = vmatpush1.msra.mxu0 0.0
    %3154 = vmatprep.subr.mxu0 0.0
    %3155 = vmatpush1.msra.mxu0 0.0
    %3156 = vmatprep.subr.mxu0 0.0
    %3157 = vmatpush1.msra.mxu0 0.0
    %3158 = vmatprep.subr.mxu0 0.0
    %3159 = vmatpush1.msra.mxu0 0.0
    %3160 = vmatprep.subr.mxu0 0.0
    %3161 = vmatpush1.msra.mxu0 0.0
    %3162 = vmatprep.subr.mxu0 0.0
    %3163 = vmatpush1.msra.mxu0 0.0
    %3164 = vmatprep.subr.mxu0 0.0
    %3165 = vmatpush1.msra.mxu0 0.0
    %3166 = vmatprep.subr.mxu0 0.0
    %3167 = vmatpush1.msra.mxu0 0.0
    %3168 = vmatprep.subr.mxu0 0.0
    %3169 = vmatpush1.msra.mxu0 0.0
    %3170 = vmatprep.subr.mxu0 0.0
    %3171 = vmatpush1.msra.mxu0 0.0
    %3172 = vmatprep.subr.mxu0 0.0
    %3173 = vmatpush1.msra.mxu0 0.0
    %3174 = vmatprep.subr.mxu0 0.0
    %3175 = vmatpush1.msra.mxu0 0.0
    %3176 = vmatprep.subr.mxu0 0.0
    %3177 = vmatpush1.msra.mxu0 0.0
    %3178 = vmatprep.subr.mxu0 0.0
    %3179 = vmatpush1.msra.mxu0 %v1154
    %3180 = vmatprep.subr.mxu0 0.0
    %3181 = vmatpush1.msra.mxu0 %v1153
    %3182 = vmatprep.subr.mxu0 0.0
    %3183 = vmatpush2.msra.mxu0 0.0
    %3184 = vmatprep.subr.mxu0 0.0
    %3185 = vmatpush2.msra.mxu0 0.0
    %3186 = vmatprep.subr.mxu0 0.0
    %3187 = vmatpush2.msra.mxu0 0.0
    %3188 = vmatprep.subr.mxu0 0.0
    %3189 = vmatpush2.msra.mxu0 0.0
    %3190 = vmatprep.subr.mxu0 0.0
    %3191 = vmatpush2.msra.mxu0 0.0
    %3192 = vmatprep.subr.mxu0 0.0
    %3193 = vmatpush2.msra.mxu0 0.0
    %3194 = vmatprep.subr.mxu0 0.0
    %3195 = vmatpush2.msra.mxu0 0.0
    %3196 = vmatprep.subr.mxu0 0.0
    %3197 = vmatpush2.msra.mxu0 0.0
    %3198 = vmatprep.subr.mxu0 0.0
    %3199 = vmatpush2.msra.mxu0 0.0
    %3200 = vmatprep.subr.mxu0 0.0
    %3201 = vmatpush2.msra.mxu0 0.0
    %3202 = vmatprep.subr.mxu0 0.0
    %3203 = vmatpush2.msra.mxu0 0.0
    %3204 = vmatprep.subr.mxu0 0.0
    %3205 = vmatpush2.msra.mxu0 0.0
    %3206 = vmatprep.subr.mxu0 0.0
    %3207 = vmatpush2.msra.mxu0 0.0
    %3208 = vmatprep.subr.mxu0 0.0
    %3209 = vmatpush2.msra.mxu0 0.0
    %3210 = vmatprep.subr.mxu0 0.0
    %3211 = vmatpush2.msra.mxu0 0.0
    %3212 = vmatprep.subr.mxu0 0.0
    %3213 = vmatpush2.msra.mxu0 0.0
    %3214 = vmatprep.mubr.f32.mxu0 0.0
    %3215 = vmatmul.mubr.f32.gmra.mxu0 %v3148
    %v3216 = vpop.f32.mrf.mxu0
    %v3217 = vadd.f32 0.0, %v3216
    %v3218 = vpop.f32.mrf.mxu0
    %3219 = vdwg.mxu0
    %v3220 = vsel %vm1203, %v1004, 0
    %3222 = vmatprep.subr.mxu0 0.0
    %3223 = vmatpush1.msra.mxu0 0.0
    %3224 = vmatprep.subr.mxu0 0.0
    %3225 = vmatpush1.msra.mxu0 0.0
    %3226 = vmatprep.subr.mxu0 0.0
    %3227 = vmatpush1.msra.mxu0 0.0
    %3228 = vmatprep.subr.mxu0 0.0
    %3229 = vmatpush1.msra.mxu0 0.0
    %3230 = vmatprep.subr.mxu0 0.0
    %3231 = vmatpush1.msra.mxu0 0.0
    %3232 = vmatprep.subr.mxu0 0.0
    %3233 = vmatpush1.msra.mxu0 0.0
    %3234 = vmatprep.subr.mxu0 0.0
    %3235 = vmatpush1.msra.mxu0 0.0
    %3236 = vmatprep.subr.mxu0 0.0
    %3237 = vmatpush1.msra.mxu0 0.0
    %3238 = vmatprep.subr.mxu0 0.0
    %3239 = vmatpush1.msra.mxu0 0.0
    %3240 = vmatprep.subr.mxu0 0.0
    %3241 = vmatpush1.msra.mxu0 0.0
    %3242 = vmatprep.subr.mxu0 0.0
    %3243 = vmatpush1.msra.mxu0 0.0
    %3244 = vmatprep.subr.mxu0 0.0
    %3245 = vmatpush1.msra.mxu0 0.0
    %3246 = vmatprep.subr.mxu0 0.0
    %3247 = vmatpush1.msra.mxu0 0.0
    %3248 = vmatprep.subr.mxu0 0.0
    %3249 = vmatpush1.msra.mxu0 0.0
    %3250 = vmatprep.subr.mxu0 0.0
    %3251 = vmatpush1.msra.mxu0 %v1156
    %3252 = vmatprep.subr.mxu0 0.0
    %3253 = vmatpush1.msra.mxu0 %v1155
    %3254 = vmatprep.subr.mxu0 0.0
    %3255 = vmatpush2.msra.mxu0 0.0
    %3256 = vmatprep.subr.mxu0 0.0
    %3257 = vmatpush2.msra.mxu0 0.0
    %3258 = vmatprep.subr.mxu0 0.0
    %3259 = vmatpush2.msra.mxu0 0.0
    %3260 = vmatprep.subr.mxu0 0.0
    %3261 = vmatpush2.msra.mxu0 0.0
    %3262 = vmatprep.subr.mxu0 0.0
    %3263 = vmatpush2.msra.mxu0 0.0
    %3264 = vmatprep.subr.mxu0 0.0
    %3265 = vmatpush2.msra.mxu0 0.0
    %3266 = vmatprep.subr.mxu0 0.0
    %3267 = vmatpush2.msra.mxu0 0.0
    %3268 = vmatprep.subr.mxu0 0.0
    %3269 = vmatpush2.msra.mxu0 0.0
    %3270 = vmatprep.subr.mxu0 0.0
    %3271 = vmatpush2.msra.mxu0 0.0
    %3272 = vmatprep.subr.mxu0 0.0
    %3273 = vmatpush2.msra.mxu0 0.0
    %3274 = vmatprep.subr.mxu0 0.0
    %3275 = vmatpush2.msra.mxu0 0.0
    %3276 = vmatprep.subr.mxu0 0.0
    %3277 = vmatpush2.msra.mxu0 0.0
    %3278 = vmatprep.subr.mxu0 0.0
    %3279 = vmatpush2.msra.mxu0 0.0
    %3280 = vmatprep.subr.mxu0 0.0
    %3281 = vmatpush2.msra.mxu0 0.0
    %3282 = vmatprep.subr.mxu0 0.0
    %3283 = vmatpush2.msra.mxu0 0.0
    %3284 = vmatprep.subr.mxu0 0.0
    %3285 = vmatpush2.msra.mxu0 0.0
    %3286 = vmatprep.mubr.f32.mxu0 0.0
    %3287 = vmatmul.mubr.f32.gmra.mxu0 %v3220
    %v3288 = vpop.f32.mrf.mxu0
    %v3289 = vadd.f32 0.0, %v3288
    %v3290 = vpop.f32.mrf.mxu0
    %3291 = vdwg.mxu0
    %v3292 = vsel %vm1203, %v1012, 0
    %3294 = vmatprep.subr.mxu0 0.0
    %3295 = vmatpush1.msra.mxu0 0.0
    %3296 = vmatprep.subr.mxu0 0.0
    %3297 = vmatpush1.msra.mxu0 0.0
    %3298 = vmatprep.subr.mxu0 0.0
    %3299 = vmatpush1.msra.mxu0 0.0
    %3300 = vmatprep.subr.mxu0 0.0
    %3301 = vmatpush1.msra.mxu0 0.0
    %3302 = vmatprep.subr.mxu0 0.0
    %3303 = vmatpush1.msra.mxu0 0.0
    %3304 = vmatprep.subr.mxu0 0.0
    %3305 = vmatpush1.msra.mxu0 0.0
    %3306 = vmatprep.subr.mxu0 0.0
    %3307 = vmatpush1.msra.mxu0 0.0
    %3308 = vmatprep.subr.mxu0 0.0
    %3309 = vmatpush1.msra.mxu0 0.0
    %3310 = vmatprep.subr.mxu0 0.0
    %3311 = vmatpush1.msra.mxu0 0.0
    %3312 = vmatprep.subr.mxu0 0.0
    %3313 = vmatpush1.msra.mxu0 0.0
    %3314 = vmatprep.subr.mxu0 0.0
    %3315 = vmatpush1.msra.mxu0 0.0
    %3316 = vmatprep.subr.mxu0 0.0
    %3317 = vmatpush1.msra.mxu0 0.0
    %3318 = vmatprep.subr.mxu0 0.0
    %3319 = vmatpush1.msra.mxu0 0.0
    %3320 = vmatprep.subr.mxu0 0.0
    %3321 = vmatpush1.msra.mxu0 0.0
    %3322 = vmatprep.subr.mxu0 0.0
    %3323 = vmatpush1.msra.mxu0 %v1158
    %3324 = vmatprep.subr.mxu0 0.0
    %3325 = vmatpush1.msra.mxu0 %v1157
    %3326 = vmatprep.subr.mxu0 0.0
    %3327 = vmatpush2.msra.mxu0 0.0
    %3328 = vmatprep.subr.mxu0 0.0
    %3329 = vmatpush2.msra.mxu0 0.0
    %3330 = vmatprep.subr.mxu0 0.0
    %3331 = vmatpush2.msra.mxu0 0.0
    %3332 = vmatprep.subr.mxu0 0.0
    %3333 = vmatpush2.msra.mxu0 0.0
    %3334 = vmatprep.subr.mxu0 0.0
    %3335 = vmatpush2.msra.mxu0 0.0
    %3336 = vmatprep.subr.mxu0 0.0
    %3337 = vmatpush2.msra.mxu0 0.0
    %3338 = vmatprep.subr.mxu0 0.0
    %3339 = vmatpush2.msra.mxu0 0.0
    %3340 = vmatprep.subr.mxu0 0.0
    %3341 = vmatpush2.msra.mxu0 0.0
    %3342 = vmatprep.subr.mxu0 0.0
    %3343 = vmatpush2.msra.mxu0 0.0
    %3344 = vmatprep.subr.mxu0 0.0
    %3345 = vmatpush2.msra.mxu0 0.0
    %3346 = vmatprep.subr.mxu0 0.0
    %3347 = vmatpush2.msra.mxu0 0.0
    %3348 = vmatprep.subr.mxu0 0.0
    %3349 = vmatpush2.msra.mxu0 0.0
    %3350 = vmatprep.subr.mxu0 0.0
    %3351 = vmatpush2.msra.mxu0 0.0
    %3352 = vmatprep.subr.mxu0 0.0
    %3353 = vmatpush2.msra.mxu0 0.0
    %3354 = vmatprep.subr.mxu0 0.0
    %3355 = vmatpush2.msra.mxu0 0.0
    %3356 = vmatprep.subr.mxu0 0.0
    %3357 = vmatpush2.msra.mxu0 0.0
    %3358 = vmatprep.mubr.f32.mxu0 0.0
    %3359 = vmatmul.mubr.f32.gmra.mxu0 %v3292
    %v3360 = vpop.f32.mrf.mxu0
    %v3361 = vadd.f32 0.0, %v3360
    %v3362 = vpop.f32.mrf.mxu0
    %3363 = vdwg.mxu0
    %v3364 = vsel %vm1203, %v1011, 0
    %3366 = vmatprep.subr.mxu0 0.0
    %3367 = vmatpush1.msra.mxu0 0.0
    %3368 = vmatprep.subr.mxu0 0.0
    %3369 = vmatpush1.msra.mxu0 0.0
    %3370 = vmatprep.subr.mxu0 0.0
    %3371 = vmatpush1.msra.mxu0 0.0
    %3372 = vmatprep.subr.mxu0 0.0
    %3373 = vmatpush1.msra.mxu0 0.0
    %3374 = vmatprep.subr.mxu0 0.0
    %3375 = vmatpush1.msra.mxu0 0.0
    %3376 = vmatprep.subr.mxu0 0.0
    %3377 = vmatpush1.msra.mxu0 0.0
    %3378 = vmatprep.subr.mxu0 0.0
    %3379 = vmatpush1.msra.mxu0 0.0
    %3380 = vmatprep.subr.mxu0 0.0
    %3381 = vmatpush1.msra.mxu0 0.0
    %3382 = vmatprep.subr.mxu0 0.0
    %3383 = vmatpush1.msra.mxu0 0.0
    %3384 = vmatprep.subr.mxu0 0.0
    %3385 = vmatpush1.msra.mxu0 0.0
    %3386 = vmatprep.subr.mxu0 0.0
    %3387 = vmatpush1.msra.mxu0 0.0
    %3388 = vmatprep.subr.mxu0 0.0
    %3389 = vmatpush1.msra.mxu0 0.0
    %3390 = vmatprep.subr.mxu0 0.0
    %3391 = vmatpush1.msra.mxu0 0.0
    %3392 = vmatprep.subr.mxu0 0.0
    %3393 = vmatpush1.msra.mxu0 0.0
    %3394 = vmatprep.subr.mxu0 0.0
    %3395 = vmatpush1.msra.mxu0 %v1160
    %3396 = vmatprep.subr.mxu0 0.0
    %3397 = vmatpush1.msra.mxu0 %v1159
    %3398 = vmatprep.subr.mxu0 0.0
    %3399 = vmatpush2.msra.mxu0 0.0
    %3400 = vmatprep.subr.mxu0 0.0
    %3401 = vmatpush2.msra.mxu0 0.0
    %3402 = vmatprep.subr.mxu0 0.0
    %3403 = vmatpush2.msra.mxu0 0.0
    %3404 = vmatprep.subr.mxu0 0.0
    %3405 = vmatpush2.msra.mxu0 0.0
    %3406 = vmatprep.subr.mxu0 0.0
    %3407 = vmatpush2.msra.mxu0 0.0
    %3408 = vmatprep.subr.mxu0 0.0
    %3409 = vmatpush2.msra.mxu0 0.0
    %3410 = vmatprep.subr.mxu0 0.0
    %3411 = vmatpush2.msra.mxu0 0.0
    %3412 = vmatprep.subr.mxu0 0.0
    %3413 = vmatpush2.msra.mxu0 0.0
    %3414 = vmatprep.subr.mxu0 0.0
    %3415 = vmatpush2.msra.mxu0 0.0
    %3416 = vmatprep.subr.mxu0 0.0
    %3417 = vmatpush2.msra.mxu0 0.0
    %3418 = vmatprep.subr.mxu0 0.0
    %3419 = vmatpush2.msra.mxu0 0.0
    %3420 = vmatprep.subr.mxu0 0.0
    %3421 = vmatpush2.msra.mxu0 0.0
    %3422 = vmatprep.subr.mxu0 0.0
    %3423 = vmatpush2.msra.mxu0 0.0
    %3424 = vmatprep.subr.mxu0 0.0
    %3425 = vmatpush2.msra.mxu0 0.0
    %3426 = vmatprep.subr.mxu0 0.0
    %3427 = vmatpush2.msra.mxu0 0.0
    %3428 = vmatprep.subr.mxu0 0.0
    %3429 = vmatpush2.msra.mxu0 0.0
    %3430 = vmatprep.mubr.f32.mxu0 0.0
    %3431 = vmatmul.mubr.f32.gmra.mxu0 %v3364
    %v3432 = vpop.f32.mrf.mxu0
    %v3433 = vadd.f32 0.0, %v3432
    %v3434 = vpop.f32.mrf.mxu0
    %3435 = vdwg.mxu0
    %v3436 = vsel %vm1203, %v1013, 0
    %3438 = vmatprep.subr.mxu0 0.0
    %3439 = vmatpush1.msra.mxu0 0.0
    %3440 = vmatprep.subr.mxu0 0.0
    %3441 = vmatpush1.msra.mxu0 0.0
    %3442 = vmatprep.subr.mxu0 0.0
    %3443 = vmatpush1.msra.mxu0 0.0
    %3444 = vmatprep.subr.mxu0 0.0
    %3445 = vmatpush1.msra.mxu0 0.0
    %3446 = vmatprep.subr.mxu0 0.0
    %3447 = vmatpush1.msra.mxu0 0.0
    %3448 = vmatprep.subr.mxu0 0.0
    %3449 = vmatpush1.msra.mxu0 0.0
    %3450 = vmatprep.subr.mxu0 0.0
    %3451 = vmatpush1.msra.mxu0 0.0
    %3452 = vmatprep.subr.mxu0 0.0
    %3453 = vmatpush1.msra.mxu0 0.0
    %3454 = vmatprep.subr.mxu0 0.0
    %3455 = vmatpush1.msra.mxu0 0.0
    %3456 = vmatprep.subr.mxu0 0.0
    %3457 = vmatpush1.msra.mxu0 0.0
    %3458 = vmatprep.subr.mxu0 0.0
    %3459 = vmatpush1.msra.mxu0 0.0
    %3460 = vmatprep.subr.mxu0 0.0
    %3461 = vmatpush1.msra.mxu0 0.0
    %3462 = vmatprep.subr.mxu0 0.0
    %3463 = vmatpush1.msra.mxu0 0.0
    %3464 = vmatprep.subr.mxu0 0.0
    %3465 = vmatpush1.msra.mxu0 0.0
    %3466 = vmatprep.subr.mxu0 0.0
    %3467 = vmatpush1.msra.mxu0 %v1162
    %3468 = vmatprep.subr.mxu0 0.0
    %3469 = vmatpush1.msra.mxu0 %v1161
    %3470 = vmatprep.subr.mxu0 0.0
    %3471 = vmatpush2.msra.mxu0 0.0
    %3472 = vmatprep.subr.mxu0 0.0
    %3473 = vmatpush2.msra.mxu0 0.0
    %3474 = vmatprep.subr.mxu0 0.0
    %3475 = vmatpush2.msra.mxu0 0.0
    %3476 = vmatprep.subr.mxu0 0.0
    %3477 = vmatpush2.msra.mxu0 0.0
    %3478 = vmatprep.subr.mxu0 0.0
    %3479 = vmatpush2.msra.mxu0 0.0
    %3480 = vmatprep.subr.mxu0 0.0
    %3481 = vmatpush2.msra.mxu0 0.0
    %3482 = vmatprep.subr.mxu0 0.0
    %3483 = vmatpush2.msra.mxu0 0.0
    %3484 = vmatprep.subr.mxu0 0.0
    %3485 = vmatpush2.msra.mxu0 0.0
    %3486 = vmatprep.subr.mxu0 0.0
    %3487 = vmatpush2.msra.mxu0 0.0
    %3488 = vmatprep.subr.mxu0 0.0
    %3489 = vmatpush2.msra.mxu0 0.0
    %3490 = vmatprep.subr.mxu0 0.0
    %3491 = vmatpush2.msra.mxu0 0.0
    %3492 = vmatprep.subr.mxu0 0.0
    %3493 = vmatpush2.msra.mxu0 0.0
    %3494 = vmatprep.subr.mxu0 0.0
    %3495 = vmatpush2.msra.mxu0 0.0
    %3496 = vmatprep.subr.mxu0 0.0
    %3497 = vmatpush2.msra.mxu0 0.0
    %3498 = vmatprep.subr.mxu0 0.0
    %3499 = vmatpush2.msra.mxu0 0.0
    %3500 = vmatprep.subr.mxu0 0.0
    %3501 = vmatpush2.msra.mxu0 0.0
    %3502 = vmatprep.mubr.f32.mxu0 0.0
    %3503 = vmatmul.mubr.f32.gmra.mxu0 %v3436
    %v3504 = vpop.f32.mrf.mxu0
    %v3505 = vadd.f32 0.0, %v3504
    %v3506 = vpop.f32.mrf.mxu0
    %3507 = vdwg.mxu0
    %v3508 = vsel %vm1203, %v1021, 0
    %3510 = vmatprep.subr.mxu0 0.0
    %3511 = vmatpush1.msra.mxu0 0.0
    %3512 = vmatprep.subr.mxu0 0.0
    %3513 = vmatpush1.msra.mxu0 0.0
    %3514 = vmatprep.subr.mxu0 0.0
    %3515 = vmatpush1.msra.mxu0 0.0
    %3516 = vmatprep.subr.mxu0 0.0
    %3517 = vmatpush1.msra.mxu0 0.0
    %3518 = vmatprep.subr.mxu0 0.0
    %3519 = vmatpush1.msra.mxu0 0.0
    %3520 = vmatprep.subr.mxu0 0.0
    %3521 = vmatpush1.msra.mxu0 0.0
    %3522 = vmatprep.subr.mxu0 0.0
    %3523 = vmatpush1.msra.mxu0 0.0
    %3524 = vmatprep.subr.mxu0 0.0
    %3525 = vmatpush1.msra.mxu0 0.0
    %3526 = vmatprep.subr.mxu0 0.0
    %3527 = vmatpush1.msra.mxu0 0.0
    %3528 = vmatprep.subr.mxu0 0.0
    %3529 = vmatpush1.msra.mxu0 0.0
    %3530 = vmatprep.subr.mxu0 0.0
    %3531 = vmatpush1.msra.mxu0 0.0
    %3532 = vmatprep.subr.mxu0 0.0
    %3533 = vmatpush1.msra.mxu0 0.0
    %3534 = vmatprep.subr.mxu0 0.0
    %3535 = vmatpush1.msra.mxu0 0.0
    %3536 = vmatprep.subr.mxu0 0.0
    %3537 = vmatpush1.msra.mxu0 0.0
    %3538 = vmatprep.subr.mxu0 0.0
    %3539 = vmatpush1.msra.mxu0 %v1164
    %3540 = vmatprep.subr.mxu0 0.0
    %3541 = vmatpush1.msra.mxu0 %v1163
    %3542 = vmatprep.subr.mxu0 0.0
    %3543 = vmatpush2.msra.mxu0 0.0
    %3544 = vmatprep.subr.mxu0 0.0
    %3545 = vmatpush2.msra.mxu0 0.0
    %3546 = vmatprep.subr.mxu0 0.0
    %3547 = vmatpush2.msra.mxu0 0.0
    %3548 = vmatprep.subr.mxu0 0.0
    %3549 = vmatpush2.msra.mxu0 0.0
    %3550 = vmatprep.subr.mxu0 0.0
    %3551 = vmatpush2.msra.mxu0 0.0
    %3552 = vmatprep.subr.mxu0 0.0
    %3553 = vmatpush2.msra.mxu0 0.0
    %3554 = vmatprep.subr.mxu0 0.0
    %3555 = vmatpush2.msra.mxu0 0.0
    %3556 = vmatprep.subr.mxu0 0.0
    %3557 = vmatpush2.msra.mxu0 0.0
    %3558 = vmatprep.subr.mxu0 0.0
    %3559 = vmatpush2.msra.mxu0 0.0
    %3560 = vmatprep.subr.mxu0 0.0
    %3561 = vmatpush2.msra.mxu0 0.0
    %3562 = vmatprep.subr.mxu0 0.0
    %3563 = vmatpush2.msra.mxu0 0.0
    %3564 = vmatprep.subr.mxu0 0.0
    %3565 = vmatpush2.msra.mxu0 0.0
    %3566 = vmatprep.subr.mxu0 0.0
    %3567 = vmatpush2.msra.mxu0 0.0
    %3568 = vmatprep.subr.mxu0 0.0
    %3569 = vmatpush2.msra.mxu0 0.0
    %3570 = vmatprep.subr.mxu0 0.0
    %3571 = vmatpush2.msra.mxu0 0.0
    %3572 = vmatprep.subr.mxu0 0.0
    %3573 = vmatpush2.msra.mxu0 0.0
    %3574 = vmatprep.mubr.f32.mxu0 0.0
    %3575 = vmatmul.mubr.f32.gmra.mxu0 %v3508
    %v3576 = vpop.f32.mrf.mxu0
    %v3577 = vadd.f32 0.0, %v3576
    %v3578 = vpop.f32.mrf.mxu0
    %3579 = vdwg.mxu0
    %v3580 = vsel %vm1203, %v1029, 0
    %3582 = vmatprep.subr.mxu0 0.0
    %3583 = vmatpush1.msra.mxu0 0.0
    %3584 = vmatprep.subr.mxu0 0.0
    %3585 = vmatpush1.msra.mxu0 0.0
    %3586 = vmatprep.subr.mxu0 0.0
    %3587 = vmatpush1.msra.mxu0 0.0
    %3588 = vmatprep.subr.mxu0 0.0
    %3589 = vmatpush1.msra.mxu0 0.0
    %3590 = vmatprep.subr.mxu0 0.0
    %3591 = vmatpush1.msra.mxu0 0.0
    %3592 = vmatprep.subr.mxu0 0.0
    %3593 = vmatpush1.msra.mxu0 0.0
    %3594 = vmatprep.subr.mxu0 0.0
    %3595 = vmatpush1.msra.mxu0 0.0
    %3596 = vmatprep.subr.mxu0 0.0
    %3597 = vmatpush1.msra.mxu0 0.0
    %3598 = vmatprep.subr.mxu0 0.0
    %3599 = vmatpush1.msra.mxu0 0.0
    %3600 = vmatprep.subr.mxu0 0.0
    %3601 = vmatpush1.msra.mxu0 0.0
    %3602 = vmatprep.subr.mxu0 0.0
    %3603 = vmatpush1.msra.mxu0 0.0
    %3604 = vmatprep.subr.mxu0 0.0
    %3605 = vmatpush1.msra.mxu0 0.0
    %3606 = vmatprep.subr.mxu0 0.0
    %3607 = vmatpush1.msra.mxu0 0.0
    %3608 = vmatprep.subr.mxu0 0.0
    %3609 = vmatpush1.msra.mxu0 0.0
    %3610 = vmatprep.subr.mxu0 0.0
    %3611 = vmatpush1.msra.mxu0 %v1166
    %3612 = vmatprep.subr.mxu0 0.0
    %3613 = vmatpush1.msra.mxu0 %v1165
    %3614 = vmatprep.subr.mxu0 0.0
    %3615 = vmatpush2.msra.mxu0 0.0
    %3616 = vmatprep.subr.mxu0 0.0
    %3617 = vmatpush2.msra.mxu0 0.0
    %3618 = vmatprep.subr.mxu0 0.0
    %3619 = vmatpush2.msra.mxu0 0.0
    %3620 = vmatprep.subr.mxu0 0.0
    %3621 = vmatpush2.msra.mxu0 0.0
    %3622 = vmatprep.subr.mxu0 0.0
    %3623 = vmatpush2.msra.mxu0 0.0
    %3624 = vmatprep.subr.mxu0 0.0
    %3625 = vmatpush2.msra.mxu0 0.0
    %3626 = vmatprep.subr.mxu0 0.0
    %3627 = vmatpush2.msra.mxu0 0.0
    %3628 = vmatprep.subr.mxu0 0.0
    %3629 = vmatpush2.msra.mxu0 0.0
    %3630 = vmatprep.subr.mxu0 0.0
    %3631 = vmatpush2.msra.mxu0 0.0
    %3632 = vmatprep.subr.mxu0 0.0
    %3633 = vmatpush2.msra.mxu0 0.0
    %3634 = vmatprep.subr.mxu0 0.0
    %3635 = vmatpush2.msra.mxu0 0.0
    %3636 = vmatprep.subr.mxu0 0.0
    %3637 = vmatpush2.msra.mxu0 0.0
    %3638 = vmatprep.subr.mxu0 0.0
    %3639 = vmatpush2.msra.mxu0 0.0
    %3640 = vmatprep.subr.mxu0 0.0
    %3641 = vmatpush2.msra.mxu0 0.0
    %3642 = vmatprep.subr.mxu0 0.0
    %3643 = vmatpush2.msra.mxu0 0.0
    %3644 = vmatprep.subr.mxu0 0.0
    %3645 = vmatpush2.msra.mxu0 0.0
    %3646 = vmatprep.mubr.f32.mxu0 0.0
    %3647 = vmatmul.mubr.f32.gmra.mxu0 %v3580
    %v3648 = vpop.f32.mrf.mxu0
    %v3649 = vadd.f32 0.0, %v3648
    %v3650 = vpop.f32.mrf.mxu0
    %3651 = vdwg.mxu0
    %v3652 = vsel %vm1203, %v1028, 0
    %3654 = vmatprep.subr.mxu0 0.0
    %3655 = vmatpush1.msra.mxu0 0.0
    %3656 = vmatprep.subr.mxu0 0.0
    %3657 = vmatpush1.msra.mxu0 0.0
    %3658 = vmatprep.subr.mxu0 0.0
    %3659 = vmatpush1.msra.mxu0 0.0
    %3660 = vmatprep.subr.mxu0 0.0
    %3661 = vmatpush1.msra.mxu0 0.0
    %3662 = vmatprep.subr.mxu0 0.0
    %3663 = vmatpush1.msra.mxu0 0.0
    %3664 = vmatprep.subr.mxu0 0.0
    %3665 = vmatpush1.msra.mxu0 0.0
    %3666 = vmatprep.subr.mxu0 0.0
    %3667 = vmatpush1.msra.mxu0 0.0
    %3668 = vmatprep.subr.mxu0 0.0
    %3669 = vmatpush1.msra.mxu0 0.0
    %3670 = vmatprep.subr.mxu0 0.0
    %3671 = vmatpush1.msra.mxu0 0.0
    %3672 = vmatprep.subr.mxu0 0.0
    %3673 = vmatpush1.msra.mxu0 0.0
    %3674 = vmatprep.subr.mxu0 0.0
    %3675 = vmatpush1.msra.mxu0 0.0
    %3676 = vmatprep.subr.mxu0 0.0
    %3677 = vmatpush1.msra.mxu0 0.0
    %3678 = vmatprep.subr.mxu0 0.0
    %3679 = vmatpush1.msra.mxu0 0.0
    %3680 = vmatprep.subr.mxu0 0.0
    %3681 = vmatpush1.msra.mxu0 0.0
    %3682 = vmatprep.subr.mxu0 0.0
    %3683 = vmatpush1.msra.mxu0 %v1168
    %3684 = vmatprep.subr.mxu0 0.0
    %3685 = vmatpush1.msra.mxu0 %v1167
    %3686 = vmatprep.subr.mxu0 0.0
    %3687 = vmatpush2.msra.mxu0 0.0
    %3688 = vmatprep.subr.mxu0 0.0
    %3689 = vmatpush2.msra.mxu0 0.0
    %3690 = vmatprep.subr.mxu0 0.0
    %3691 = vmatpush2.msra.mxu0 0.0
    %3692 = vmatprep.subr.mxu0 0.0
    %3693 = vmatpush2.msra.mxu0 0.0
    %3694 = vmatprep.subr.mxu0 0.0
    %3695 = vmatpush2.msra.mxu0 0.0
    %3696 = vmatprep.subr.mxu0 0.0
    %3697 = vmatpush2.msra.mxu0 0.0
    %3698 = vmatprep.subr.mxu0 0.0
    %3699 = vmatpush2.msra.mxu0 0.0
    %3700 = vmatprep.subr.mxu0 0.0
    %3701 = vmatpush2.msra.mxu0 0.0
    %3702 = vmatprep.subr.mxu0 0.0
    %3703 = vmatpush2.msra.mxu0 0.0
    %3704 = vmatprep.subr.mxu0 0.0
    %3705 = vmatpush2.msra.mxu0 0.0
    %3706 = vmatprep.subr.mxu0 0.0
    %3707 = vmatpush2.msra.mxu0 0.0
    %3708 = vmatprep.subr.mxu0 0.0
    %3709 = vmatpush2.msra.mxu0 0.0
    %3710 = vmatprep.subr.mxu0 0.0
    %3711 = vmatpush2.msra.mxu0 0.0
    %3712 = vmatprep.subr.mxu0 0.0
    %3713 = vmatpush2.msra.mxu0 0.0
    %3714 = vmatprep.subr.mxu0 0.0
    %3715 = vmatpush2.msra.mxu0 0.0
    %3716 = vmatprep.subr.mxu0 0.0
    %3717 = vmatpush2.msra.mxu0 0.0
    %3718 = vmatprep.mubr.f32.mxu0 0.0
    %3719 = vmatmul.mubr.f32.gmra.mxu0 %v3652
    %v3720 = vpop.f32.mrf.mxu0
    %v3721 = vadd.f32 0.0, %v3720
    %v3722 = vpop.f32.mrf.mxu0
    %3723 = vdwg.mxu0
    %v3724 = vsel %vm1203, %v1030, 0
    %3726 = vmatprep.subr.mxu0 0.0
    %3727 = vmatpush1.msra.mxu0 0.0
    %3728 = vmatprep.subr.mxu0 0.0
    %3729 = vmatpush1.msra.mxu0 0.0
    %3730 = vmatprep.subr.mxu0 0.0
    %3731 = vmatpush1.msra.mxu0 0.0
    %3732 = vmatprep.subr.mxu0 0.0
    %3733 = vmatpush1.msra.mxu0 0.0
    %3734 = vmatprep.subr.mxu0 0.0
    %3735 = vmatpush1.msra.mxu0 0.0
    %3736 = vmatprep.subr.mxu0 0.0
    %3737 = vmatpush1.msra.mxu0 0.0
    %3738 = vmatprep.subr.mxu0 0.0
    %3739 = vmatpush1.msra.mxu0 0.0
    %3740 = vmatprep.subr.mxu0 0.0
    %3741 = vmatpush1.msra.mxu0 0.0
    %3742 = vmatprep.subr.mxu0 0.0
    %3743 = vmatpush1.msra.mxu0 0.0
    %3744 = vmatprep.subr.mxu0 0.0
    %3745 = vmatpush1.msra.mxu0 0.0
    %3746 = vmatprep.subr.mxu0 0.0
    %3747 = vmatpush1.msra.mxu0 0.0
    %3748 = vmatprep.subr.mxu0 0.0
    %3749 = vmatpush1.msra.mxu0 0.0
    %3750 = vmatprep.subr.mxu0 0.0
    %3751 = vmatpush1.msra.mxu0 0.0
    %3752 = vmatprep.subr.mxu0 0.0
    %3753 = vmatpush1.msra.mxu0 0.0
    %3754 = vmatprep.subr.mxu0 0.0
    %3755 = vmatpush1.msra.mxu0 %v1170
    %3756 = vmatprep.subr.mxu0 0.0
    %3757 = vmatpush1.msra.mxu0 %v1169
    %3758 = vmatprep.subr.mxu0 0.0
    %3759 = vmatpush2.msra.mxu0 0.0
    %3760 = vmatprep.subr.mxu0 0.0
    %3761 = vmatpush2.msra.mxu0 0.0
    %3762 = vmatprep.subr.mxu0 0.0
    %3763 = vmatpush2.msra.mxu0 0.0
    %3764 = vmatprep.subr.mxu0 0.0
    %3765 = vmatpush2.msra.mxu0 0.0
    %3766 = vmatprep.subr.mxu0 0.0
    %3767 = vmatpush2.msra.mxu0 0.0
    %3768 = vmatprep.subr.mxu0 0.0
    %3769 = vmatpush2.msra.mxu0 0.0
    %3770 = vmatprep.subr.mxu0 0.0
    %3771 = vmatpush2.msra.mxu0 0.0
    %3772 = vmatprep.subr.mxu0 0.0
    %3773 = vmatpush2.msra.mxu0 0.0
    %3774 = vmatprep.subr.mxu0 0.0
    %3775 = vmatpush2.msra.mxu0 0.0
    %3776 = vmatprep.subr.mxu0 0.0
    %3777 = vmatpush2.msra.mxu0 0.0
    %3778 = vmatprep.subr.mxu0 0.0
    %3779 = vmatpush2.msra.mxu0 0.0
    %3780 = vmatprep.subr.mxu0 0.0
    %3781 = vmatpush2.msra.mxu0 0.0
    %3782 = vmatprep.subr.mxu0 0.0
    %3783 = vmatpush2.msra.mxu0 0.0
    %3784 = vmatprep.subr.mxu0 0.0
    %3785 = vmatpush2.msra.mxu0 0.0
    %3786 = vmatprep.subr.mxu0 0.0
    %3787 = vmatpush2.msra.mxu0 0.0
    %3788 = vmatprep.subr.mxu0 0.0
    %3789 = vmatpush2.msra.mxu0 0.0
    %3790 = vmatprep.mubr.f32.mxu0 0.0
    %3791 = vmatmul.mubr.f32.gmra.mxu0 %v3724
    %v3792 = vpop.f32.mrf.mxu0
    %v3793 = vadd.f32 0.0, %v3792
    %v3794 = vpop.f32.mrf.mxu0
    %3795 = vdwg.mxu0
    %v3796 = vsel %vm1203, %v1038, 0
    %3798 = vmatprep.subr.mxu0 0.0
    %3799 = vmatpush1.msra.mxu0 0.0
    %3800 = vmatprep.subr.mxu0 0.0
    %3801 = vmatpush1.msra.mxu0 0.0
    %3802 = vmatprep.subr.mxu0 0.0
    %3803 = vmatpush1.msra.mxu0 0.0
    %3804 = vmatprep.subr.mxu0 0.0
    %3805 = vmatpush1.msra.mxu0 0.0
    %3806 = vmatprep.subr.mxu0 0.0
    %3807 = vmatpush1.msra.mxu0 0.0
    %3808 = vmatprep.subr.mxu0 0.0
    %3809 = vmatpush1.msra.mxu0 0.0
    %3810 = vmatprep.subr.mxu0 0.0
    %3811 = vmatpush1.msra.mxu0 0.0
    %3812 = vmatprep.subr.mxu0 0.0
    %3813 = vmatpush1.msra.mxu0 0.0
    %3814 = vmatprep.subr.mxu0 0.0
    %3815 = vmatpush1.msra.mxu0 0.0
    %3816 = vmatprep.subr.mxu0 0.0
    %3817 = vmatpush1.msra.mxu0 0.0
    %3818 = vmatprep.subr.mxu0 0.0
    %3819 = vmatpush1.msra.mxu0 0.0
    %3820 = vmatprep.subr.mxu0 0.0
    %3821 = vmatpush1.msra.mxu0 0.0
    %3822 = vmatprep.subr.mxu0 0.0
    %3823 = vmatpush1.msra.mxu0 0.0
    %3824 = vmatprep.subr.mxu0 0.0
    %3825 = vmatpush1.msra.mxu0 0.0
    %3826 = vmatprep.subr.mxu0 0.0
    %3827 = vmatpush1.msra.mxu0 %v1172
    %3828 = vmatprep.subr.mxu0 0.0
    %3829 = vmatpush1.msra.mxu0 %v1171
    %3830 = vmatprep.subr.mxu0 0.0
    %3831 = vmatpush2.msra.mxu0 0.0
    %3832 = vmatprep.subr.mxu0 0.0
    %3833 = vmatpush2.msra.mxu0 0.0
    %3834 = vmatprep.subr.mxu0 0.0
    %3835 = vmatpush2.msra.mxu0 0.0
    %3836 = vmatprep.subr.mxu0 0.0
    %3837 = vmatpush2.msra.mxu0 0.0
    %3838 = vmatprep.subr.mxu0 0.0
    %3839 = vmatpush2.msra.mxu0 0.0
    %3840 = vmatprep.subr.mxu0 0.0
    %3841 = vmatpush2.msra.mxu0 0.0
    %3842 = vmatprep.subr.mxu0 0.0
    %3843 = vmatpush2.msra.mxu0 0.0
    %3844 = vmatprep.subr.mxu0 0.0
    %3845 = vmatpush2.msra.mxu0 0.0
    %3846 = vmatprep.subr.mxu0 0.0
    %3847 = vmatpush2.msra.mxu0 0.0
    %3848 = vmatprep.subr.mxu0 0.0
    %3849 = vmatpush2.msra.mxu0 0.0
    %3850 = vmatprep.subr.mxu0 0.0
    %3851 = vmatpush2.msra.mxu0 0.0
    %3852 = vmatprep.subr.mxu0 0.0
    %3853 = vmatpush2.msra.mxu0 0.0
    %3854 = vmatprep.subr.mxu0 0.0
    %3855 = vmatpush2.msra.mxu0 0.0
    %3856 = vmatprep.subr.mxu0 0.0
    %3857 = vmatpush2.msra.mxu0 0.0
    %3858 = vmatprep.subr.mxu0 0.0
    %3859 = vmatpush2.msra.mxu0 0.0
    %3860 = vmatprep.subr.mxu0 0.0
    %3861 = vmatpush2.msra.mxu0 0.0
    %3862 = vmatprep.mubr.f32.mxu0 0.0
    %3863 = vmatmul.mubr.f32.gmra.mxu0 %v3796
    %v3864 = vpop.f32.mrf.mxu0
    %v3865 = vadd.f32 0.0, %v3864
    %v3866 = vpop.f32.mrf.mxu0
    %3867 = vdwg.mxu0
    %v3868 = vsel %vm1203, %v1046, 0
    %3870 = vmatprep.subr.mxu0 0.0
    %3871 = vmatpush1.msra.mxu0 0.0
    %3872 = vmatprep.subr.mxu0 0.0
    %3873 = vmatpush1.msra.mxu0 0.0
    %3874 = vmatprep.subr.mxu0 0.0
    %3875 = vmatpush1.msra.mxu0 0.0
    %3876 = vmatprep.subr.mxu0 0.0
    %3877 = vmatpush1.msra.mxu0 0.0
    %3878 = vmatprep.subr.mxu0 0.0
    %3879 = vmatpush1.msra.mxu0 0.0
    %3880 = vmatprep.subr.mxu0 0.0
    %3881 = vmatpush1.msra.mxu0 0.0
    %3882 = vmatprep.subr.mxu0 0.0
    %3883 = vmatpush1.msra.mxu0 0.0
    %3884 = vmatprep.subr.mxu0 0.0
    %3885 = vmatpush1.msra.mxu0 0.0
    %3886 = vmatprep.subr.mxu0 0.0
    %3887 = vmatpush1.msra.mxu0 0.0
    %3888 = vmatprep.subr.mxu0 0.0
    %3889 = vmatpush1.msra.mxu0 0.0
    %3890 = vmatprep.subr.mxu0 0.0
    %3891 = vmatpush1.msra.mxu0 0.0
    %3892 = vmatprep.subr.mxu0 0.0
    %3893 = vmatpush1.msra.mxu0 0.0
    %3894 = vmatprep.subr.mxu0 0.0
    %3895 = vmatpush1.msra.mxu0 0.0
    %3896 = vmatprep.subr.mxu0 0.0
    %3897 = vmatpush1.msra.mxu0 0.0
    %3898 = vmatprep.subr.mxu0 0.0
    %3899 = vmatpush1.msra.mxu0 %v1174
    %3900 = vmatprep.subr.mxu0 0.0
    %3901 = vmatpush1.msra.mxu0 %v1173
    %3902 = vmatprep.subr.mxu0 0.0
    %3903 = vmatpush2.msra.mxu0 0.0
    %3904 = vmatprep.subr.mxu0 0.0
    %3905 = vmatpush2.msra.mxu0 0.0
    %3906 = vmatprep.subr.mxu0 0.0
    %3907 = vmatpush2.msra.mxu0 0.0
    %3908 = vmatprep.subr.mxu0 0.0
    %3909 = vmatpush2.msra.mxu0 0.0
    %3910 = vmatprep.subr.mxu0 0.0
    %3911 = vmatpush2.msra.mxu0 0.0
    %3912 = vmatprep.subr.mxu0 0.0
    %3913 = vmatpush2.msra.mxu0 0.0
    %3914 = vmatprep.subr.mxu0 0.0
    %3915 = vmatpush2.msra.mxu0 0.0
    %3916 = vmatprep.subr.mxu0 0.0
    %3917 = vmatpush2.msra.mxu0 0.0
    %3918 = vmatprep.subr.mxu0 0.0
    %3919 = vmatpush2.msra.mxu0 0.0
    %3920 = vmatprep.subr.mxu0 0.0
    %3921 = vmatpush2.msra.mxu0 0.0
    %3922 = vmatprep.subr.mxu0 0.0
    %3923 = vmatpush2.msra.mxu0 0.0
    %3924 = vmatprep.subr.mxu0 0.0
    %3925 = vmatpush2.msra.mxu0 0.0
    %3926 = vmatprep.subr.mxu0 0.0
    %3927 = vmatpush2.msra.mxu0 0.0
    %3928 = vmatprep.subr.mxu0 0.0
    %3929 = vmatpush2.msra.mxu0 0.0
    %3930 = vmatprep.subr.mxu0 0.0
    %3931 = vmatpush2.msra.mxu0 0.0
    %3932 = vmatprep.subr.mxu0 0.0
    %3933 = vmatpush2.msra.mxu0 0.0
    %3934 = vmatprep.mubr.f32.mxu0 0.0
    %3935 = vmatmul.mubr.f32.gmra.mxu0 %v3868
    %v3936 = vpop.f32.mrf.mxu0
    %v3937 = vadd.f32 0.0, %v3936
    %v3938 = vpop.f32.mrf.mxu0
    %3939 = vdwg.mxu0
    %v3940 = vsel %vm1203, %v1045, 0
    %3942 = vmatprep.subr.mxu0 0.0
    %3943 = vmatpush1.msra.mxu0 0.0
    %3944 = vmatprep.subr.mxu0 0.0
    %3945 = vmatpush1.msra.mxu0 0.0
    %3946 = vmatprep.subr.mxu0 0.0
    %3947 = vmatpush1.msra.mxu0 0.0
    %3948 = vmatprep.subr.mxu0 0.0
    %3949 = vmatpush1.msra.mxu0 0.0
    %3950 = vmatprep.subr.mxu0 0.0
    %3951 = vmatpush1.msra.mxu0 0.0
    %3952 = vmatprep.subr.mxu0 0.0
    %3953 = vmatpush1.msra.mxu0 0.0
    %3954 = vmatprep.subr.mxu0 0.0
    %3955 = vmatpush1.msra.mxu0 0.0
    %3956 = vmatprep.subr.mxu0 0.0
    %3957 = vmatpush1.msra.mxu0 0.0
    %3958 = vmatprep.subr.mxu0 0.0
    %3959 = vmatpush1.msra.mxu0 0.0
    %3960 = vmatprep.subr.mxu0 0.0
    %3961 = vmatpush1.msra.mxu0 0.0
    %3962 = vmatprep.subr.mxu0 0.0
    %3963 = vmatpush1.msra.mxu0 0.0
    %3964 = vmatprep.subr.mxu0 0.0
    %3965 = vmatpush1.msra.mxu0 0.0
    %3966 = vmatprep.subr.mxu0 0.0
    %3967 = vmatpush1.msra.mxu0 0.0
    %3968 = vmatprep.subr.mxu0 0.0
    %3969 = vmatpush1.msra.mxu0 0.0
    %3970 = vmatprep.subr.mxu0 0.0
    %3971 = vmatpush1.msra.mxu0 %v1176
    %3972 = vmatprep.subr.mxu0 0.0
    %3973 = vmatpush1.msra.mxu0 %v1175
    %3974 = vmatprep.subr.mxu0 0.0
    %3975 = vmatpush2.msra.mxu0 0.0
    %3976 = vmatprep.subr.mxu0 0.0
    %3977 = vmatpush2.msra.mxu0 0.0
    %3978 = vmatprep.subr.mxu0 0.0
    %3979 = vmatpush2.msra.mxu0 0.0
    %3980 = vmatprep.subr.mxu0 0.0
    %3981 = vmatpush2.msra.mxu0 0.0
    %3982 = vmatprep.subr.mxu0 0.0
    %3983 = vmatpush2.msra.mxu0 0.0
    %3984 = vmatprep.subr.mxu0 0.0
    %3985 = vmatpush2.msra.mxu0 0.0
    %3986 = vmatprep.subr.mxu0 0.0
    %3987 = vmatpush2.msra.mxu0 0.0
    %3988 = vmatprep.subr.mxu0 0.0
    %3989 = vmatpush2.msra.mxu0 0.0
    %3990 = vmatprep.subr.mxu0 0.0
    %3991 = vmatpush2.msra.mxu0 0.0
    %3992 = vmatprep.subr.mxu0 0.0
    %3993 = vmatpush2.msra.mxu0 0.0
    %3994 = vmatprep.subr.mxu0 0.0
    %3995 = vmatpush2.msra.mxu0 0.0
    %3996 = vmatprep.subr.mxu0 0.0
    %3997 = vmatpush2.msra.mxu0 0.0
    %3998 = vmatprep.subr.mxu0 0.0
    %3999 = vmatpush2.msra.mxu0 0.0
    %4000 = vmatprep.subr.mxu0 0.0
    %4001 = vmatpush2.msra.mxu0 0.0
    %4002 = vmatprep.subr.mxu0 0.0
    %4003 = vmatpush2.msra.mxu0 0.0
    %4004 = vmatprep.subr.mxu0 0.0
    %4005 = vmatpush2.msra.mxu0 0.0
    %4006 = vmatprep.mubr.f32.mxu0 0.0
    %4007 = vmatmul.mubr.f32.gmra.mxu0 %v3940
    %v4008 = vpop.f32.mrf.mxu0
    %v4009 = vadd.f32 0.0, %v4008
    %v4010 = vpop.f32.mrf.mxu0
    %4011 = vdwg.mxu0
    %v4012 = vsel %vm1203, %v1047, 0
    %4014 = vmatprep.subr.mxu0 0.0
    %4015 = vmatpush1.msra.mxu0 0.0
    %4016 = vmatprep.subr.mxu0 0.0
    %4017 = vmatpush1.msra.mxu0 0.0
    %4018 = vmatprep.subr.mxu0 0.0
    %4019 = vmatpush1.msra.mxu0 0.0
    %4020 = vmatprep.subr.mxu0 0.0
    %4021 = vmatpush1.msra.mxu0 0.0
    %4022 = vmatprep.subr.mxu0 0.0
    %4023 = vmatpush1.msra.mxu0 0.0
    %4024 = vmatprep.subr.mxu0 0.0
    %4025 = vmatpush1.msra.mxu0 0.0
    %4026 = vmatprep.subr.mxu0 0.0
    %4027 = vmatpush1.msra.mxu0 0.0
    %4028 = vmatprep.subr.mxu0 0.0
    %4029 = vmatpush1.msra.mxu0 0.0
    %4030 = vmatprep.subr.mxu0 0.0
    %4031 = vmatpush1.msra.mxu0 0.0
    %4032 = vmatprep.subr.mxu0 0.0
    %4033 = vmatpush1.msra.mxu0 0.0
    %4034 = vmatprep.subr.mxu0 0.0
    %4035 = vmatpush1.msra.mxu0 0.0
    %4036 = vmatprep.subr.mxu0 0.0
    %4037 = vmatpush1.msra.mxu0 0.0
    %4038 = vmatprep.subr.mxu0 0.0
    %4039 = vmatpush1.msra.mxu0 0.0
    %4040 = vmatprep.subr.mxu0 0.0
    %4041 = vmatpush1.msra.mxu0 0.0
    %4042 = vmatprep.subr.mxu0 0.0
    %4043 = vmatpush1.msra.mxu0 %v1178
    %4044 = vmatprep.subr.mxu0 0.0
    %4045 = vmatpush1.msra.mxu0 %v1177
    %4046 = vmatprep.subr.mxu0 0.0
    %4047 = vmatpush2.msra.mxu0 0.0
    %4048 = vmatprep.subr.mxu0 0.0
    %4049 = vmatpush2.msra.mxu0 0.0
    %4050 = vmatprep.subr.mxu0 0.0
    %4051 = vmatpush2.msra.mxu0 0.0
    %4052 = vmatprep.subr.mxu0 0.0
    %4053 = vmatpush2.msra.mxu0 0.0
    %4054 = vmatprep.subr.mxu0 0.0
    %4055 = vmatpush2.msra.mxu0 0.0
    %4056 = vmatprep.subr.mxu0 0.0
    %4057 = vmatpush2.msra.mxu0 0.0
    %4058 = vmatprep.subr.mxu0 0.0
    %4059 = vmatpush2.msra.mxu0 0.0
    %4060 = vmatprep.subr.mxu0 0.0
    %4061 = vmatpush2.msra.mxu0 0.0
    %4062 = vmatprep.subr.mxu0 0.0
    %4063 = vmatpush2.msra.mxu0 0.0
    %4064 = vmatprep.subr.mxu0 0.0
    %4065 = vmatpush2.msra.mxu0 0.0
    %4066 = vmatprep.subr.mxu0 0.0
    %4067 = vmatpush2.msra.mxu0 0.0
    %4068 = vmatprep.subr.mxu0 0.0
    %4069 = vmatpush2.msra.mxu0 0.0
    %4070 = vmatprep.subr.mxu0 0.0
    %4071 = vmatpush2.msra.mxu0 0.0
    %4072 = vmatprep.subr.mxu0 0.0
    %4073 = vmatpush2.msra.mxu0 0.0
    %4074 = vmatprep.subr.mxu0 0.0
    %4075 = vmatpush2.msra.mxu0 0.0
    %4076 = vmatprep.subr.mxu0 0.0
    %4077 = vmatpush2.msra.mxu0 0.0
    %4078 = vmatprep.mubr.f32.mxu0 0.0
    %4079 = vmatmul.mubr.f32.gmra.mxu0 %v4012
    %v4080 = vpop.f32.mrf.mxu0
    %v4081 = vadd.f32 0.0, %v4080
    %v4082 = vpop.f32.mrf.mxu0
    %4083 = vdwg.mxu0
    %v4084 = vsel %vm1203, %v1055, 0
    %4086 = vmatprep.subr.mxu0 0.0
    %4087 = vmatpush1.msra.mxu0 0.0
    %4088 = vmatprep.subr.mxu0 0.0
    %4089 = vmatpush1.msra.mxu0 0.0
    %4090 = vmatprep.subr.mxu0 0.0
    %4091 = vmatpush1.msra.mxu0 0.0
    %4092 = vmatprep.subr.mxu0 0.0
    %4093 = vmatpush1.msra.mxu0 0.0
    %4094 = vmatprep.subr.mxu0 0.0
    %4095 = vmatpush1.msra.mxu0 0.0
    %4096 = vmatprep.subr.mxu0 0.0
    %4097 = vmatpush1.msra.mxu0 0.0
    %4098 = vmatprep.subr.mxu0 0.0
    %4099 = vmatpush1.msra.mxu0 0.0
    %4100 = vmatprep.subr.mxu0 0.0
    %4101 = vmatpush1.msra.mxu0 0.0
    %4102 = vmatprep.subr.mxu0 0.0
    %4103 = vmatpush1.msra.mxu0 0.0
    %4104 = vmatprep.subr.mxu0 0.0
    %4105 = vmatpush1.msra.mxu0 0.0
    %4106 = vmatprep.subr.mxu0 0.0
    %4107 = vmatpush1.msra.mxu0 0.0
    %4108 = vmatprep.subr.mxu0 0.0
    %4109 = vmatpush1.msra.mxu0 0.0
    %4110 = vmatprep.subr.mxu0 0.0
    %4111 = vmatpush1.msra.mxu0 0.0
    %4112 = vmatprep.subr.mxu0 0.0
    %4113 = vmatpush1.msra.mxu0 0.0
    %4114 = vmatprep.subr.mxu0 0.0
    %4115 = vmatpush1.msra.mxu0 %v1180
    %4116 = vmatprep.subr.mxu0 0.0
    %4117 = vmatpush1.msra.mxu0 %v1179
    %4118 = vmatprep.subr.mxu0 0.0
    %4119 = vmatpush2.msra.mxu0 0.0
    %4120 = vmatprep.subr.mxu0 0.0
    %4121 = vmatpush2.msra.mxu0 0.0
    %4122 = vmatprep.subr.mxu0 0.0
    %4123 = vmatpush2.msra.mxu0 0.0
    %4124 = vmatprep.subr.mxu0 0.0
    %4125 = vmatpush2.msra.mxu0 0.0
    %4126 = vmatprep.subr.mxu0 0.0
    %4127 = vmatpush2.msra.mxu0 0.0
    %4128 = vmatprep.subr.mxu0 0.0
    %4129 = vmatpush2.msra.mxu0 0.0
    %4130 = vmatprep.subr.mxu0 0.0
    %4131 = vmatpush2.msra.mxu0 0.0
    %4132 = vmatprep.subr.mxu0 0.0
    %4133 = vmatpush2.msra.mxu0 0.0
    %4134 = vmatprep.subr.mxu0 0.0
    %4135 = vmatpush2.msra.mxu0 0.0
    %4136 = vmatprep.subr.mxu0 0.0
    %4137 = vmatpush2.msra.mxu0 0.0
    %4138 = vmatprep.subr.mxu0 0.0
    %4139 = vmatpush2.msra.mxu0 0.0
    %4140 = vmatprep.subr.mxu0 0.0
    %4141 = vmatpush2.msra.mxu0 0.0
    %4142 = vmatprep.subr.mxu0 0.0
    %4143 = vmatpush2.msra.mxu0 0.0
    %4144 = vmatprep.subr.mxu0 0.0
    %4145 = vmatpush2.msra.mxu0 0.0
    %4146 = vmatprep.subr.mxu0 0.0
    %4147 = vmatpush2.msra.mxu0 0.0
    %4148 = vmatprep.subr.mxu0 0.0
    %4149 = vmatpush2.msra.mxu0 0.0
    %4150 = vmatprep.mubr.f32.mxu0 0.0
    %4151 = vmatmul.mubr.f32.gmra.mxu0 %v4084
    %v4152 = vpop.f32.mrf.mxu0
    %v4153 = vadd.f32 0.0, %v4152
    %v4154 = vpop.f32.mrf.mxu0
    %4155 = vdwg.mxu0
    %v4156 = vsel %vm1203, %v1063, 0
    %4158 = vmatprep.subr.mxu0 0.0
    %4159 = vmatpush1.msra.mxu0 0.0
    %4160 = vmatprep.subr.mxu0 0.0
    %4161 = vmatpush1.msra.mxu0 0.0
    %4162 = vmatprep.subr.mxu0 0.0
    %4163 = vmatpush1.msra.mxu0 0.0
    %4164 = vmatprep.subr.mxu0 0.0
    %4165 = vmatpush1.msra.mxu0 0.0
    %4166 = vmatprep.subr.mxu0 0.0
    %4167 = vmatpush1.msra.mxu0 0.0
    %4168 = vmatprep.subr.mxu0 0.0
    %4169 = vmatpush1.msra.mxu0 0.0
    %4170 = vmatprep.subr.mxu0 0.0
    %4171 = vmatpush1.msra.mxu0 0.0
    %4172 = vmatprep.subr.mxu0 0.0
    %4173 = vmatpush1.msra.mxu0 0.0
    %4174 = vmatprep.subr.mxu0 0.0
    %4175 = vmatpush1.msra.mxu0 0.0
    %4176 = vmatprep.subr.mxu0 0.0
    %4177 = vmatpush1.msra.mxu0 0.0
    %4178 = vmatprep.subr.mxu0 0.0
    %4179 = vmatpush1.msra.mxu0 0.0
    %4180 = vmatprep.subr.mxu0 0.0
    %4181 = vmatpush1.msra.mxu0 0.0
    %4182 = vmatprep.subr.mxu0 0.0
    %4183 = vmatpush1.msra.mxu0 0.0
    %4184 = vmatprep.subr.mxu0 0.0
    %4185 = vmatpush1.msra.mxu0 0.0
    %4186 = vmatprep.subr.mxu0 0.0
    %4187 = vmatpush1.msra.mxu0 %v1182
    %4188 = vmatprep.subr.mxu0 0.0
    %4189 = vmatpush1.msra.mxu0 %v1181
    %4190 = vmatprep.subr.mxu0 0.0
    %4191 = vmatpush2.msra.mxu0 0.0
    %4192 = vmatprep.subr.mxu0 0.0
    %4193 = vmatpush2.msra.mxu0 0.0
    %4194 = vmatprep.subr.mxu0 0.0
    %4195 = vmatpush2.msra.mxu0 0.0
    %4196 = vmatprep.subr.mxu0 0.0
    %4197 = vmatpush2.msra.mxu0 0.0
    %4198 = vmatprep.subr.mxu0 0.0
    %4199 = vmatpush2.msra.mxu0 0.0
    %4200 = vmatprep.subr.mxu0 0.0
    %4201 = vmatpush2.msra.mxu0 0.0
    %4202 = vmatprep.subr.mxu0 0.0
    %4203 = vmatpush2.msra.mxu0 0.0
    %4204 = vmatprep.subr.mxu0 0.0
    %4205 = vmatpush2.msra.mxu0 0.0
    %4206 = vmatprep.subr.mxu0 0.0
    %4207 = vmatpush2.msra.mxu0 0.0
    %4208 = vmatprep.subr.mxu0 0.0
    %4209 = vmatpush2.msra.mxu0 0.0
    %4210 = vmatprep.subr.mxu0 0.0
    %4211 = vmatpush2.msra.mxu0 0.0
    %4212 = vmatprep.subr.mxu0 0.0
    %4213 = vmatpush2.msra.mxu0 0.0
    %4214 = vmatprep.subr.mxu0 0.0
    %4215 = vmatpush2.msra.mxu0 0.0
    %4216 = vmatprep.subr.mxu0 0.0
    %4217 = vmatpush2.msra.mxu0 0.0
    %4218 = vmatprep.subr.mxu0 0.0
    %4219 = vmatpush2.msra.mxu0 0.0
    %4220 = vmatprep.subr.mxu0 0.0
    %4221 = vmatpush2.msra.mxu0 0.0
    %4222 = vmatprep.mubr.f32.mxu0 0.0
    %4223 = vmatmul.mubr.f32.gmra.mxu0 %v4156
    %v4224 = vpop.f32.mrf.mxu0
    %v4225 = vadd.f32 0.0, %v4224
    %v4226 = vpop.f32.mrf.mxu0
    %4227 = vdwg.mxu0
    %v4228 = vsel %vm1203, %v1062, 0
    %4230 = vmatprep.subr.mxu0 0.0
    %4231 = vmatpush1.msra.mxu0 0.0
    %4232 = vmatprep.subr.mxu0 0.0
    %4233 = vmatpush1.msra.mxu0 0.0
    %4234 = vmatprep.subr.mxu0 0.0
    %4235 = vmatpush1.msra.mxu0 0.0
    %4236 = vmatprep.subr.mxu0 0.0
    %4237 = vmatpush1.msra.mxu0 0.0
    %4238 = vmatprep.subr.mxu0 0.0
    %4239 = vmatpush1.msra.mxu0 0.0
    %4240 = vmatprep.subr.mxu0 0.0
    %4241 = vmatpush1.msra.mxu0 0.0
    %4242 = vmatprep.subr.mxu0 0.0
    %4243 = vmatpush1.msra.mxu0 0.0
    %4244 = vmatprep.subr.mxu0 0.0
    %4245 = vmatpush1.msra.mxu0 0.0
    %4246 = vmatprep.subr.mxu0 0.0
    %4247 = vmatpush1.msra.mxu0 0.0
    %4248 = vmatprep.subr.mxu0 0.0
    %4249 = vmatpush1.msra.mxu0 0.0
    %4250 = vmatprep.subr.mxu0 0.0
    %4251 = vmatpush1.msra.mxu0 0.0
    %4252 = vmatprep.subr.mxu0 0.0
    %4253 = vmatpush1.msra.mxu0 0.0
    %4254 = vmatprep.subr.mxu0 0.0
    %4255 = vmatpush1.msra.mxu0 0.0
    %4256 = vmatprep.subr.mxu0 0.0
    %4257 = vmatpush1.msra.mxu0 0.0
    %4258 = vmatprep.subr.mxu0 0.0
    %4259 = vmatpush1.msra.mxu0 %v1184
    %4260 = vmatprep.subr.mxu0 0.0
    %4261 = vmatpush1.msra.mxu0 %v1183
    %4262 = vmatprep.subr.mxu0 0.0
    %4263 = vmatpush2.msra.mxu0 0.0
    %4264 = vmatprep.subr.mxu0 0.0
    %4265 = vmatpush2.msra.mxu0 0.0
    %4266 = vmatprep.subr.mxu0 0.0
    %4267 = vmatpush2.msra.mxu0 0.0
    %4268 = vmatprep.subr.mxu0 0.0
    %4269 = vmatpush2.msra.mxu0 0.0
    %4270 = vmatprep.subr.mxu0 0.0
    %4271 = vmatpush2.msra.mxu0 0.0
    %4272 = vmatprep.subr.mxu0 0.0
    %4273 = vmatpush2.msra.mxu0 0.0
    %4274 = vmatprep.subr.mxu0 0.0
    %4275 = vmatpush2.msra.mxu0 0.0
    %4276 = vmatprep.subr.mxu0 0.0
    %4277 = vmatpush2.msra.mxu0 0.0
    %4278 = vmatprep.subr.mxu0 0.0
    %4279 = vmatpush2.msra.mxu0 0.0
    %4280 = vmatprep.subr.mxu0 0.0
    %4281 = vmatpush2.msra.mxu0 0.0
    %4282 = vmatprep.subr.mxu0 0.0
    %4283 = vmatpush2.msra.mxu0 0.0
    %4284 = vmatprep.subr.mxu0 0.0
    %4285 = vmatpush2.msra.mxu0 0.0
    %4286 = vmatprep.subr.mxu0 0.0
    %4287 = vmatpush2.msra.mxu0 0.0
    %4288 = vmatprep.subr.mxu0 0.0
    %4289 = vmatpush2.msra.mxu0 0.0
    %4290 = vmatprep.subr.mxu0 0.0
    %4291 = vmatpush2.msra.mxu0 0.0
    %4292 = vmatprep.subr.mxu0 0.0
    %4293 = vmatpush2.msra.mxu0 0.0
    %4294 = vmatprep.mubr.f32.mxu0 0.0
    %4295 = vmatmul.mubr.f32.gmra.mxu0 %v4228
    %v4296 = vpop.f32.mrf.mxu0
    %v4297 = vadd.f32 0.0, %v4296
    %v4298 = vpop.f32.mrf.mxu0
    %4299 = vdwg.mxu0
    %v4300 = vsel %vm1203, %v1064, 0
    %4302 = vmatprep.subr.mxu0 0.0
    %4303 = vmatpush1.msra.mxu0 0.0
    %4304 = vmatprep.subr.mxu0 0.0
    %4305 = vmatpush1.msra.mxu0 0.0
    %4306 = vmatprep.subr.mxu0 0.0
    %4307 = vmatpush1.msra.mxu0 0.0
    %4308 = vmatprep.subr.mxu0 0.0
    %4309 = vmatpush1.msra.mxu0 0.0
    %4310 = vmatprep.subr.mxu0 0.0
    %4311 = vmatpush1.msra.mxu0 0.0
    %4312 = vmatprep.subr.mxu0 0.0
    %4313 = vmatpush1.msra.mxu0 0.0
    %4314 = vmatprep.subr.mxu0 0.0
    %4315 = vmatpush1.msra.mxu0 0.0
    %4316 = vmatprep.subr.mxu0 0.0
    %4317 = vmatpush1.msra.mxu0 0.0
    %4318 = vmatprep.subr.mxu0 0.0
    %4319 = vmatpush1.msra.mxu0 0.0
    %4320 = vmatprep.subr.mxu0 0.0
    %4321 = vmatpush1.msra.mxu0 0.0
    %4322 = vmatprep.subr.mxu0 0.0
    %4323 = vmatpush1.msra.mxu0 0.0
    %4324 = vmatprep.subr.mxu0 0.0
    %4325 = vmatpush1.msra.mxu0 0.0
    %4326 = vmatprep.subr.mxu0 0.0
    %4327 = vmatpush1.msra.mxu0 0.0
    %4328 = vmatprep.subr.mxu0 0.0
    %4329 = vmatpush1.msra.mxu0 0.0
    %4330 = vmatprep.subr.mxu0 0.0
    %4331 = vmatpush1.msra.mxu0 %v1186
    %4332 = vmatprep.subr.mxu0 0.0
    %4333 = vmatpush1.msra.mxu0 %v1185
    %4334 = vmatprep.subr.mxu0 0.0
    %4335 = vmatpush2.msra.mxu0 0.0
    %4336 = vmatprep.subr.mxu0 0.0
    %4337 = vmatpush2.msra.mxu0 0.0
    %4338 = vmatprep.subr.mxu0 0.0
    %4339 = vmatpush2.msra.mxu0 0.0
    %4340 = vmatprep.subr.mxu0 0.0
    %4341 = vmatpush2.msra.mxu0 0.0
    %4342 = vmatprep.subr.mxu0 0.0
    %4343 = vmatpush2.msra.mxu0 0.0
    %4344 = vmatprep.subr.mxu0 0.0
    %4345 = vmatpush2.msra.mxu0 0.0
    %4346 = vmatprep.subr.mxu0 0.0
    %4347 = vmatpush2.msra.mxu0 0.0
    %4348 = vmatprep.subr.mxu0 0.0
    %4349 = vmatpush2.msra.mxu0 0.0
    %4350 = vmatprep.subr.mxu0 0.0
    %4351 = vmatpush2.msra.mxu0 0.0
    %4352 = vmatprep.subr.mxu0 0.0
    %4353 = vmatpush2.msra.mxu0 0.0
    %4354 = vmatprep.subr.mxu0 0.0
    %4355 = vmatpush2.msra.mxu0 0.0
    %4356 = vmatprep.subr.mxu0 0.0
    %4357 = vmatpush2.msra.mxu0 0.0
    %4358 = vmatprep.subr.mxu0 0.0
    %4359 = vmatpush2.msra.mxu0 0.0
    %4360 = vmatprep.subr.mxu0 0.0
    %4361 = vmatpush2.msra.mxu0 0.0
    %4362 = vmatprep.subr.mxu0 0.0
    %4363 = vmatpush2.msra.mxu0 0.0
    %4364 = vmatprep.subr.mxu0 0.0
    %4365 = vmatpush2.msra.mxu0 0.0
    %4366 = vmatprep.mubr.f32.mxu0 0.0
    %4367 = vmatmul.mubr.f32.gmra.mxu0 %v4300
    %v4368 = vpop.f32.mrf.mxu0
    %v4369 = vadd.f32 0.0, %v4368
    %v4370 = vpop.f32.mrf.mxu0
    %4371 = vdwg.mxu0
    %v4372 = vsel %vm1203, %v1072, 0
    %4374 = vmatprep.subr.mxu0 0.0
    %4375 = vmatpush1.msra.mxu0 0.0
    %4376 = vmatprep.subr.mxu0 0.0
    %4377 = vmatpush1.msra.mxu0 0.0
    %4378 = vmatprep.subr.mxu0 0.0
    %4379 = vmatpush1.msra.mxu0 0.0
    %4380 = vmatprep.subr.mxu0 0.0
    %4381 = vmatpush1.msra.mxu0 0.0
    %4382 = vmatprep.subr.mxu0 0.0
    %4383 = vmatpush1.msra.mxu0 0.0
    %4384 = vmatprep.subr.mxu0 0.0
    %4385 = vmatpush1.msra.mxu0 0.0
    %4386 = vmatprep.subr.mxu0 0.0
    %4387 = vmatpush1.msra.mxu0 0.0
    %4388 = vmatprep.subr.mxu0 0.0
    %4389 = vmatpush1.msra.mxu0 0.0
    %4390 = vmatprep.subr.mxu0 0.0
    %4391 = vmatpush1.msra.mxu0 0.0
    %4392 = vmatprep.subr.mxu0 0.0
    %4393 = vmatpush1.msra.mxu0 0.0
    %4394 = vmatprep.subr.mxu0 0.0
    %4395 = vmatpush1.msra.mxu0 0.0
    %4396 = vmatprep.subr.mxu0 0.0
    %4397 = vmatpush1.msra.mxu0 0.0
    %4398 = vmatprep.subr.mxu0 0.0
    %4399 = vmatpush1.msra.mxu0 0.0
    %4400 = vmatprep.subr.mxu0 0.0
    %4401 = vmatpush1.msra.mxu0 0.0
    %4402 = vmatprep.subr.mxu0 0.0
    %4403 = vmatpush1.msra.mxu0 %v1188
    %4404 = vmatprep.subr.mxu0 0.0
    %4405 = vmatpush1.msra.mxu0 %v1187
    %4406 = vmatprep.subr.mxu0 0.0
    %4407 = vmatpush2.msra.mxu0 0.0
    %4408 = vmatprep.subr.mxu0 0.0
    %4409 = vmatpush2.msra.mxu0 0.0
    %4410 = vmatprep.subr.mxu0 0.0
    %4411 = vmatpush2.msra.mxu0 0.0
    %4412 = vmatprep.subr.mxu0 0.0
    %4413 = vmatpush2.msra.mxu0 0.0
    %4414 = vmatprep.subr.mxu0 0.0
    %4415 = vmatpush2.msra.mxu0 0.0
    %4416 = vmatprep.subr.mxu0 0.0
    %4417 = vmatpush2.msra.mxu0 0.0
    %4418 = vmatprep.subr.mxu0 0.0
    %4419 = vmatpush2.msra.mxu0 0.0
    %4420 = vmatprep.subr.mxu0 0.0
    %4421 = vmatpush2.msra.mxu0 0.0
    %4422 = vmatprep.subr.mxu0 0.0
    %4423 = vmatpush2.msra.mxu0 0.0
    %4424 = vmatprep.subr.mxu0 0.0
    %4425 = vmatpush2.msra.mxu0 0.0
    %4426 = vmatprep.subr.mxu0 0.0
    %4427 = vmatpush2.msra.mxu0 0.0
    %4428 = vmatprep.subr.mxu0 0.0
    %4429 = vmatpush2.msra.mxu0 0.0
    %4430 = vmatprep.subr.mxu0 0.0
    %4431 = vmatpush2.msra.mxu0 0.0
    %4432 = vmatprep.subr.mxu0 0.0
    %4433 = vmatpush2.msra.mxu0 0.0
    %4434 = vmatprep.subr.mxu0 0.0
    %4435 = vmatpush2.msra.mxu0 0.0
    %4436 = vmatprep.subr.mxu0 0.0
    %4437 = vmatpush2.msra.mxu0 0.0
    %4438 = vmatprep.mubr.f32.mxu0 0.0
    %4439 = vmatmul.mubr.f32.gmra.mxu0 %v4372
    %v4440 = vpop.f32.mrf.mxu0
    %v4441 = vadd.f32 0.0, %v4440
    %v4442 = vpop.f32.mrf.mxu0
    %4443 = vdwg.mxu0
    %v4444 = vsel %vm1203, %v1080, 0
    %4446 = vmatprep.subr.mxu0 0.0
    %4447 = vmatpush1.msra.mxu0 0.0
    %4448 = vmatprep.subr.mxu0 0.0
    %4449 = vmatpush1.msra.mxu0 0.0
    %4450 = vmatprep.subr.mxu0 0.0
    %4451 = vmatpush1.msra.mxu0 0.0
    %4452 = vmatprep.subr.mxu0 0.0
    %4453 = vmatpush1.msra.mxu0 0.0
    %4454 = vmatprep.subr.mxu0 0.0
    %4455 = vmatpush1.msra.mxu0 0.0
    %4456 = vmatprep.subr.mxu0 0.0
    %4457 = vmatpush1.msra.mxu0 0.0
    %4458 = vmatprep.subr.mxu0 0.0
    %4459 = vmatpush1.msra.mxu0 0.0
    %4460 = vmatprep.subr.mxu0 0.0
    %4461 = vmatpush1.msra.mxu0 0.0
    %4462 = vmatprep.subr.mxu0 0.0
    %4463 = vmatpush1.msra.mxu0 0.0
    %4464 = vmatprep.subr.mxu0 0.0
    %4465 = vmatpush1.msra.mxu0 0.0
    %4466 = vmatprep.subr.mxu0 0.0
    %4467 = vmatpush1.msra.mxu0 0.0
    %4468 = vmatprep.subr.mxu0 0.0
    %4469 = vmatpush1.msra.mxu0 0.0
    %4470 = vmatprep.subr.mxu0 0.0
    %4471 = vmatpush1.msra.mxu0 0.0
    %4472 = vmatprep.subr.mxu0 0.0
    %4473 = vmatpush1.msra.mxu0 0.0
    %4474 = vmatprep.subr.mxu0 0.0
    %4475 = vmatpush1.msra.mxu0 %v1190
    %4476 = vmatprep.subr.mxu0 0.0
    %4477 = vmatpush1.msra.mxu0 %v1189
    %4478 = vmatprep.subr.mxu0 0.0
    %4479 = vmatpush2.msra.mxu0 0.0
    %4480 = vmatprep.subr.mxu0 0.0
    %4481 = vmatpush2.msra.mxu0 0.0
    %4482 = vmatprep.subr.mxu0 0.0
    %4483 = vmatpush2.msra.mxu0 0.0
    %4484 = vmatprep.subr.mxu0 0.0
    %4485 = vmatpush2.msra.mxu0 0.0
    %4486 = vmatprep.subr.mxu0 0.0
    %4487 = vmatpush2.msra.mxu0 0.0
    %4488 = vmatprep.subr.mxu0 0.0
    %4489 = vmatpush2.msra.mxu0 0.0
    %4490 = vmatprep.subr.mxu0 0.0
    %4491 = vmatpush2.msra.mxu0 0.0
    %4492 = vmatprep.subr.mxu0 0.0
    %4493 = vmatpush2.msra.mxu0 0.0
    %4494 = vmatprep.subr.mxu0 0.0
    %4495 = vmatpush2.msra.mxu0 0.0
    %4496 = vmatprep.subr.mxu0 0.0
    %4497 = vmatpush2.msra.mxu0 0.0
    %4498 = vmatprep.subr.mxu0 0.0
    %4499 = vmatpush2.msra.mxu0 0.0
    %4500 = vmatprep.subr.mxu0 0.0
    %4501 = vmatpush2.msra.mxu0 0.0
    %4502 = vmatprep.subr.mxu0 0.0
    %4503 = vmatpush2.msra.mxu0 0.0
    %4504 = vmatprep.subr.mxu0 0.0
    %4505 = vmatpush2.msra.mxu0 0.0
    %4506 = vmatprep.subr.mxu0 0.0
    %4507 = vmatpush2.msra.mxu0 0.0
    %4508 = vmatprep.subr.mxu0 0.0
    %4509 = vmatpush2.msra.mxu0 0.0
    %4510 = vmatprep.mubr.f32.mxu0 0.0
    %4511 = vmatmul.mubr.f32.gmra.mxu0 %v4444
    %v4512 = vpop.f32.mrf.mxu0
    %v4513 = vadd.f32 0.0, %v4512
    %v4514 = vpop.f32.mrf.mxu0
    %4515 = vdwg.mxu0
    %v4516 = vsel %vm1203, %v1079, 0
    %4518 = vmatprep.subr.mxu0 0.0
    %4519 = vmatpush1.msra.mxu0 0.0
    %4520 = vmatprep.subr.mxu0 0.0
    %4521 = vmatpush1.msra.mxu0 0.0
    %4522 = vmatprep.subr.mxu0 0.0
    %4523 = vmatpush1.msra.mxu0 0.0
    %4524 = vmatprep.subr.mxu0 0.0
    %4525 = vmatpush1.msra.mxu0 0.0
    %4526 = vmatprep.subr.mxu0 0.0
    %4527 = vmatpush1.msra.mxu0 0.0
    %4528 = vmatprep.subr.mxu0 0.0
    %4529 = vmatpush1.msra.mxu0 0.0
    %4530 = vmatprep.subr.mxu0 0.0
    %4531 = vmatpush1.msra.mxu0 0.0
    %4532 = vmatprep.subr.mxu0 0.0
    %4533 = vmatpush1.msra.mxu0 0.0
    %4534 = vmatprep.subr.mxu0 0.0
    %4535 = vmatpush1.msra.mxu0 0.0
    %4536 = vmatprep.subr.mxu0 0.0
    %4537 = vmatpush1.msra.mxu0 0.0
    %4538 = vmatprep.subr.mxu0 0.0
    %4539 = vmatpush1.msra.mxu0 0.0
    %4540 = vmatprep.subr.mxu0 0.0
    %4541 = vmatpush1.msra.mxu0 0.0
    %4542 = vmatprep.subr.mxu0 0.0
    %4543 = vmatpush1.msra.mxu0 0.0
    %4544 = vmatprep.subr.mxu0 0.0
    %4545 = vmatpush1.msra.mxu0 0.0
    %4546 = vmatprep.subr.mxu0 0.0
    %4547 = vmatpush1.msra.mxu0 %v1192
    %4548 = vmatprep.subr.mxu0 0.0
    %4549 = vmatpush1.msra.mxu0 %v1191
    %4550 = vmatprep.subr.mxu0 0.0
    %4551 = vmatpush2.msra.mxu0 0.0
    %4552 = vmatprep.subr.mxu0 0.0
    %4553 = vmatpush2.msra.mxu0 0.0
    %4554 = vmatprep.subr.mxu0 0.0
    %4555 = vmatpush2.msra.mxu0 0.0
    %4556 = vmatprep.subr.mxu0 0.0
    %4557 = vmatpush2.msra.mxu0 0.0
    %4558 = vmatprep.subr.mxu0 0.0
    %4559 = vmatpush2.msra.mxu0 0.0
    %4560 = vmatprep.subr.mxu0 0.0
    %4561 = vmatpush2.msra.mxu0 0.0
    %4562 = vmatprep.subr.mxu0 0.0
    %4563 = vmatpush2.msra.mxu0 0.0
    %4564 = vmatprep.subr.mxu0 0.0
    %4565 = vmatpush2.msra.mxu0 0.0
    %4566 = vmatprep.subr.mxu0 0.0
    %4567 = vmatpush2.msra.mxu0 0.0
    %4568 = vmatprep.subr.mxu0 0.0
    %4569 = vmatpush2.msra.mxu0 0.0
    %4570 = vmatprep.subr.mxu0 0.0
    %4571 = vmatpush2.msra.mxu0 0.0
    %4572 = vmatprep.subr.mxu0 0.0
    %4573 = vmatpush2.msra.mxu0 0.0
    %4574 = vmatprep.subr.mxu0 0.0
    %4575 = vmatpush2.msra.mxu0 0.0
    %4576 = vmatprep.subr.mxu0 0.0
    %4577 = vmatpush2.msra.mxu0 0.0
    %4578 = vmatprep.subr.mxu0 0.0
    %4579 = vmatpush2.msra.mxu0 0.0
    %4580 = vmatprep.subr.mxu0 0.0
    %4581 = vmatpush2.msra.mxu0 0.0
    %4582 = vmatprep.mubr.f32.mxu0 0.0
    %4583 = vmatmul.mubr.f32.gmra.mxu0 %v4516
    %v4584 = vpop.f32.mrf.mxu0
    %v4585 = vadd.f32 0.0, %v4584
    %v4586 = vpop.f32.mrf.mxu0
    %4587 = vdwg.mxu0
    %v4588 = vsel %vm1203, %v1081, 0
    %4590 = vmatprep.subr.mxu0 0.0
    %4591 = vmatpush1.msra.mxu0 0.0
    %4592 = vmatprep.subr.mxu0 0.0
    %4593 = vmatpush1.msra.mxu0 0.0
    %4594 = vmatprep.subr.mxu0 0.0
    %4595 = vmatpush1.msra.mxu0 0.0
    %4596 = vmatprep.subr.mxu0 0.0
    %4597 = vmatpush1.msra.mxu0 0.0
    %4598 = vmatprep.subr.mxu0 0.0
    %4599 = vmatpush1.msra.mxu0 0.0
    %4600 = vmatprep.subr.mxu0 0.0
    %4601 = vmatpush1.msra.mxu0 0.0
    %4602 = vmatprep.subr.mxu0 0.0
    %4603 = vmatpush1.msra.mxu0 0.0
    %4604 = vmatprep.subr.mxu0 0.0
    %4605 = vmatpush1.msra.mxu0 0.0
    %4606 = vmatprep.subr.mxu0 0.0
    %4607 = vmatpush1.msra.mxu0 0.0
    %4608 = vmatprep.subr.mxu0 0.0
    %4609 = vmatpush1.msra.mxu0 0.0
    %4610 = vmatprep.subr.mxu0 0.0
    %4611 = vmatpush1.msra.mxu0 0.0
    %4612 = vmatprep.subr.mxu0 0.0
    %4613 = vmatpush1.msra.mxu0 0.0
    %4614 = vmatprep.subr.mxu0 0.0
    %4615 = vmatpush1.msra.mxu0 0.0
    %4616 = vmatprep.subr.mxu0 0.0
    %4617 = vmatpush1.msra.mxu0 0.0
    %4618 = vmatprep.subr.mxu0 0.0
    %4619 = vmatpush1.msra.mxu0 %v1194
    %4620 = vmatprep.subr.mxu0 0.0
    %4621 = vmatpush1.msra.mxu0 %v1193
    %4622 = vmatprep.subr.mxu0 0.0
    %4623 = vmatpush2.msra.mxu0 0.0
    %4624 = vmatprep.subr.mxu0 0.0
    %4625 = vmatpush2.msra.mxu0 0.0
    %4626 = vmatprep.subr.mxu0 0.0
    %4627 = vmatpush2.msra.mxu0 0.0
    %4628 = vmatprep.subr.mxu0 0.0
    %4629 = vmatpush2.msra.mxu0 0.0
    %4630 = vmatprep.subr.mxu0 0.0
    %4631 = vmatpush2.msra.mxu0 0.0
    %4632 = vmatprep.subr.mxu0 0.0
    %4633 = vmatpush2.msra.mxu0 0.0
    %4634 = vmatprep.subr.mxu0 0.0
    %4635 = vmatpush2.msra.mxu0 0.0
    %4636 = vmatprep.subr.mxu0 0.0
    %4637 = vmatpush2.msra.mxu0 0.0
    %4638 = vmatprep.subr.mxu0 0.0
    %4639 = vmatpush2.msra.mxu0 0.0
    %4640 = vmatprep.subr.mxu0 0.0
    %4641 = vmatpush2.msra.mxu0 0.0
    %4642 = vmatprep.subr.mxu0 0.0
    %4643 = vmatpush2.msra.mxu0 0.0
    %4644 = vmatprep.subr.mxu0 0.0
    %4645 = vmatpush2.msra.mxu0 0.0
    %4646 = vmatprep.subr.mxu0 0.0
    %4647 = vmatpush2.msra.mxu0 0.0
    %4648 = vmatprep.subr.mxu0 0.0
    %4649 = vmatpush2.msra.mxu0 0.0
    %4650 = vmatprep.subr.mxu0 0.0
    %4651 = vmatpush2.msra.mxu0 0.0
    %4652 = vmatprep.subr.mxu0 0.0
    %4653 = vmatpush2.msra.mxu0 0.0
    %4654 = vmatprep.mubr.f32.mxu0 0.0
    %4655 = vmatmul.mubr.f32.gmra.mxu0 %v4588
    %v4656 = vpop.f32.mrf.mxu0
    %v4657 = vadd.f32 0.0, %v4656
    %v4658 = vpop.f32.mrf.mxu0
    %4659 = vdwg.mxu0
    %v4660 = vsel %vm1203, %v1089, 0
    %4662 = vmatprep.subr.mxu0 0.0
    %4663 = vmatpush1.msra.mxu0 0.0
    %4664 = vmatprep.subr.mxu0 0.0
    %4665 = vmatpush1.msra.mxu0 0.0
    %4666 = vmatprep.subr.mxu0 0.0
    %4667 = vmatpush1.msra.mxu0 0.0
    %4668 = vmatprep.subr.mxu0 0.0
    %4669 = vmatpush1.msra.mxu0 0.0
    %4670 = vmatprep.subr.mxu0 0.0
    %4671 = vmatpush1.msra.mxu0 0.0
    %4672 = vmatprep.subr.mxu0 0.0
    %4673 = vmatpush1.msra.mxu0 0.0
    %4674 = vmatprep.subr.mxu0 0.0
    %4675 = vmatpush1.msra.mxu0 0.0
    %4676 = vmatprep.subr.mxu0 0.0
    %4677 = vmatpush1.msra.mxu0 0.0
    %4678 = vmatprep.subr.mxu0 0.0
    %4679 = vmatpush1.msra.mxu0 0.0
    %4680 = vmatprep.subr.mxu0 0.0
    %4681 = vmatpush1.msra.mxu0 0.0
    %4682 = vmatprep.subr.mxu0 0.0
    %4683 = vmatpush1.msra.mxu0 0.0
    %4684 = vmatprep.subr.mxu0 0.0
    %4685 = vmatpush1.msra.mxu0 0.0
    %4686 = vmatprep.subr.mxu0 0.0
    %4687 = vmatpush1.msra.mxu0 0.0
    %4688 = vmatprep.subr.mxu0 0.0
    %4689 = vmatpush1.msra.mxu0 0.0
    %4690 = vmatprep.subr.mxu0 0.0
    %4691 = vmatpush1.msra.mxu0 %v1196
    %4692 = vmatprep.subr.mxu0 0.0
    %4693 = vmatpush1.msra.mxu0 %v1195
    %4694 = vmatprep.subr.mxu0 0.0
    %4695 = vmatpush2.msra.mxu0 0.0
    %4696 = vmatprep.subr.mxu0 0.0
    %4697 = vmatpush2.msra.mxu0 0.0
    %4698 = vmatprep.subr.mxu0 0.0
    %4699 = vmatpush2.msra.mxu0 0.0
    %4700 = vmatprep.subr.mxu0 0.0
    %4701 = vmatpush2.msra.mxu0 0.0
    %4702 = vmatprep.subr.mxu0 0.0
    %4703 = vmatpush2.msra.mxu0 0.0
    %4704 = vmatprep.subr.mxu0 0.0
    %4705 = vmatpush2.msra.mxu0 0.0
    %4706 = vmatprep.subr.mxu0 0.0
    %4707 = vmatpush2.msra.mxu0 0.0
    %4708 = vmatprep.subr.mxu0 0.0
    %4709 = vmatpush2.msra.mxu0 0.0
    %4710 = vmatprep.subr.mxu0 0.0
    %4711 = vmatpush2.msra.mxu0 0.0
    %4712 = vmatprep.subr.mxu0 0.0
    %4713 = vmatpush2.msra.mxu0 0.0
    %4714 = vmatprep.subr.mxu0 0.0
    %4715 = vmatpush2.msra.mxu0 0.0
    %4716 = vmatprep.subr.mxu0 0.0
    %4717 = vmatpush2.msra.mxu0 0.0
    %4718 = vmatprep.subr.mxu0 0.0
    %4719 = vmatpush2.msra.mxu0 0.0
    %4720 = vmatprep.subr.mxu0 0.0
    %4721 = vmatpush2.msra.mxu0 0.0
    %4722 = vmatprep.subr.mxu0 0.0
    %4723 = vmatpush2.msra.mxu0 0.0
    %4724 = vmatprep.subr.mxu0 0.0
    %4725 = vmatpush2.msra.mxu0 0.0
    %4726 = vmatprep.mubr.f32.mxu0 0.0
    %4727 = vmatmul.mubr.f32.gmra.mxu0 %v4660
    %v4728 = vpop.f32.mrf.mxu0
    %v4729 = vadd.f32 0.0, %v4728
    %v4730 = vpop.f32.mrf.mxu0
    %4731 = vdwg.mxu0
    %v4732 = vsel %vm1203, %v1097, 0
    %4734 = vmatprep.subr.mxu0 0.0
    %4735 = vmatpush1.msra.mxu0 0.0
    %4736 = vmatprep.subr.mxu0 0.0
    %4737 = vmatpush1.msra.mxu0 0.0
    %4738 = vmatprep.subr.mxu0 0.0
    %4739 = vmatpush1.msra.mxu0 0.0
    %4740 = vmatprep.subr.mxu0 0.0
    %4741 = vmatpush1.msra.mxu0 0.0
    %4742 = vmatprep.subr.mxu0 0.0
    %4743 = vmatpush1.msra.mxu0 0.0
    %4744 = vmatprep.subr.mxu0 0.0
    %4745 = vmatpush1.msra.mxu0 0.0
    %4746 = vmatprep.subr.mxu0 0.0
    %4747 = vmatpush1.msra.mxu0 0.0
    %4748 = vmatprep.subr.mxu0 0.0
    %4749 = vmatpush1.msra.mxu0 0.0
    %4750 = vmatprep.subr.mxu0 0.0
    %4751 = vmatpush1.msra.mxu0 0.0
    %4752 = vmatprep.subr.mxu0 0.0
    %4753 = vmatpush1.msra.mxu0 0.0
    %4754 = vmatprep.subr.mxu0 0.0
    %4755 = vmatpush1.msra.mxu0 0.0
    %4756 = vmatprep.subr.mxu0 0.0
    %4757 = vmatpush1.msra.mxu0 0.0
    %4758 = vmatprep.subr.mxu0 0.0
    %4759 = vmatpush1.msra.mxu0 0.0
    %4760 = vmatprep.subr.mxu0 0.0
    %4761 = vmatpush1.msra.mxu0 0.0
    %4762 = vmatprep.subr.mxu0 0.0
    %4763 = vmatpush1.msra.mxu0 %v1198
    %4764 = vmatprep.subr.mxu0 0.0
    %4765 = vmatpush1.msra.mxu0 %v1197
    %4766 = vmatprep.subr.mxu0 0.0
    %4767 = vmatpush2.msra.mxu0 0.0
    %4768 = vmatprep.subr.mxu0 0.0
    %4769 = vmatpush2.msra.mxu0 0.0
    %4770 = vmatprep.subr.mxu0 0.0
    %4771 = vmatpush2.msra.mxu0 0.0
    %4772 = vmatprep.subr.mxu0 0.0
    %4773 = vmatpush2.msra.mxu0 0.0
    %4774 = vmatprep.subr.mxu0 0.0
    %4775 = vmatpush2.msra.mxu0 0.0
    %4776 = vmatprep.subr.mxu0 0.0
    %4777 = vmatpush2.msra.mxu0 0.0
    %4778 = vmatprep.subr.mxu0 0.0
    %4779 = vmatpush2.msra.mxu0 0.0
    %4780 = vmatprep.subr.mxu0 0.0
    %4781 = vmatpush2.msra.mxu0 0.0
    %4782 = vmatprep.subr.mxu0 0.0
    %4783 = vmatpush2.msra.mxu0 0.0
    %4784 = vmatprep.subr.mxu0 0.0
    %4785 = vmatpush2.msra.mxu0 0.0
    %4786 = vmatprep.subr.mxu0 0.0
    %4787 = vmatpush2.msra.mxu0 0.0
    %4788 = vmatprep.subr.mxu0 0.0
    %4789 = vmatpush2.msra.mxu0 0.0
    %4790 = vmatprep.subr.mxu0 0.0
    %4791 = vmatpush2.msra.mxu0 0.0
    %4792 = vmatprep.subr.mxu0 0.0
    %4793 = vmatpush2.msra.mxu0 0.0
    %4794 = vmatprep.subr.mxu0 0.0
    %4795 = vmatpush2.msra.mxu0 0.0
    %4796 = vmatprep.subr.mxu0 0.0
    %4797 = vmatpush2.msra.mxu0 0.0
    %4798 = vmatprep.mubr.f32.mxu0 0.0
    %4799 = vmatmul.mubr.f32.gmra.mxu0 %v4732
    %v4800 = vpop.f32.mrf.mxu0
    %v4801 = vadd.f32 0.0, %v4800
    %v4802 = vpop.f32.mrf.mxu0
    %4803 = vdwg.mxu0
    %v4804 = vsel %vm1203, %v1096, 0
    %4806 = vmatprep.subr.mxu0 0.0
    %4807 = vmatpush1.msra.mxu0 0.0
    %4808 = vmatprep.subr.mxu0 0.0
    %4809 = vmatpush1.msra.mxu0 0.0
    %4810 = vmatprep.subr.mxu0 0.0
    %4811 = vmatpush1.msra.mxu0 0.0
    %4812 = vmatprep.subr.mxu0 0.0
    %4813 = vmatpush1.msra.mxu0 0.0
    %4814 = vmatprep.subr.mxu0 0.0
    %4815 = vmatpush1.msra.mxu0 0.0
    %4816 = vmatprep.subr.mxu0 0.0
    %4817 = vmatpush1.msra.mxu0 0.0
    %4818 = vmatprep.subr.mxu0 0.0
    %4819 = vmatpush1.msra.mxu0 0.0
    %4820 = vmatprep.subr.mxu0 0.0
    %4821 = vmatpush1.msra.mxu0 0.0
    %4822 = vmatprep.subr.mxu0 0.0
    %4823 = vmatpush1.msra.mxu0 0.0
    %4824 = vmatprep.subr.mxu0 0.0
    %4825 = vmatpush1.msra.mxu0 0.0
    %4826 = vmatprep.subr.mxu0 0.0
    %4827 = vmatpush1.msra.mxu0 0.0
    %4828 = vmatprep.subr.mxu0 0.0
    %4829 = vmatpush1.msra.mxu0 0.0
    %4830 = vmatprep.subr.mxu0 0.0
    %4831 = vmatpush1.msra.mxu0 0.0
    %4832 = vmatprep.subr.mxu0 0.0
    %4833 = vmatpush1.msra.mxu0 0.0
    %4834 = vmatprep.subr.mxu0 0.0
    %4835 = vmatpush1.msra.mxu0 %v1200
    %4836 = vmatprep.subr.mxu0 0.0
    %4837 = vmatpush1.msra.mxu0 %v1199
    %4838 = vmatprep.subr.mxu0 0.0
    %4839 = vmatpush2.msra.mxu0 0.0
    %4840 = vmatprep.subr.mxu0 0.0
    %4841 = vmatpush2.msra.mxu0 0.0
    %4842 = vmatprep.subr.mxu0 0.0
    %4843 = vmatpush2.msra.mxu0 0.0
    %4844 = vmatprep.subr.mxu0 0.0
    %4845 = vmatpush2.msra.mxu0 0.0
    %4846 = vmatprep.subr.mxu0 0.0
    %4847 = vmatpush2.msra.mxu0 0.0
    %4848 = vmatprep.subr.mxu0 0.0
    %4849 = vmatpush2.msra.mxu0 0.0
    %4850 = vmatprep.subr.mxu0 0.0
    %4851 = vmatpush2.msra.mxu0 0.0
    %4852 = vmatprep.subr.mxu0 0.0
    %4853 = vmatpush2.msra.mxu0 0.0
    %4854 = vmatprep.subr.mxu0 0.0
    %4855 = vmatpush2.msra.mxu0 0.0
    %4856 = vmatprep.subr.mxu0 0.0
    %4857 = vmatpush2.msra.mxu0 0.0
    %4858 = vmatprep.subr.mxu0 0.0
    %4859 = vmatpush2.msra.mxu0 0.0
    %4860 = vmatprep.subr.mxu0 0.0
    %4861 = vmatpush2.msra.mxu0 0.0
    %4862 = vmatprep.subr.mxu0 0.0
    %4863 = vmatpush2.msra.mxu0 0.0
    %4864 = vmatprep.subr.mxu0 0.0
    %4865 = vmatpush2.msra.mxu0 0.0
    %4866 = vmatprep.subr.mxu0 0.0
    %4867 = vmatpush2.msra.mxu0 0.0
    %4868 = vmatprep.subr.mxu0 0.0
    %4869 = vmatpush2.msra.mxu0 0.0
    %4870 = vmatprep.mubr.f32.mxu0 0.0
    %4871 = vmatmul.mubr.f32.gmra.mxu0 %v4804
    %v4872 = vpop.f32.mrf.mxu0
    %v4873 = vadd.f32 0.0, %v4872
    %v4874 = vpop.f32.mrf.mxu0
    %4875 = vdwg.mxu0
    %v4876 = vsel %vm1203, %v1098, 0
    %4878 = vmatprep.subr.mxu0 0.0
    %4879 = vmatpush1.msra.mxu0 0.0
    %4880 = vmatprep.subr.mxu0 0.0
    %4881 = vmatpush1.msra.mxu0 0.0
    %4882 = vmatprep.subr.mxu0 0.0
    %4883 = vmatpush1.msra.mxu0 0.0
    %4884 = vmatprep.subr.mxu0 0.0
    %4885 = vmatpush1.msra.mxu0 0.0
    %4886 = vmatprep.subr.mxu0 0.0
    %4887 = vmatpush1.msra.mxu0 0.0
    %4888 = vmatprep.subr.mxu0 0.0
    %4889 = vmatpush1.msra.mxu0 0.0
    %4890 = vmatprep.subr.mxu0 0.0
    %4891 = vmatpush1.msra.mxu0 0.0
    %4892 = vmatprep.subr.mxu0 0.0
    %4893 = vmatpush1.msra.mxu0 0.0
    %4894 = vmatprep.subr.mxu0 0.0
    %4895 = vmatpush1.msra.mxu0 0.0
    %4896 = vmatprep.subr.mxu0 0.0
    %4897 = vmatpush1.msra.mxu0 0.0
    %4898 = vmatprep.subr.mxu0 0.0
    %4899 = vmatpush1.msra.mxu0 0.0
    %4900 = vmatprep.subr.mxu0 0.0
    %4901 = vmatpush1.msra.mxu0 0.0
    %4902 = vmatprep.subr.mxu0 0.0
    %4903 = vmatpush1.msra.mxu0 0.0
    %4904 = vmatprep.subr.mxu0 0.0
    %4905 = vmatpush1.msra.mxu0 0.0
    %4906 = vmatprep.subr.mxu0 0.0
    %4907 = vmatpush1.msra.mxu0 %v1202
    %4908 = vmatprep.subr.mxu0 0.0
    %4909 = vmatpush1.msra.mxu0 %v1201
    %4910 = vmatprep.subr.mxu0 0.0
    %4911 = vmatpush2.msra.mxu0 0.0
    %4912 = vmatprep.subr.mxu0 0.0
    %4913 = vmatpush2.msra.mxu0 0.0
    %4914 = vmatprep.subr.mxu0 0.0
    %4915 = vmatpush2.msra.mxu0 0.0
    %4916 = vmatprep.subr.mxu0 0.0
    %4917 = vmatpush2.msra.mxu0 0.0
    %4918 = vmatprep.subr.mxu0 0.0
    %4919 = vmatpush2.msra.mxu0 0.0
    %4920 = vmatprep.subr.mxu0 0.0
    %4921 = vmatpush2.msra.mxu0 0.0
    %4922 = vmatprep.subr.mxu0 0.0
    %4923 = vmatpush2.msra.mxu0 0.0
    %4924 = vmatprep.subr.mxu0 0.0
    %4925 = vmatpush2.msra.mxu0 0.0
    %4926 = vmatprep.subr.mxu0 0.0
    %4927 = vmatpush2.msra.mxu0 0.0
    %4928 = vmatprep.subr.mxu0 0.0
    %4929 = vmatpush2.msra.mxu0 0.0
    %4930 = vmatprep.subr.mxu0 0.0
    %4931 = vmatpush2.msra.mxu0 0.0
    %4932 = vmatprep.subr.mxu0 0.0
    %4933 = vmatpush2.msra.mxu0 0.0
    %4934 = vmatprep.subr.mxu0 0.0
    %4935 = vmatpush2.msra.mxu0 0.0
    %4936 = vmatprep.subr.mxu0 0.0
    %4937 = vmatpush2.msra.mxu0 0.0
    %4938 = vmatprep.subr.mxu0 0.0
    %4939 = vmatpush2.msra.mxu0 0.0
    %4940 = vmatprep.subr.mxu0 0.0
    %4941 = vmatpush2.msra.mxu0 0.0
    %4942 = vmatprep.mubr.f32.mxu0 0.0
    %4943 = vmatmul.mubr.f32.gmra.mxu0 %v4876
    %v4944 = vpop.f32.mrf.mxu0
    %v4945 = vadd.f32 0.0, %v4944
    %v4946 = vpop.f32.mrf.mxu0
    %4947 = vdwg.mxu0
    %vm4948 = vcmask 1041408
    %v4949 = vsel %vm4948, %v1273, 0.0
    %v4950 = vsel %vm4948, %v1345, 0.0
    %v4951 = vadd.f32 %v4949, %v4950
    %v4952 = vsel %vm4948, %v1417, 0.0
    %v4953 = vadd.f32 %v4951, %v4952
    %v4954 = vsel %vm4948, %v1489, 0.0
    %v4955 = vadd.f32 %v4953, %v4954
    %v4956 = vsel %vm4948, %v1561, 0.0
    %v4957 = vadd.f32 %v4955, %v4956
    %v4958 = vsel %vm4948, %v1633, 0.0
    %v4959 = vadd.f32 %v4957, %v4958
    %v4960 = vsel %vm4948, %v1705, 0.0
    %v4961 = vadd.f32 %v4959, %v4960
    %v4962 = vsel %vm4948, %v1777, 0.0
    %v4963 = vadd.f32 %v4961, %v4962
    %v4964 = vsel %vm4948, %v1849, 0.0
    %v4965 = vadd.f32 %v4963, %v4964
    %v4966 = vsel %vm4948, %v1921, 0.0
    %v4967 = vadd.f32 %v4965, %v4966
    %v4968 = vsel %vm4948, %v1993, 0.0
    %v4969 = vadd.f32 %v4967, %v4968
    %v4970 = vsel %vm4948, %v2065, 0.0
    %v4971 = vadd.f32 %v4969, %v4970
    %v4972 = vsel %vm4948, %v2137, 0.0
    %v4973 = vadd.f32 %v4971, %v4972
    %v4974 = vsel %vm4948, %v2209, 0.0
    %v4975 = vadd.f32 %v4973, %v4974
    %v4976 = vsel %vm4948, %v2281, 0.0
    %v4977 = vadd.f32 %v4975, %v4976
    %v4978 = vsel %vm4948, %v2353, 0.0
    %v4979 = vadd.f32 %v4977, %v4978
    %v4980 = vsel %vm4948, %v2425, 0.0
    %v4981 = vadd.f32 %v4979, %v4980
    %v4982 = vsel %vm4948, %v2497, 0.0
    %v4983 = vadd.f32 %v4981, %v4982
    %v4984 = vsel %vm4948, %v2569, 0.0
    %v4985 = vadd.f32 %v4983, %v4984
    %v4986 = vsel %vm4948, %v2641, 0.0
    %v4987 = vadd.f32 %v4985, %v4986
    %v4988 = vsel %vm4948, %v2713, 0.0
    %v4989 = vadd.f32 %v4987, %v4988
    %v4990 = vsel %vm4948, %v2785, 0.0
    %v4991 = vadd.f32 %v4989, %v4990
    %v4992 = vsel %vm4948, %v2857, 0.0
    %v4993 = vadd.f32 %v4991, %v4992
    %v4994 = vsel %vm4948, %v2929, 0.0
    %v4995 = vadd.f32 %v4993, %v4994
    %v4996 = vsel %vm4948, %v3001, 0.0
    %v4997 = vadd.f32 %v4995, %v4996
    %v4998 = vsel %vm4948, %v3073, 0.0
    %v4999 = vadd.f32 %v4997, %v4998
    %v5000 = vsel %vm4948, %v3145, 0.0
    %v5001 = vadd.f32 %v4999, %v5000
    %v5002 = vsel %vm4948, %v3217, 0.0
    %v5003 = vadd.f32 %v5001, %v5002
    %v5004 = vsel %vm4948, %v3289, 0.0
    %v5005 = vadd.f32 %v5003, %v5004
    %v5006 = vsel %vm4948, %v3361, 0.0
    %v5007 = vadd.f32 %v5005, %v5006
    %v5008 = vsel %vm4948, %v3433, 0.0
    %v5009 = vadd.f32 %v5007, %v5008
    %v5010 = vsel %vm4948, %v3505, 0.0
    %v5011 = vadd.f32 %v5009, %v5010
    %v5012 = vsel %vm4948, %v3577, 0.0
    %v5013 = vadd.f32 %v5011, %v5012
    %v5014 = vsel %vm4948, %v3649, 0.0
    %v5015 = vadd.f32 %v5013, %v5014
    %v5016 = vsel %vm4948, %v3721, 0.0
    %v5017 = vadd.f32 %v5015, %v5016
    %v5018 = vsel %vm4948, %v3793, 0.0
    %v5019 = vadd.f32 %v5017, %v5018
    %v5020 = vsel %vm4948, %v3865, 0.0
    %v5021 = vadd.f32 %v5019, %v5020
    %v5022 = vsel %vm4948, %v3937, 0.0
    %v5023 = vadd.f32 %v5021, %v5022
    %v5024 = vsel %vm4948, %v4009, 0.0
    %v5025 = vadd.f32 %v5023, %v5024
    %v5026 = vsel %vm4948, %v4081, 0.0
    %v5027 = vadd.f32 %v5025, %v5026
    %v5028 = vsel %vm4948, %v4153, 0.0
    %v5029 = vadd.f32 %v5027, %v5028
    %v5030 = vsel %vm4948, %v4225, 0.0
    %v5031 = vadd.f32 %v5029, %v5030
    %v5032 = vsel %vm4948, %v4297, 0.0
    %v5033 = vadd.f32 %v5031, %v5032
    %v5034 = vsel %vm4948, %v4369, 0.0
    %v5035 = vadd.f32 %v5033, %v5034
    %v5036 = vsel %vm4948, %v4441, 0.0
    %v5037 = vadd.f32 %v5035, %v5036
    %v5038 = vsel %vm4948, %v4513, 0.0
    %v5039 = vadd.f32 %v5037, %v5038
    %v5040 = vsel %vm4948, %v4585, 0.0
    %v5041 = vadd.f32 %v5039, %v5040
    %v5042 = vsel %vm4948, %v4657, 0.0
    %v5043 = vadd.f32 %v5041, %v5042
    %v5044 = vsel %vm4948, %v4729, 0.0
    %v5045 = vadd.f32 %v5043, %v5044
    %v5046 = vsel %vm4948, %v4801, 0.0
    %v5047 = vadd.f32 %v5045, %v5046
    %v5048 = vsel %vm4948, %v4873, 0.0
    %v5049 = vadd.f32 %v5047, %v5048
    %v5050 = vsel %vm4948, %v4945, 0.0
    %v5051 = vadd.f32 %v5049, %v5050
    %v5052 = vld [vmem:[%s4] sm:$0x1]
    %v5054 = vlaneseq
    %v5055 = vshrl.u32 %v5054, 7
    %v5056 = vsub.s32 0, %v5055
    %v5057 = vrot.slane %v5052, %v5056
    %v5059 = vadd.f32 %v5051, %v5057
    %v5060 = vmax.f32 %v5059, 0.0
    %v5061 = vld [vmem:[%s5] sm:$0xff]
    %v5062 = vld [vmem:[%s5 + $0x8] sm:$0xff]
    %v5063 = vld [vmem:[%s5 + $0x10] sm:$0xff]
    %v5064 = vld [vmem:[%s5 + $0x18] sm:$0xff]
    %v5065 = vld [vmem:[%s5 + $0x20] sm:$0xff]
    %v5066 = vld [vmem:[%s5 + $0x28] sm:$0xff]
    %v5067 = vld [vmem:[%s5 + $0x30] sm:$0xff]
    %v5068 = vld [vmem:[%s5 + $0x38] sm:$0xff]
    %v5069 = vld [vmem:[%s5 + $0x40] sm:$0xff]
    %v5070 = vld [vmem:[%s5 + $0x48] sm:$0xff]
    %v5071 = vld [vmem:[%s5 + $0x50] sm:$0xff]
    %v5072 = vld [vmem:[%s5 + $0x58] sm:$0xff]
    %v5073 = vld [vmem:[%s5 + $0x60] sm:$0xff]
    %v5074 = vld [vmem:[%s5 + $0x68] sm:$0xff]
    %v5075 = vld [vmem:[%s5 + $0x70] sm:$0xff]
    %v5076 = vld [vmem:[%s5 + $0x78] sm:$0xff]
    %v5077 = vld [vmem:[%s6] sm:$0x1]
    %v5079 = vlaneseq
    %v5080 = vshrl.u32 %v5079, 7
    %v5081 = vsub.s32 0, %v5080
    %v5082 = vrot.slane %v5077, %v5081
    %5084 = vmatprep.subr.mxu0 0.0
    %5085 = vmatpush1.msra.mxu0 %v5076
    %5086 = vmatprep.subr.mxu0 0.0
    %5087 = vmatpush1.msra.mxu0 %v5075
    %5088 = vmatprep.subr.mxu0 0.0
    %5089 = vmatpush1.msra.mxu0 %v5074
    %5090 = vmatprep.subr.mxu0 0.0
    %5091 = vmatpush1.msra.mxu0 %v5073
    %5092 = vmatprep.subr.mxu0 0.0
    %5093 = vmatpush1.msra.mxu0 %v5072
    %5094 = vmatprep.subr.mxu0 0.0
    %5095 = vmatpush1.msra.mxu0 %v5071
    %5096 = vmatprep.subr.mxu0 0.0
    %5097 = vmatpush1.msra.mxu0 %v5070
    %5098 = vmatprep.subr.mxu0 0.0
    %5099 = vmatpush1.msra.mxu0 %v5069
    %5100 = vmatprep.subr.mxu0 0.0
    %5101 = vmatpush1.msra.mxu0 %v5068
    %5102 = vmatprep.subr.mxu0 0.0
    %5103 = vmatpush1.msra.mxu0 %v5067
    %5104 = vmatprep.subr.mxu0 0.0
    %5105 = vmatpush1.msra.mxu0 %v5066
    %5106 = vmatprep.subr.mxu0 0.0
    %5107 = vmatpush1.msra.mxu0 %v5065
    %5108 = vmatprep.subr.mxu0 0.0
    %5109 = vmatpush1.msra.mxu0 %v5064
    %5110 = vmatprep.subr.mxu0 0.0
    %5111 = vmatpush1.msra.mxu0 %v5063
    %5112 = vmatprep.subr.mxu0 0.0
    %5113 = vmatpush1.msra.mxu0 %v5062
    %5114 = vmatprep.subr.mxu0 0.0
    %5115 = vmatpush1.msra.mxu0 %v5061
    %5116 = vmatprep.subr.mxu0 0.0
    %5117 = vmatpush2.msra.mxu0 0.0
    %5118 = vmatprep.subr.mxu0 0.0
    %5119 = vmatpush2.msra.mxu0 0.0
    %5120 = vmatprep.subr.mxu0 0.0
    %5121 = vmatpush2.msra.mxu0 0.0
    %5122 = vmatprep.subr.mxu0 0.0
    %5123 = vmatpush2.msra.mxu0 0.0
    %5124 = vmatprep.subr.mxu0 0.0
    %5125 = vmatpush2.msra.mxu0 0.0
    %5126 = vmatprep.subr.mxu0 0.0
    %5127 = vmatpush2.msra.mxu0 0.0
    %5128 = vmatprep.subr.mxu0 0.0
    %5129 = vmatpush2.msra.mxu0 0.0
    %5130 = vmatprep.subr.mxu0 0.0
    %5131 = vmatpush2.msra.mxu0 0.0
    %5132 = vmatprep.subr.mxu0 0.0
    %5133 = vmatpush2.msra.mxu0 0.0
    %5134 = vmatprep.subr.mxu0 0.0
    %5135 = vmatpush2.msra.mxu0 0.0
    %5136 = vmatprep.subr.mxu0 0.0
    %5137 = vmatpush2.msra.mxu0 0.0
    %5138 = vmatprep.subr.mxu0 0.0
    %5139 = vmatpush2.msra.mxu0 0.0
    %5140 = vmatprep.subr.mxu0 0.0
    %5141 = vmatpush2.msra.mxu0 0.0
    %5142 = vmatprep.subr.mxu0 0.0
    %5143 = vmatpush2.msra.mxu0 0.0
    %5144 = vmatprep.subr.mxu0 0.0
    %5145 = vmatpush2.msra.mxu0 0.0
    %5146 = vmatprep.subr.mxu0 0.0
    %5147 = vmatpush2.msra.mxu0 0.0
    %5148 = vmatprep.mubr.f32.mxu0 0.0
    %5149 = vmatmul.mubr.f32.gmra.mxu0 %v5060
    %v5150 = vpop.f32.mrf.mxu0
    %v5151 = vadd.f32 %v5082, %v5150
    %v5152 = vpop.f32.mrf.mxu0
    %5153 = vdwg.mxu0
    %vm5154 = vcmask 74752
    %5155 = vst.msk [vmem:[#allocation2] sm:$0x3] %vm5154, %v5151
    // Predicated region
    $region30: #{disease_detector_forward.1} parent=1 // pred_check
      _
    $region31: #{disease_detector_forward.1} parent=1 // pred_check_branch
      %5157 = sbr.rel (0) target = $region33
    $region32: #{disease_detector_forward.1} parent=1 // pred_region
      %s5159 = ssub.s32 32, 32
      %5160 = vsyncadd [#allocation3], %s5159
      %s5162 = sshll.u32 [#allocation2], 4
      %s5163 = int_to_ptr.vmem [resolvable:$true] %s5162
      %5165 = dma.vmem_to_hbm [thread:$0]  %s5163, 32, %s7, [#allocation3]
    $region33: #{disease_detector_forward.1} parent=1 // pred_fallthru
      _
    // Predicated region
    $region34: #{disease_detector_forward.1} parent=1 // pred_check
      _
    $region35: #{disease_detector_forward.1} parent=1 // pred_check_branch
      %5167 = sbr.rel (0) target = $region37
    $region36: #{disease_detector_forward.1} parent=1 // pred_region
      %5168 = dma.done [#allocation3], 32
    $region37: #{disease_detector_forward.1} parent=1 // pred_fallthru
      _
    %5169 = vsyncpa [#allocation3], 1

</llo_original>
